<compile_context>
chip_gen: v7x
topology: tpu7x:2x2x1
jax: 0.10.0
libtpu: 0.0.40
codegen_flags: <defaults>
</compile_context>

<pallas_src>
import functools

import jax
import jax.numpy as jnp
from jax.experimental import pallas as pl
from jax.experimental.pallas import tpu as pltpu

LRELU_SLOPE = 0.1
KERNEL_SIZE = 3
DILATIONS = (1, 3, 5)

# Per-stage per-side shrink rounded up to a sublane multiple (8): the true
# receptive field per stage is d + 1 <= 6 rows/side, padding it to 8 keeps the
# residual-stream slices sublane-aligned (no per-stage relayout copies).
STAGE_SHRINK = 8
HALO = STAGE_SHRINK * len(DILATIONS)      # 24 rows of halo per side
HALO_BLK = 32                             # neighbour-tile fetch granularity

assert STAGE_SHRINK - 1 >= max(DILATIONS)
assert HALO_BLK >= HALO and HALO_BLK % 8 == 0


def _resblock1_kernel(cur_ref, prev_ref, nxt_ref,
                      w1_ref, b1_ref, w2_ref, b2_ref, o_ref,
                      *, t_tile, t_true):
    t = pl.program_id(1)
    win = t_tile + 2 * HALO

    # Assemble the haloed window: last HALO rows of the previous tile, the
    # current tile, first HALO rows of the next tile.  Neighbour blocks are
    # clamped at the sequence edges by the index_maps; rows outside the true
    # sequence are zero-masked at every conv input below.
    # TODO(synk): a manually double-buffered haloed DMA (memory_space=pl.ANY)
    # would remove this concat copy and the two redundant neighbour reads.
    prev_tail = prev_ref[0][HALO_BLK - HALO:, :]          # (HALO, C), aligned start
    nxt_head = nxt_ref[0][:HALO, :]                       # (HALO, C)
    x = jnp.concatenate([prev_tail, cur_ref[0], nxt_head],
                        axis=0).astype(jnp.float32)       # (win, C)

    # Global (true-sequence) row index / validity of every window row,
    # computed ONCE per grid step and sliced per stage.
    g0 = t * t_tile - HALO
    gidx = g0 + jax.lax.broadcasted_iota(jnp.int32, (win, 1), 0)
    valid = (gidx >= 0) & (gidx < t_true)                 # (win, 1)

    def masked_lrelu_bf16(v, ofs):
        # leaky_relu in f32; zero every out-of-sequence row (== Conv1d zero
        # padding of this stage's activation); cast to bf16 for the MXU.
        m = valid[ofs:ofs + v.shape[0]]
        act = jnp.where(v >= 0, v, LRELU_SLOPE * v)
        return jnp.where(m, act, 0.0).astype(jnp.bfloat16)

    def conv3(a, w_ref, b_ref, i, d, start, rows):
        # 3-tap dilated conv as three per-tap accumulating matmuls: no
        # (rows, 3C) lhs materialization (that concat saturated the vst slot
        # on v6e/v7x at C_pad=128).  For very large C on v5e a fused K=3C
        # matmul may win; sweep if that configuration matters.
        acc = jnp.dot(a[start - d:start - d + rows, :], w_ref[i, 0],
                      preferred_element_type=jnp.float32)
        acc = acc + jnp.dot(a[start:start + rows, :], w_ref[i, 1],
                            preferred_element_type=jnp.float32)
        acc = acc + jnp.dot(a[start + d:start + d + rows, :], w_ref[i, 2],
                            preferred_element_type=jnp.float32)
        return acc + b_ref[i]                             # (rows, C) f32

    base = 0
    for i, d in enumerate(DILATIONS):
        n_x = x.shape[0]                # x covers window rows [base, win - base)
        a = masked_lrelu_bf16(x, base)
        # conv1 (dilation d): output rows at window [base+7, win-base-7)
        n_y = n_x - 2 * (STAGE_SHRINK - 1)
        y = conv3(a, w1_ref, b1_ref, i, d, STAGE_SHRINK - 1, n_y)
        a2 = masked_lrelu_bf16(y, base + STAGE_SHRINK - 1)
        # conv2 (dilation 1): output rows at window [base+8, win-base-8)
        n_z = n_x - 2 * STAGE_SHRINK
        z = conv3(a2, w2_ref, b2_ref, i, 1, 1, n_z)
        # residual add -- the x slice starts on a sublane boundary (8)
        x = z + x[STAGE_SHRINK:STAGE_SHRINK + n_z, :]
        base += STAGE_SHRINK

    o_ref[0] = x.astype(o_ref.dtype)                      # (t_tile, C)


def _round_up(v, m):
    return ((v + m - 1) // m) * m


def _fold_conv_weight(w_oik, c_pad):
    """PyTorch (C_out, C_in, K) -> per-tap (K, C_pad_in, C_pad_out) bf16."""
    c_out, c_in, k = w_oik.shape
    w = jnp.transpose(w_oik, (2, 1, 0))                   # (K, C_in, C_out)
    w = jnp.pad(w, ((0, 0), (0, c_pad - c_in), (0, c_pad - c_out)))
    return w.astype(jnp.bfloat16)


def _pad_bias(b, c_pad):
    return jnp.pad(b, (0, c_pad - b.shape[0])).reshape(1, c_pad).astype(jnp.float32)


def _const_spec(block_shape):
    """Grid-invariant input: fetched into VMEM once; single-buffered if supported."""
    index_map = lambda b, t: (0,) * len(block_shape)
    try:
        return pl.BlockSpec(block_shape, index_map, pipeline_mode=pl.Buffered(1))
    except (TypeError, AttributeError):   # older Pallas without pipeline_mode
        return pl.BlockSpec(block_shape, index_map)


def resblock1_forward_btc(x_btc, params, *, t_tile=512):
    """x_btc: (B, T, C), channel-last layout (preferred on TPU).

    On bandwidth-bound chips (v5e/v6e) pass x_btc as bfloat16: the HBM
    residual stream then moves half the bytes; in-kernel math stays f32.
    """
    B, T, C = x_btc.shape
    c_pad = _round_up(C, 128)                             # lane-dense channels
    # NOTE: for C=64 half the FLOPs/bytes are zero padding; real HiFi-GAN
    # channel counts (128/256/512) are unaffected.

    # Large time tile amortizes per-step overhead and the 2*HALO redundant
    # rows; clamp to the sequence and keep >= 2 time tiles when B == 1 so both
    # v7x TensorCores get work.
    t_tile = max(HALO_BLK, min(_round_up(t_tile, HALO_BLK), _round_up(T, HALO_BLK)))
    if B == 1 and _round_up(T, HALO_BLK) >= 2 * HALO_BLK:
        t_tile = min(t_tile, _round_up((T + 1) // 2, HALO_BLK))
    t_pad = _round_up(T, t_tile)
    n_t = t_pad // t_tile
    s_blk = t_tile // HALO_BLK
    n_blk = t_pad // HALO_BLK

    x = jnp.pad(x_btc, ((0, 0), (0, t_pad - T), (0, c_pad - C)))

    # weight_norm(Conv1d) at init has effective weight == underlying tensor.
    # TODO(synk): for real checkpoints fold g * v / ||v|| here before padding.
    w1s = jnp.stack([_fold_conv_weight(w, c_pad) for w, _ in params["convs1"]])
    b1s = jnp.stack([_pad_bias(b, c_pad) for _, b in params["convs1"]])
    w2s = jnp.stack([_fold_conv_weight(w, c_pad) for w, _ in params["convs2"]])
    b2s = jnp.stack([_pad_bias(b, c_pad) for _, b in params["convs2"]])

    kernel = functools.partial(_resblock1_kernel, t_tile=t_tile, t_true=T)

    # VMEM budget: single-buffered weights + double-buffered IO + working set
    # (sized for the actual need so v7x's 64 MiB/TC is not over-reserved).
    itemsize = jnp.dtype(x_btc.dtype).itemsize
    win = t_tile + 2 * HALO
    vmem_est = (2 * 3 * KERNEL_SIZE * c_pad * c_pad * 2   # weight stacks (bf16)
                + 2 * 3 * c_pad * 4                       # biases
                + 2 * 2 * t_tile * c_pad * itemsize       # cur + out (double-buffered)
                + 2 * 2 * HALO_BLK * c_pad * itemsize     # prev/next halo blocks
                + 10 * win * c_pad * 4)                    # in-kernel working set
    vmem_limit = int(min(100 * 2**20, max(32 * 2**20, 1.5 * vmem_est)))

    out = pl.pallas_call(
        kernel,
        out_shape=jax.ShapeDtypeStruct((B, t_pad, c_pad), x_btc.dtype),
        grid_spec=pltpu.PrefetchScalarGridSpec(
            num_scalar_prefetch=0,
            grid=(B, n_t),
            in_specs=[
                # current time tile (auto double-buffered by Pallas)
                pl.BlockSpec((1, t_tile, c_pad), lambda b, t: (b, t, 0)),
                # HALO_BLK-row tail of the previous tile (clamped at t == 0)
                pl.BlockSpec((1, HALO_BLK, c_pad),
                             lambda b, t: (b, jnp.maximum(t * s_blk - 1, 0), 0)),
                # HALO_BLK-row head of the next tile (clamped at the last tile)
                pl.BlockSpec((1, HALO_BLK, c_pad),
                             lambda b, t: (b, jnp.minimum((t + 1) * s_blk, n_blk - 1), 0)),
                # per-tap weights / biases: grid-invariant VMEM residents
                _const_spec((3, KERNEL_SIZE, c_pad, c_pad)),
                _const_spec((3, 1, c_pad)),
                _const_spec((3, KERNEL_SIZE, c_pad, c_pad)),
                _const_spec((3, 1, c_pad)),
            ],
            out_specs=pl.BlockSpec((1, t_tile, c_pad), lambda b, t: (b, t, 0)),
        ),
        compiler_params=pltpu.CompilerParams(
            dimension_semantics=("parallel", "parallel"),
            vmem_limit_bytes=vmem_limit),
    )(x, x, x, w1s, b1s, w2s, b2s)

    return out[:, :T, :C]


def resblock1_forward(x_ncw, params, *, t_tile=512):
    """x_ncw: (B, C, T) float32, matching PyTorch Conv1d NCW layout."""
    # TODO(synk): in a full generator keep activations in (B, T, C) end-to-end
    # and call resblock1_forward_btc directly; these two transposes are extra
    # full HBM passes that can dominate in the memory-bound C<=128 regime.
    x = jnp.transpose(x_ncw, (0, 2, 1))
    y = resblock1_forward_btc(x, params, t_tile=t_tile)
    return jnp.transpose(y, (0, 2, 1))


def init_params(key, channels):
    """Deterministic synthetic parameters in PyTorch Conv1d layout.

    weight_norm(Conv1d) reparametrizes weight = g * v / ||v|| with g = ||v||
    at init, so the effective weight equals the underlying tensor;
    init_weights sets it to normal(0, 0.01); bias keeps Conv1d's default init.
    """
    params = {"convs1": [], "convs2": []}
    for name in ("convs1", "convs2"):
        for _ in DILATIONS:
            key, k1, k2 = jax.random.split(key, 3)
            w = 0.01 * jax.random.normal(
                k1, (channels, channels, KERNEL_SIZE), jnp.float32)  # (Cout,Cin,K)
            bound = 1.0 / float((channels * KERNEL_SIZE) ** 0.5)
            b = jax.random.uniform(k2, (channels,), jnp.float32, -bound, bound)
            params[name].append((w, b))
    return params


# -------- pure-JAX reference (for correctness check only) --------
def _lrelu(x):
    return jnp.where(x >= 0, x, LRELU_SLOPE * x)


def _conv1d_ref(x_ncw, w_oik, b, d):
    pad = (KERNEL_SIZE * d - d) // 2
    y = jax.lax.conv_general_dilated(
        x_ncw, w_oik, window_strides=(1,), padding=[(pad, pad)],
        rhs_dilation=(d,), dimension_numbers=("NCH", "OIH", "NCH"),
        precision=jax.lax.Precision.HIGHEST)
    return y + b[None, :, None]


def resblock1_ref(x_ncw, params):
    x = x_ncw
    for i, d in enumerate(DILATIONS):
        w1, b1 = params["convs1"][i]
        w2, b2 = params["convs2"][i]
        xt = _lrelu(x)
        xt = _conv1d_ref(xt, w1, b1, d)
        xt = _lrelu(xt)
        xt = _conv1d_ref(xt, w2, b2, 1)
        x = xt + x
    return x


if __name__ == "__main__":
    # Small shapes that exercise channel padding (64 -> 128), multi-tile time
    # tiling with interior + boundary tiles, and left/right edge masking.
    B, C, T = 2, 64, 200
    key = jax.random.PRNGKey(0)
    kx, kp = jax.random.split(key)
    x = jax.random.normal(kx, (B, C, T), jnp.float32)
    params = init_params(kp, C)

    ref = resblock1_ref(x, params)

    # Multi-tile path: t_tile=96 -> 3 time tiles (halo assembly across tiles).
    out_small = jax.block_until_ready(resblock1_forward(x, params, t_tile=96))
    # Default large-tile path (t_tile clamps to the padded sequence length).
    out_big = jax.block_until_ready(resblock1_forward(x, params))

    assert out_small.shape == (B, C, T) and out_big.shape == (B, C, T)
    err_small = float(jnp.max(jnp.abs(out_small - ref)))
    err_big = float(jnp.max(jnp.abs(out_big - ref)))
    assert err_small < 2e-2, f"mismatch vs reference (t_tile=96): {err_small}"
    assert err_big < 2e-2, f"mismatch vs reference (default tile): {err_big}"

    print("KERNEL_OK")
</pallas_src>

<mosaic_0001>
module attributes {stable_mosaic.version = 11 : i64} {
  func.func @_resblock1_kernel(%arg0: i32, %arg1: i32, %arg2: memref<1x96x128xf32, #tpu.memory_space<vmem>>, %arg3: memref<1x32x128xf32, #tpu.memory_space<vmem>>, %arg4: memref<1x32x128xf32, #tpu.memory_space<vmem>>, %arg5: memref<3x3x128x128xbf16, #tpu.memory_space<vmem>>, %arg6: memref<3x1x128xf32, #tpu.memory_space<vmem>>, %arg7: memref<3x3x128x128xbf16, #tpu.memory_space<vmem>>, %arg8: memref<3x1x128xf32, #tpu.memory_space<vmem>>, %arg9: memref<1x96x128xf32, #tpu.memory_space<vmem>>) attributes {dimension_semantics = [#tpu.dimension_semantics<parallel>, #tpu.dimension_semantics<parallel>], iteration_bounds = array<i64: 2, 3>, scalar_prefetch = 0 : i64, scratch_operands = 0 : i64, tpu.core_type = #tpu.core_type<tc>, window_params = [{transform_indices = @transform_0, window_bounds = array<i64: 1, 96, 128>}, {transform_indices = @transform_1, window_bounds = array<i64: 1, 32, 128>}, {transform_indices = @transform_2, window_bounds = array<i64: 1, 32, 128>}, {pipeline_mode = #tpu.pipeline_mode<synchronous>, transform_indices = @transform_3, window_bounds = array<i64: 3, 3, 128, 128>}, {pipeline_mode = #tpu.pipeline_mode<synchronous>, transform_indices = @transform_4, window_bounds = array<i64: 3, 1, 128>}, {pipeline_mode = #tpu.pipeline_mode<synchronous>, transform_indices = @transform_5, window_bounds = array<i64: 3, 3, 128, 128>}, {pipeline_mode = #tpu.pipeline_mode<synchronous>, transform_indices = @transform_6, window_bounds = array<i64: 3, 1, 128>}, {transform_indices = @transform_7, window_bounds = array<i64: 1, 96, 128>}]} {
    %c0 = arith.constant 0 : index
    %c0_0 = arith.constant 0 : index
    %c0_1 = arith.constant 0 : index
    %0 = vector.load %arg3[%c0, %c0_0, %c0_1] : memref<1x32x128xf32, #tpu.memory_space<vmem>>, vector<1x32x128xf32>
    %1 = vector.shape_cast %0 : vector<1x32x128xf32> to vector<32x128xf32>
    %2 = vector.extract_strided_slice %1 {offsets = [8, 0], sizes = [24, 128], strides = [1, 1]} : vector<32x128xf32> to vector<24x128xf32>
    %c0_2 = arith.constant 0 : index
    %c0_3 = arith.constant 0 : index
    %c0_4 = arith.constant 0 : index
    %3 = vector.load %arg4[%c0_2, %c0_3, %c0_4] : memref<1x32x128xf32, #tpu.memory_space<vmem>>, vector<1x32x128xf32>
    %4 = vector.shape_cast %3 : vector<1x32x128xf32> to vector<32x128xf32>
    %5 = vector.extract_strided_slice %4 {offsets = [0, 0], sizes = [24, 128], strides = [1, 1]} : vector<32x128xf32> to vector<24x128xf32>
    %c0_5 = arith.constant 0 : index
    %c0_6 = arith.constant 0 : index
    %c0_7 = arith.constant 0 : index
    %6 = vector.load %arg2[%c0_5, %c0_6, %c0_7] : memref<1x96x128xf32, #tpu.memory_space<vmem>>, vector<1x96x128xf32>
    %7 = vector.shape_cast %6 : vector<1x96x128xf32> to vector<96x128xf32>
    %8 = tpu.concatenate %2, %7, %5 in 0 : vector<24x128xf32>, vector<96x128xf32>, vector<24x128xf32> -> vector<144x128xf32>
    %c96_i32 = arith.constant 96 : i32
    %9 = arith.muli %arg1, %c96_i32 : i32
    %c24_i32 = arith.constant 24 : i32
    %10 = arith.subi %9, %c24_i32 : i32
    %11 = tpu.iota {dimensions = array<i32: 0>} : vector<144x1xi32>
    %12 = vector.broadcast %10 : i32 to vector<144x1xi32>
    %13 = arith.addi %12, %11 : vector<144x1xi32>
    %c0_i32 = arith.constant 0 : i32
    %14 = vector.broadcast %c0_i32 : i32 to vector<144x1xi32>
    %15 = arith.cmpi sge, %13, %14 : vector<144x1xi32>
    %c200_i32 = arith.constant 200 : i32
    %16 = vector.broadcast %c200_i32 : i32 to vector<144x1xi32>
    %17 = arith.cmpi slt, %13, %16 : vector<144x1xi32>
    %18 = arith.andi %15, %17 : vector<144x1xi1>
    %cst = arith.constant 0.000000e+00 : f32
    %19 = vector.broadcast %cst : f32 to vector<144x128xf32>
    %20 = arith.cmpf oge, %8, %19 : vector<144x128xf32>
    %cst_8 = arith.constant 1.000000e-01 : f32
    %21 = vector.broadcast %cst_8 : f32 to vector<144x128xf32>
    %22 = arith.mulf %21, %8 : vector<144x128xf32>
    %23 = arith.select %20, %8, %22 : vector<144x128xi1>, vector<144x128xf32>
    %cst_9 = arith.constant 0.000000e+00 : f32
    %24 = vector.shape_cast %18 : vector<144x1xi1> to vector<144x1xi1>
    %25 = vector.broadcast %24 : vector<144x1xi1> to vector<144x128xi1>
    %26 = vector.broadcast %cst_9 : f32 to vector<144x128xf32>
    %27 = arith.select %25, %23, %26 : vector<144x128xi1>, vector<144x128xf32>
    %28 = arith.truncf %27 : vector<144x128xf32> to vector<144x128xbf16>
    %29 = vector.extract_strided_slice %28 {offsets = [6, 0], sizes = [130, 128], strides = [1, 1]} : vector<144x128xbf16> to vector<130x128xbf16>
    %c0_10 = arith.constant 0 : index
    %c0_11 = arith.constant 0 : index
    %c0_12 = arith.constant 0 : index
    %c0_13 = arith.constant 0 : index
    %30 = vector.load %arg5[%c0_10, %c0_11, %c0_12, %c0_13] : memref<3x3x128x128xbf16, #tpu.memory_space<vmem>>, vector<1x1x128x128xbf16>
    %31 = vector.shape_cast %30 : vector<1x1x128x128xbf16> to vector<128x128xbf16>
    %cst_14 = arith.constant dense<0.000000e+00> : vector<130x128xf32>
    %32 = tpu.matmul %29, %31, %cst_14 {dimension_numbers = #tpu.dot_dimension_numbers<[1], [0], [0], [1], [0, 0, 1, 1], [], []>} : vector<130x128xbf16>, vector<128x128xbf16>, vector<130x128xf32> -> vector<130x128xf32>
    %33 = vector.extract_strided_slice %28 {offsets = [7, 0], sizes = [130, 128], strides = [1, 1]} : vector<144x128xbf16> to vector<130x128xbf16>
    %c0_15 = arith.constant 0 : index
    %c1 = arith.constant 1 : index
    %c0_16 = arith.constant 0 : index
    %c0_17 = arith.constant 0 : index
    %34 = vector.load %arg5[%c0_15, %c1, %c0_16, %c0_17] : memref<3x3x128x128xbf16, #tpu.memory_space<vmem>>, vector<1x1x128x128xbf16>
    %35 = vector.shape_cast %34 : vector<1x1x128x128xbf16> to vector<128x128xbf16>
    %cst_18 = arith.constant dense<0.000000e+00> : vector<130x128xf32>
    %36 = tpu.matmul %33, %35, %cst_18 {dimension_numbers = #tpu.dot_dimension_numbers<[1], [0], [0], [1], [0, 0, 1, 1], [], []>} : vector<130x128xbf16>, vector<128x128xbf16>, vector<130x128xf32> -> vector<130x128xf32>
    %37 = arith.addf %32, %36 : vector<130x128xf32>
    %38 = vector.extract_strided_slice %28 {offsets = [8, 0], sizes = [130, 128], strides = [1, 1]} : vector<144x128xbf16> to vector<130x128xbf16>
    %c0_19 = arith.constant 0 : index
    %c2 = arith.constant 2 : index
    %c0_20 = arith.constant 0 : index
    %c0_21 = arith.constant 0 : index
    %39 = vector.load %arg5[%c0_19, %c2, %c0_20, %c0_21] : memref<3x3x128x128xbf16, #tpu.memory_space<vmem>>, vector<1x1x128x128xbf16>
    %40 = vector.shape_cast %39 : vector<1x1x128x128xbf16> to vector<128x128xbf16>
    %cst_22 = arith.constant dense<0.000000e+00> : vector<130x128xf32>
    %41 = tpu.matmul %38, %40, %cst_22 {dimension_numbers = #tpu.dot_dimension_numbers<[1], [0], [0], [1], [0, 0, 1, 1], [], []>} : vector<130x128xbf16>, vector<128x128xbf16>, vector<130x128xf32> -> vector<130x128xf32>
    %42 = arith.addf %37, %41 : vector<130x128xf32>
    %c0_23 = arith.constant 0 : index
    %c0_24 = arith.constant 0 : index
    %c0_25 = arith.constant 0 : index
    %43 = vector.load %arg6[%c0_23, %c0_24, %c0_25] : memref<3x1x128xf32, #tpu.memory_space<vmem>>, vector<1x1x128xf32>
    %44 = vector.shape_cast %43 : vector<1x1x128xf32> to vector<1x128xf32>
    %45 = vector.broadcast %44 : vector<1x128xf32> to vector<130x128xf32>
    %46 = arith.addf %42, %45 : vector<130x128xf32>
    %47 = vector.extract_strided_slice %18 {offsets = [7, 0], sizes = [130, 1], strides = [1, 1]} : vector<144x1xi1> to vector<130x1xi1>
    %cst_26 = arith.constant 0.000000e+00 : f32
    %48 = vector.broadcast %cst_26 : f32 to vector<130x128xf32>
    %49 = arith.cmpf oge, %46, %48 : vector<130x128xf32>
    %cst_27 = arith.constant 1.000000e-01 : f32
    %50 = vector.broadcast %cst_27 : f32 to vector<130x128xf32>
    %51 = arith.mulf %50, %46 : vector<130x128xf32>
    %52 = arith.select %49, %46, %51 : vector<130x128xi1>, vector<130x128xf32>
    %cst_28 = arith.constant 0.000000e+00 : f32
    %53 = vector.shape_cast %47 : vector<130x1xi1> to vector<130x1xi1>
    %54 = vector.broadcast %53 : vector<130x1xi1> to vector<130x128xi1>
    %55 = vector.broadcast %cst_28 : f32 to vector<130x128xf32>
    %56 = arith.select %54, %52, %55 : vector<130x128xi1>, vector<130x128xf32>
    %57 = arith.truncf %56 : vector<130x128xf32> to vector<130x128xbf16>
    %58 = vector.extract_strided_slice %57 {offsets = [0, 0], sizes = [128, 128], strides = [1, 1]} : vector<130x128xbf16> to vector<128x128xbf16>
    %c0_29 = arith.constant 0 : index
    %c0_30 = arith.constant 0 : index
    %c0_31 = arith.constant 0 : index
    %c0_32 = arith.constant 0 : index
    %59 = vector.load %arg7[%c0_29, %c0_30, %c0_31, %c0_32] : memref<3x3x128x128xbf16, #tpu.memory_space<vmem>>, vector<1x1x128x128xbf16>
    %60 = vector.shape_cast %59 : vector<1x1x128x128xbf16> to vector<128x128xbf16>
    %cst_33 = arith.constant dense<0.000000e+00> : vector<128x128xf32>
    %61 = tpu.matmul %58, %60, %cst_33 {dimension_numbers = #tpu.dot_dimension_numbers<[1], [0], [0], [1], [0, 0, 1, 1], [], []>} : vector<128x128xbf16>, vector<128x128xbf16>, vector<128x128xf32> -> vector<128x128xf32>
    %62 = vector.extract_strided_slice %57 {offsets = [1, 0], sizes = [128, 128], strides = [1, 1]} : vector<130x128xbf16> to vector<128x128xbf16>
    %c0_34 = arith.constant 0 : index
    %c1_35 = arith.constant 1 : index
    %c0_36 = arith.constant 0 : index
    %c0_37 = arith.constant 0 : index
    %63 = vector.load %arg7[%c0_34, %c1_35, %c0_36, %c0_37] : memref<3x3x128x128xbf16, #tpu.memory_space<vmem>>, vector<1x1x128x128xbf16>
    %64 = vector.shape_cast %63 : vector<1x1x128x128xbf16> to vector<128x128xbf16>
    %cst_38 = arith.constant dense<0.000000e+00> : vector<128x128xf32>
    %65 = tpu.matmul %62, %64, %cst_38 {dimension_numbers = #tpu.dot_dimension_numbers<[1], [0], [0], [1], [0, 0, 1, 1], [], []>} : vector<128x128xbf16>, vector<128x128xbf16>, vector<128x128xf32> -> vector<128x128xf32>
    %66 = arith.addf %61, %65 : vector<128x128xf32>
    %67 = vector.extract_strided_slice %57 {offsets = [2, 0], sizes = [128, 128], strides = [1, 1]} : vector<130x128xbf16> to vector<128x128xbf16>
    %c0_39 = arith.constant 0 : index
    %c2_40 = arith.constant 2 : index
    %c0_41 = arith.constant 0 : index
    %c0_42 = arith.constant 0 : index
    %68 = vector.load %arg7[%c0_39, %c2_40, %c0_41, %c0_42] : memref<3x3x128x128xbf16, #tpu.memory_space<vmem>>, vector<1x1x128x128xbf16>
    %69 = vector.shape_cast %68 : vector<1x1x128x128xbf16> to vector<128x128xbf16>
    %cst_43 = arith.constant dense<0.000000e+00> : vector<128x128xf32>
    %70 = tpu.matmul %67, %69, %cst_43 {dimension_numbers = #tpu.dot_dimension_numbers<[1], [0], [0], [1], [0, 0, 1, 1], [], []>} : vector<128x128xbf16>, vector<128x128xbf16>, vector<128x128xf32> -> vector<128x128xf32>
    %71 = arith.addf %66, %70 : vector<128x128xf32>
    %c0_44 = arith.constant 0 : index
    %c0_45 = arith.constant 0 : index
    %c0_46 = arith.constant 0 : index
    %72 = vector.load %arg8[%c0_44, %c0_45, %c0_46] : memref<3x1x128xf32, #tpu.memory_space<vmem>>, vector<1x1x128xf32>
    %73 = vector.shape_cast %72 : vector<1x1x128xf32> to vector<1x128xf32>
    %74 = vector.broadcast %73 : vector<1x128xf32> to vector<128x128xf32>
    %75 = arith.addf %71, %74 : vector<128x128xf32>
    %76 = vector.extract_strided_slice %8 {offsets = [8, 0], sizes = [128, 128], strides = [1, 1]} : vector<144x128xf32> to vector<128x128xf32>
    %77 = arith.addf %75, %76 : vector<128x128xf32>
    %78 = vector.extract_strided_slice %18 {offsets = [8, 0], sizes = [128, 1], strides = [1, 1]} : vector<144x1xi1> to vector<128x1xi1>
    %cst_47 = arith.constant 0.000000e+00 : f32
    %79 = vector.broadcast %cst_47 : f32 to vector<128x128xf32>
    %80 = arith.cmpf oge, %77, %79 : vector<128x128xf32>
    %cst_48 = arith.constant 1.000000e-01 : f32
    %81 = vector.broadcast %cst_48 : f32 to vector<128x128xf32>
    %82 = arith.mulf %81, %77 : vector<128x128xf32>
    %83 = arith.select %80, %77, %82 : vector<128x128xi1>, vector<128x128xf32>
    %cst_49 = arith.constant 0.000000e+00 : f32
    %84 = vector.shape_cast %78 : vector<128x1xi1> to vector<128x1xi1>
    %85 = vector.broadcast %84 : vector<128x1xi1> to vector<128x128xi1>
    %86 = vector.broadcast %cst_49 : f32 to vector<128x128xf32>
    %87 = arith.select %85, %83, %86 : vector<128x128xi1>, vector<128x128xf32>
    %88 = arith.truncf %87 : vector<128x128xf32> to vector<128x128xbf16>
    %89 = vector.extract_strided_slice %88 {offsets = [4, 0], sizes = [114, 128], strides = [1, 1]} : vector<128x128xbf16> to vector<114x128xbf16>
    %c1_50 = arith.constant 1 : index
    %c0_51 = arith.constant 0 : index
    %c0_52 = arith.constant 0 : index
    %c0_53 = arith.constant 0 : index
    %90 = vector.load %arg5[%c1_50, %c0_51, %c0_52, %c0_53] : memref<3x3x128x128xbf16, #tpu.memory_space<vmem>>, vector<1x1x128x128xbf16>
    %91 = vector.shape_cast %90 : vector<1x1x128x128xbf16> to vector<128x128xbf16>
    %cst_54 = arith.constant dense<0.000000e+00> : vector<114x128xf32>
    %92 = tpu.matmul %89, %91, %cst_54 {dimension_numbers = #tpu.dot_dimension_numbers<[1], [0], [0], [1], [0, 0, 1, 1], [], []>} : vector<114x128xbf16>, vector<128x128xbf16>, vector<114x128xf32> -> vector<114x128xf32>
    %93 = vector.extract_strided_slice %88 {offsets = [7, 0], sizes = [114, 128], strides = [1, 1]} : vector<128x128xbf16> to vector<114x128xbf16>
    %c1_55 = arith.constant 1 : index
    %c1_56 = arith.constant 1 : index
    %c0_57 = arith.constant 0 : index
    %c0_58 = arith.constant 0 : index
    %94 = vector.load %arg5[%c1_55, %c1_56, %c0_57, %c0_58] : memref<3x3x128x128xbf16, #tpu.memory_space<vmem>>, vector<1x1x128x128xbf16>
    %95 = vector.shape_cast %94 : vector<1x1x128x128xbf16> to vector<128x128xbf16>
    %cst_59 = arith.constant dense<0.000000e+00> : vector<114x128xf32>
    %96 = tpu.matmul %93, %95, %cst_59 {dimension_numbers = #tpu.dot_dimension_numbers<[1], [0], [0], [1], [0, 0, 1, 1], [], []>} : vector<114x128xbf16>, vector<128x128xbf16>, vector<114x128xf32> -> vector<114x128xf32>
    %97 = arith.addf %92, %96 : vector<114x128xf32>
    %98 = vector.extract_strided_slice %88 {offsets = [10, 0], sizes = [114, 128], strides = [1, 1]} : vector<128x128xbf16> to vector<114x128xbf16>
    %c1_60 = arith.constant 1 : index
    %c2_61 = arith.constant 2 : index
    %c0_62 = arith.constant 0 : index
    %c0_63 = arith.constant 0 : index
    %99 = vector.load %arg5[%c1_60, %c2_61, %c0_62, %c0_63] : memref<3x3x128x128xbf16, #tpu.memory_space<vmem>>, vector<1x1x128x128xbf16>
    %100 = vector.shape_cast %99 : vector<1x1x128x128xbf16> to vector<128x128xbf16>
    %cst_64 = arith.constant dense<0.000000e+00> : vector<114x128xf32>
    %101 = tpu.matmul %98, %100, %cst_64 {dimension_numbers = #tpu.dot_dimension_numbers<[1], [0], [0], [1], [0, 0, 1, 1], [], []>} : vector<114x128xbf16>, vector<128x128xbf16>, vector<114x128xf32> -> vector<114x128xf32>
    %102 = arith.addf %97, %101 : vector<114x128xf32>
    %c1_65 = arith.constant 1 : index
    %c0_66 = arith.constant 0 : index
    %c0_67 = arith.constant 0 : index
    %103 = vector.load %arg6[%c1_65, %c0_66, %c0_67] : memref<3x1x128xf32, #tpu.memory_space<vmem>>, vector<1x1x128xf32>
    %104 = vector.shape_cast %103 : vector<1x1x128xf32> to vector<1x128xf32>
    %105 = vector.broadcast %104 : vector<1x128xf32> to vector<114x128xf32>
    %106 = arith.addf %102, %105 : vector<114x128xf32>
    %107 = vector.extract_strided_slice %18 {offsets = [15, 0], sizes = [114, 1], strides = [1, 1]} : vector<144x1xi1> to vector<114x1xi1>
    %cst_68 = arith.constant 0.000000e+00 : f32
    %108 = vector.broadcast %cst_68 : f32 to vector<114x128xf32>
    %109 = arith.cmpf oge, %106, %108 : vector<114x128xf32>
    %cst_69 = arith.constant 1.000000e-01 : f32
    %110 = vector.broadcast %cst_69 : f32 to vector<114x128xf32>
    %111 = arith.mulf %110, %106 : vector<114x128xf32>
    %112 = arith.select %109, %106, %111 : vector<114x128xi1>, vector<114x128xf32>
    %cst_70 = arith.constant 0.000000e+00 : f32
    %113 = vector.shape_cast %107 : vector<114x1xi1> to vector<114x1xi1>
    %114 = vector.broadcast %113 : vector<114x1xi1> to vector<114x128xi1>
    %115 = vector.broadcast %cst_70 : f32 to vector<114x128xf32>
    %116 = arith.select %114, %112, %115 : vector<114x128xi1>, vector<114x128xf32>
    %117 = arith.truncf %116 : vector<114x128xf32> to vector<114x128xbf16>
    %118 = vector.extract_strided_slice %117 {offsets = [0, 0], sizes = [112, 128], strides = [1, 1]} : vector<114x128xbf16> to vector<112x128xbf16>
    %c1_71 = arith.constant 1 : index
    %c0_72 = arith.constant 0 : index
    %c0_73 = arith.constant 0 : index
    %c0_74 = arith.constant 0 : index
    %119 = vector.load %arg7[%c1_71, %c0_72, %c0_73, %c0_74] : memref<3x3x128x128xbf16, #tpu.memory_space<vmem>>, vector<1x1x128x128xbf16>
    %120 = vector.shape_cast %119 : vector<1x1x128x128xbf16> to vector<128x128xbf16>
    %cst_75 = arith.constant dense<0.000000e+00> : vector<112x128xf32>
    %121 = tpu.matmul %118, %120, %cst_75 {dimension_numbers = #tpu.dot_dimension_numbers<[1], [0], [0], [1], [0, 0, 1, 1], [], []>} : vector<112x128xbf16>, vector<128x128xbf16>, vector<112x128xf32> -> vector<112x128xf32>
    %122 = vector.extract_strided_slice %117 {offsets = [1, 0], sizes = [112, 128], strides = [1, 1]} : vector<114x128xbf16> to vector<112x128xbf16>
    %c1_76 = arith.constant 1 : index
    %c1_77 = arith.constant 1 : index
    %c0_78 = arith.constant 0 : index
    %c0_79 = arith.constant 0 : index
    %123 = vector.load %arg7[%c1_76, %c1_77, %c0_78, %c0_79] : memref<3x3x128x128xbf16, #tpu.memory_space<vmem>>, vector<1x1x128x128xbf16>
    %124 = vector.shape_cast %123 : vector<1x1x128x128xbf16> to vector<128x128xbf16>
    %cst_80 = arith.constant dense<0.000000e+00> : vector<112x128xf32>
    %125 = tpu.matmul %122, %124, %cst_80 {dimension_numbers = #tpu.dot_dimension_numbers<[1], [0], [0], [1], [0, 0, 1, 1], [], []>} : vector<112x128xbf16>, vector<128x128xbf16>, vector<112x128xf32> -> vector<112x128xf32>
    %126 = arith.addf %121, %125 : vector<112x128xf32>
    %127 = vector.extract_strided_slice %117 {offsets = [2, 0], sizes = [112, 128], strides = [1, 1]} : vector<114x128xbf16> to vector<112x128xbf16>
    %c1_81 = arith.constant 1 : index
    %c2_82 = arith.constant 2 : index
    %c0_83 = arith.constant 0 : index
    %c0_84 = arith.constant 0 : index
    %128 = vector.load %arg7[%c1_81, %c2_82, %c0_83, %c0_84] : memref<3x3x128x128xbf16, #tpu.memory_space<vmem>>, vector<1x1x128x128xbf16>
    %129 = vector.shape_cast %128 : vector<1x1x128x128xbf16> to vector<128x128xbf16>
    %cst_85 = arith.constant dense<0.000000e+00> : vector<112x128xf32>
    %130 = tpu.matmul %127, %129, %cst_85 {dimension_numbers = #tpu.dot_dimension_numbers<[1], [0], [0], [1], [0, 0, 1, 1], [], []>} : vector<112x128xbf16>, vector<128x128xbf16>, vector<112x128xf32> -> vector<112x128xf32>
    %131 = arith.addf %126, %130 : vector<112x128xf32>
    %c1_86 = arith.constant 1 : index
    %c0_87 = arith.constant 0 : index
    %c0_88 = arith.constant 0 : index
    %132 = vector.load %arg8[%c1_86, %c0_87, %c0_88] : memref<3x1x128xf32, #tpu.memory_space<vmem>>, vector<1x1x128xf32>
    %133 = vector.shape_cast %132 : vector<1x1x128xf32> to vector<1x128xf32>
    %134 = vector.broadcast %133 : vector<1x128xf32> to vector<112x128xf32>
    %135 = arith.addf %131, %134 : vector<112x128xf32>
    %136 = vector.extract_strided_slice %77 {offsets = [8, 0], sizes = [112, 128], strides = [1, 1]} : vector<128x128xf32> to vector<112x128xf32>
    %137 = arith.addf %135, %136 : vector<112x128xf32>
    %138 = vector.extract_strided_slice %18 {offsets = [16, 0], sizes = [112, 1], strides = [1, 1]} : vector<144x1xi1> to vector<112x1xi1>
    %cst_89 = arith.constant 0.000000e+00 : f32
    %139 = vector.broadcast %cst_89 : f32 to vector<112x128xf32>
    %140 = arith.cmpf oge, %137, %139 : vector<112x128xf32>
    %cst_90 = arith.constant 1.000000e-01 : f32
    %141 = vector.broadcast %cst_90 : f32 to vector<112x128xf32>
    %142 = arith.mulf %141, %137 : vector<112x128xf32>
    %143 = arith.select %140, %137, %142 : vector<112x128xi1>, vector<112x128xf32>
    %cst_91 = arith.constant 0.000000e+00 : f32
    %144 = vector.shape_cast %138 : vector<112x1xi1> to vector<112x1xi1>
    %145 = vector.broadcast %144 : vector<112x1xi1> to vector<112x128xi1>
    %146 = vector.broadcast %cst_91 : f32 to vector<112x128xf32>
    %147 = arith.select %145, %143, %146 : vector<112x128xi1>, vector<112x128xf32>
    %148 = arith.truncf %147 : vector<112x128xf32> to vector<112x128xbf16>
    %149 = vector.extract_strided_slice %148 {offsets = [2, 0], sizes = [98, 128], strides = [1, 1]} : vector<112x128xbf16> to vector<98x128xbf16>
    %c2_92 = arith.constant 2 : index
    %c0_93 = arith.constant 0 : index
    %c0_94 = arith.constant 0 : index
    %c0_95 = arith.constant 0 : index
    %150 = vector.load %arg5[%c2_92, %c0_93, %c0_94, %c0_95] : memref<3x3x128x128xbf16, #tpu.memory_space<vmem>>, vector<1x1x128x128xbf16>
    %151 = vector.shape_cast %150 : vector<1x1x128x128xbf16> to vector<128x128xbf16>
    %cst_96 = arith.constant dense<0.000000e+00> : vector<98x128xf32>
    %152 = tpu.matmul %149, %151, %cst_96 {dimension_numbers = #tpu.dot_dimension_numbers<[1], [0], [0], [1], [0, 0, 1, 1], [], []>} : vector<98x128xbf16>, vector<128x128xbf16>, vector<98x128xf32> -> vector<98x128xf32>
    %153 = vector.extract_strided_slice %148 {offsets = [7, 0], sizes = [98, 128], strides = [1, 1]} : vector<112x128xbf16> to vector<98x128xbf16>
    %c2_97 = arith.constant 2 : index
    %c1_98 = arith.constant 1 : index
    %c0_99 = arith.constant 0 : index
    %c0_100 = arith.constant 0 : index
    %154 = vector.load %arg5[%c2_97, %c1_98, %c0_99, %c0_100] : memref<3x3x128x128xbf16, #tpu.memory_space<vmem>>, vector<1x1x128x128xbf16>
    %155 = vector.shape_cast %154 : vector<1x1x128x128xbf16> to vector<128x128xbf16>
    %cst_101 = arith.constant dense<0.000000e+00> : vector<98x128xf32>
    %156 = tpu.matmul %153, %155, %cst_101 {dimension_numbers = #tpu.dot_dimension_numbers<[1], [0], [0], [1], [0, 0, 1, 1], [], []>} : vector<98x128xbf16>, vector<128x128xbf16>, vector<98x128xf32> -> vector<98x128xf32>
    %157 = arith.addf %152, %156 : vector<98x128xf32>
    %158 = vector.extract_strided_slice %148 {offsets = [12, 0], sizes = [98, 128], strides = [1, 1]} : vector<112x128xbf16> to vector<98x128xbf16>
    %c2_102 = arith.constant 2 : index
    %c2_103 = arith.constant 2 : index
    %c0_104 = arith.constant 0 : index
    %c0_105 = arith.constant 0 : index
    %159 = vector.load %arg5[%c2_102, %c2_103, %c0_104, %c0_105] : memref<3x3x128x128xbf16, #tpu.memory_space<vmem>>, vector<1x1x128x128xbf16>
    %160 = vector.shape_cast %159 : vector<1x1x128x128xbf16> to vector<128x128xbf16>
    %cst_106 = arith.constant dense<0.000000e+00> : vector<98x128xf32>
    %161 = tpu.matmul %158, %160, %cst_106 {dimension_numbers = #tpu.dot_dimension_numbers<[1], [0], [0], [1], [0, 0, 1, 1], [], []>} : vector<98x128xbf16>, vector<128x128xbf16>, vector<98x128xf32> -> vector<98x128xf32>
    %162 = arith.addf %157, %161 : vector<98x128xf32>
    %c2_107 = arith.constant 2 : index
    %c0_108 = arith.constant 0 : index
    %c0_109 = arith.constant 0 : index
    %163 = vector.load %arg6[%c2_107, %c0_108, %c0_109] : memref<3x1x128xf32, #tpu.memory_space<vmem>>, vector<1x1x128xf32>
    %164 = vector.shape_cast %163 : vector<1x1x128xf32> to vector<1x128xf32>
    %165 = vector.broadcast %164 : vector<1x128xf32> to vector<98x128xf32>
    %166 = arith.addf %162, %165 : vector<98x128xf32>
    %167 = vector.extract_strided_slice %18 {offsets = [23, 0], sizes = [98, 1], strides = [1, 1]} : vector<144x1xi1> to vector<98x1xi1>
    %cst_110 = arith.constant 0.000000e+00 : f32
    %168 = vector.broadcast %cst_110 : f32 to vector<98x128xf32>
    %169 = arith.cmpf oge, %166, %168 : vector<98x128xf32>
    %cst_111 = arith.constant 1.000000e-01 : f32
    %170 = vector.broadcast %cst_111 : f32 to vector<98x128xf32>
    %171 = arith.mulf %170, %166 : vector<98x128xf32>
    %172 = arith.select %169, %166, %171 : vector<98x128xi1>, vector<98x128xf32>
    %cst_112 = arith.constant 0.000000e+00 : f32
    %173 = vector.shape_cast %167 : vector<98x1xi1> to vector<98x1xi1>
    %174 = vector.broadcast %173 : vector<98x1xi1> to vector<98x128xi1>
    %175 = vector.broadcast %cst_112 : f32 to vector<98x128xf32>
    %176 = arith.select %174, %172, %175 : vector<98x128xi1>, vector<98x128xf32>
    %177 = arith.truncf %176 : vector<98x128xf32> to vector<98x128xbf16>
    %178 = vector.extract_strided_slice %177 {offsets = [0, 0], sizes = [96, 128], strides = [1, 1]} : vector<98x128xbf16> to vector<96x128xbf16>
    %c2_113 = arith.constant 2 : index
    %c0_114 = arith.constant 0 : index
    %c0_115 = arith.constant 0 : index
    %c0_116 = arith.constant 0 : index
    %179 = vector.load %arg7[%c2_113, %c0_114, %c0_115, %c0_116] : memref<3x3x128x128xbf16, #tpu.memory_space<vmem>>, vector<1x1x128x128xbf16>
    %180 = vector.shape_cast %179 : vector<1x1x128x128xbf16> to vector<128x128xbf16>
    %cst_117 = arith.constant dense<0.000000e+00> : vector<96x128xf32>
    %181 = tpu.matmul %178, %180, %cst_117 {dimension_numbers = #tpu.dot_dimension_numbers<[1], [0], [0], [1], [0, 0, 1, 1], [], []>} : vector<96x128xbf16>, vector<128x128xbf16>, vector<96x128xf32> -> vector<96x128xf32>
    %182 = vector.extract_strided_slice %177 {offsets = [1, 0], sizes = [96, 128], strides = [1, 1]} : vector<98x128xbf16> to vector<96x128xbf16>
    %c2_118 = arith.constant 2 : index
    %c1_119 = arith.constant 1 : index
    %c0_120 = arith.constant 0 : index
    %c0_121 = arith.constant 0 : index
    %183 = vector.load %arg7[%c2_118, %c1_119, %c0_120, %c0_121] : memref<3x3x128x128xbf16, #tpu.memory_space<vmem>>, vector<1x1x128x128xbf16>
    %184 = vector.shape_cast %183 : vector<1x1x128x128xbf16> to vector<128x128xbf16>
    %cst_122 = arith.constant dense<0.000000e+00> : vector<96x128xf32>
    %185 = tpu.matmul %182, %184, %cst_122 {dimension_numbers = #tpu.dot_dimension_numbers<[1], [0], [0], [1], [0, 0, 1, 1], [], []>} : vector<96x128xbf16>, vector<128x128xbf16>, vector<96x128xf32> -> vector<96x128xf32>
    %186 = arith.addf %181, %185 : vector<96x128xf32>
    %187 = vector.extract_strided_slice %177 {offsets = [2, 0], sizes = [96, 128], strides = [1, 1]} : vector<98x128xbf16> to vector<96x128xbf16>
    %c2_123 = arith.constant 2 : index
    %c2_124 = arith.constant 2 : index
    %c0_125 = arith.constant 0 : index
    %c0_126 = arith.constant 0 : index
    %188 = vector.load %arg7[%c2_123, %c2_124, %c0_125, %c0_126] : memref<3x3x128x128xbf16, #tpu.memory_space<vmem>>, vector<1x1x128x128xbf16>
    %189 = vector.shape_cast %188 : vector<1x1x128x128xbf16> to vector<128x128xbf16>
    %cst_127 = arith.constant dense<0.000000e+00> : vector<96x128xf32>
    %190 = tpu.matmul %187, %189, %cst_127 {dimension_numbers = #tpu.dot_dimension_numbers<[1], [0], [0], [1], [0, 0, 1, 1], [], []>} : vector<96x128xbf16>, vector<128x128xbf16>, vector<96x128xf32> -> vector<96x128xf32>
    %191 = arith.addf %186, %190 : vector<96x128xf32>
    %c2_128 = arith.constant 2 : index
    %c0_129 = arith.constant 0 : index
    %c0_130 = arith.constant 0 : index
    %192 = vector.load %arg8[%c2_128, %c0_129, %c0_130] : memref<3x1x128xf32, #tpu.memory_space<vmem>>, vector<1x1x128xf32>
    %193 = vector.shape_cast %192 : vector<1x1x128xf32> to vector<1x128xf32>
    %194 = vector.broadcast %193 : vector<1x128xf32> to vector<96x128xf32>
    %195 = arith.addf %191, %194 : vector<96x128xf32>
    %196 = vector.extract_strided_slice %137 {offsets = [8, 0], sizes = [96, 128], strides = [1, 1]} : vector<112x128xf32> to vector<96x128xf32>
    %197 = arith.addf %195, %196 : vector<96x128xf32>
    %c0_131 = arith.constant 0 : index
    %c0_132 = arith.constant 0 : index
    %c0_133 = arith.constant 0 : index
    %198 = vector.load %arg9[%c0_131, %c0_132, %c0_133] : memref<1x96x128xf32, #tpu.memory_space<vmem>>, vector<1x96x128xf32>
    %199 = vector.shape_cast %198 : vector<1x96x128xf32> to vector<96x128xf32>
    %200 = vector.shape_cast %197 : vector<96x128xf32> to vector<1x96x128xf32>
    tpu.vector_store %arg9[%c0_131, %c0_132, %c0_133], %200 {strides = array<i32>} : memref<1x96x128xf32, #tpu.memory_space<vmem>>, vector<1x96x128xf32>,
    return
  }
  func.func @transform_0(%arg0: i32, %arg1: i32) -> (i32, i32, i32) {
    %c0_i32 = arith.constant 0 : i32
    %c0_i32_0 = arith.constant 0 : i32
    return %arg0, %arg1, %c0_i32 : i32, i32, i32
  }
  func.func @transform_1(%arg0: i32, %arg1: i32) -> (i32, i32, i32) {
    %c3_i32 = arith.constant 3 : i32
    %0 = arith.muli %arg1, %c3_i32 : i32
    %c1_i32 = arith.constant 1 : i32
    %1 = arith.subi %0, %c1_i32 : i32
    %c0_i32 = arith.constant 0 : i32
    %2 = arith.maxsi %1, %c0_i32 : i32
    %c0_i32_0 = arith.constant 0 : i32
    %c0_i32_1 = arith.constant 0 : i32
    return %arg0, %2, %c0_i32_0 : i32, i32, i32
  }
  func.func @transform_2(%arg0: i32, %arg1: i32) -> (i32, i32, i32) {
    %c1_i32 = arith.constant 1 : i32
    %0 = arith.addi %arg1, %c1_i32 : i32
    %c3_i32 = arith.constant 3 : i32
    %1 = arith.muli %0, %c3_i32 : i32
    %c8_i32 = arith.constant 8 : i32
    %2 = arith.minsi %1, %c8_i32 : i32
    %c0_i32 = arith.constant 0 : i32
    %c0_i32_0 = arith.constant 0 : i32
    return %arg0, %2, %c0_i32 : i32, i32, i32
  }
  func.func @transform_3(%arg0: i32, %arg1: i32) -> (i32, i32, i32, i32) {
    %c0_i32 = arith.constant 0 : i32
    %c0_i32_0 = arith.constant 0 : i32
    %c0_i32_1 = arith.constant 0 : i32
    %c0_i32_2 = arith.constant 0 : i32
    %c0_i32_3 = arith.constant 0 : i32
    return %c0_i32, %c0_i32_0, %c0_i32_1, %c0_i32_2 : i32, i32, i32, i32
  }
  func.func @transform_4(%arg0: i32, %arg1: i32) -> (i32, i32, i32) {
    %c0_i32 = arith.constant 0 : i32
    %c0_i32_0 = arith.constant 0 : i32
    %c0_i32_1 = arith.constant 0 : i32
    %c0_i32_2 = arith.constant 0 : i32
    return %c0_i32, %c0_i32_0, %c0_i32_1 : i32, i32, i32
  }
  func.func @transform_5(%arg0: i32, %arg1: i32) -> (i32, i32, i32, i32) {
    %c0_i32 = arith.constant 0 : i32
    %c0_i32_0 = arith.constant 0 : i32
    %c0_i32_1 = arith.constant 0 : i32
    %c0_i32_2 = arith.constant 0 : i32
    %c0_i32_3 = arith.constant 0 : i32
    return %c0_i32, %c0_i32_0, %c0_i32_1, %c0_i32_2 : i32, i32, i32, i32
  }
  func.func @transform_6(%arg0: i32, %arg1: i32) -> (i32, i32, i32) {
    %c0_i32 = arith.constant 0 : i32
    %c0_i32_0 = arith.constant 0 : i32
    %c0_i32_1 = arith.constant 0 : i32
    %c0_i32_2 = arith.constant 0 : i32
    return %c0_i32, %c0_i32_0, %c0_i32_1 : i32, i32, i32
  }
  func.func @transform_7(%arg0: i32, %arg1: i32) -> (i32, i32, i32) {
    %c0_i32 = arith.constant 0 : i32
    %c0_i32_0 = arith.constant 0 : i32
    return %arg0, %arg1, %c0_i32 : i32, i32, i32
  }
}

</mosaic_0001>

<llo_original>
// kernel: tpu_custom_call.1
$region0: #{tpu_custom_call.1}
  #allocation0 [shape = 'u32[]', space=smem, size = 0x4, offset = 0x4, fixed_abs, tag = 'smem constant byte address 0x4 - core index']
  #allocation1 [shape = 'u32[144,128]{1,0:T(1,128)}', space=vmem, size = 0x12000, scoped, tag = 'internal scratch']
  %s0 = inlined_call_operand.hbm [shape: f32[2,288,128], index: 0, kind: input, shape index: {}]
  %s1 = inlined_call_operand.hbm [shape: f32[2,288,128], index: 1, kind: input, shape index: {}]
  %s2 = inlined_call_operand.hbm [shape: f32[2,288,128], index: 2, kind: input, shape index: {}]
  %s3 = inlined_call_operand.hbm [shape: bf16[3,3,128,128], index: 3, kind: input, shape index: {}]
  %s4 = inlined_call_operand.vmem [shape: f32[3,1,128], index: 4, kind: input, shape index: {}]
  %s5 = inlined_call_operand.hbm [shape: bf16[3,3,128,128], index: 5, kind: input, shape index: {}]
  %s6 = inlined_call_operand.vmem [shape: f32[3,1,128], index: 6, kind: input, shape index: {}]
  %s7 = inlined_call_operand.hbm [shape: f32[2,288,128], index: 7, kind: output, shape index: {}]
  %s8 = sld [smem:[#allocation0]]
  $region81: #{tpu_custom_call.1} parent=0
    _
  %s10 = ssub.s32 1, %s8
  %s11 = scalar_select 0, %s10, %s8
  $region1: #{tpu_custom_call.1} parent=0
    #allocation2 [shape = 'u8[98304]{0}', space=vmem, size = 0x18000, scoped, tag = 'input window, operand 0']
    #allocation3 [shape = 's32[2]{0}', space=sflag, size = 0x8, scoped, tag = 'scoped memory for tpu_custom_call.1']
    #allocation4 [shape = 's32[2]{0}', space=sflag, size = 0x8, scoped, tag = 'scoped memory for tpu_custom_call.1']
    #allocation5 [shape = 'u8[32768]{0}', space=vmem, size = 0x8000, scoped, tag = 'input window, operand 1']
    #allocation6 [shape = 's32[2]{0}', space=sflag, size = 0x8, scoped, tag = 'scoped memory for tpu_custom_call.1']
    #allocation7 [shape = 'u8[32768]{0}', space=vmem, size = 0x8000, scoped, tag = 'input window, operand 2']
    #allocation8 [shape = 'u8[294912]{0}', space=vmem, size = 0x48000, scoped, tag = 'input window, operand 3, single buffered']
    #allocation9 [shape = 's32[1]{0}', space=sflag, size = 0x4, scoped, tag = 'scoped memory for tpu_custom_call.1']
    #allocation10 [shape = 'u8[294912]{0}', space=vmem, size = 0x48000, scoped, tag = 'input window, operand 5, single buffered']
    #allocation11 [shape = 'u8[98304]{0}', space=vmem, size = 0x18000, scoped, tag = 'output window, operand 0']
    %12 = vsyncpa [#allocation3], 0
    %s13 = scalar_lea.sflag [#allocation3], 1
    %14 = vsyncpa %s13, 0
    %15 = vsyncpa [#allocation6], 0
    %s16 = scalar_lea.sflag [#allocation6], 1
    %17 = vsyncpa %s16, 0
    %18 = vsyncpa [#allocation9], 0
    %19 = vsyncpa [#allocation4], 0
    %s20 = scalar_lea.sflag [#allocation4], 1
    %21 = vsyncpa %s20, 0
    loop: start=0, step=1, limit=8
    $region2: #{tpu_custom_call.1} parent=1 // loop_pre_header
      _
    $region3: #{tpu_custom_call.1} parent=1 // loop_header
      %s23 = sphi 0, %s27
      %p24 = scmp.ge.s32.totalorder %s23, 8
      %s30 = sphi 0, %s42
      %s31 = sphi 0, %s38
      %s32 = sphi 0, %s30
      %s33 = sphi 0, %s31
      %s34 = sphi 0, %s32
      %s35 = sphi 0, %s33
      %s47 = sphi 0, %s49
      %s50 = sphi 0, %s47
      %s51 = sphi 0, %s50
      %s67 = sphi 0, %s51
      %s83 = sphi 0, %s85
      %s86 = sphi 0, %s83
      %s87 = sphi 0, %s86
      %s103 = sphi 0, %s87
      %s119 = sphi 0, %s121
      %s122 = sphi 0, %s119
      %s123 = sphi 0, %s122
      %s139 = sphi 0, %s123
      %s143 = sphi 0, %s143
      %s145 = sphi 0, %s143
      %s146 = sphi 0, %s145
      %s160 = sphi 0, %s146
      %s164 = sphi 0, %s164
      %s166 = sphi 0, %s164
      %s167 = sphi 0, %s166
      %s181 = sphi 0, %s167
      %s185 = sphi 0, %s185
      %s187 = sphi 0, %s185
      %s188 = sphi 0, %s187
      %s202 = sphi 0, %s188
      %s206 = sphi 0, %s206
      %s208 = sphi 0, %s206
      %s209 = sphi 0, %s208
      %s223 = sphi 0, %s209
      %s231 = sphi 0, %s233
      %s234 = sphi 0, %s231
      %s235 = sphi 0, %s234
      %s251 = sphi 0, %s235
    $region4: #{tpu_custom_call.1} parent=1 // loop_header_branch
      %26 = sbr.rel (%p24) target = $region8
    $region5: #{tpu_custom_call.1} parent=1 // loop_body
      %s28 = ssub.s32 %s23, 1
      %s29 = ssub.s32 %s23, 2
      %s36 = sadd.s32 1, %s31
      %p37 = scmp.ge.s32.totalorder %s36, 3
      %s38 = scalar_select %p37, 0, %s36
      %s39 = sadd.s32 1, %s30
      %s40 = scalar_select %p37, %s39, %s30
      %p41 = scmp.ge.s32.totalorder %s40, 2
      %s42 = scalar_select %p41, 0, %s40
      %s43 = ssub.s32 %s30, %s42
      %s44 = ssub.s32 %s31, %s38
      %s45 = sor.u32 %s43, %s44
      %p46 = scmp.eq.s32.totalorder %s45, 0
      %s48 = sadd.s32 %s47, 1
      %s49 = scalar_select %p46, %s47, %s48
      %p52 = pneg %p46
      %p53 = scmp.eq.s32.totalorder %s23, 5
      %p54 = por %p52, %p53
      %p55 = scmp.ne.s32.totalorder %s47, %s50
      %p56 = scmp.eq.s32.totalorder %s23, 0
      %p57 = por %p55, %p56
      %p58 = scmp.ne.s32.totalorder %s47, %s50
      %p59 = scmp.eq.s32.totalorder %s28, 5
      %p60 = por %p58, %p59
      %p61 = scmp.ne.s32.totalorder %s50, %s51
      %p62 = scmp.eq.s32.totalorder %s28, 0
      %p63 = por %p61, %p62
      %p64 = scmp.ne.s32.totalorder %s50, %s51
      %p65 = scmp.eq.s32.totalorder %s29, 5
      %p66 = por %p64, %p65
      %p68 = scmp.ne.s32.totalorder %s51, %s67
      %p69 = scmp.eq.s32.totalorder %s29, 0
      %p70 = por %p68, %p69
      %s71 = smul.u32 %s31, 3
      %s72 = ssub.s32 %s71, 1
      %p73 = scmp.gt.s32.totalorder %s72, 0
      %s74 = scalar_select %p73, %s72, 0
      %s75 = smul.u32 %s38, 3
      %s76 = ssub.s32 %s75, 1
      %p77 = scmp.gt.s32.totalorder %s76, 0
      %s78 = scalar_select %p77, %s76, 0
      %s79 = ssub.s32 %s30, %s42
      %s80 = ssub.s32 %s74, %s78
      %s81 = sor.u32 %s79, %s80
      %p82 = scmp.eq.s32.totalorder %s81, 0
      %s84 = sadd.s32 %s83, 1
      %s85 = scalar_select %p82, %s83, %s84
      %p88 = pneg %p82
      %p89 = scmp.eq.s32.totalorder %s23, 5
      %p90 = por %p88, %p89
      %p91 = scmp.ne.s32.totalorder %s83, %s86
      %p92 = scmp.eq.s32.totalorder %s23, 0
      %p93 = por %p91, %p92
      %p94 = scmp.ne.s32.totalorder %s83, %s86
      %p95 = scmp.eq.s32.totalorder %s28, 5
      %p96 = por %p94, %p95
      %p97 = scmp.ne.s32.totalorder %s86, %s87
      %p98 = scmp.eq.s32.totalorder %s28, 0
      %p99 = por %p97, %p98
      %p100 = scmp.ne.s32.totalorder %s86, %s87
      %p101 = scmp.eq.s32.totalorder %s29, 5
      %p102 = por %p100, %p101
      %p104 = scmp.ne.s32.totalorder %s87, %s103
      %p105 = scmp.eq.s32.totalorder %s29, 0
      %p106 = por %p104, %p105
      %s107 = sadd.s32 %s31, 1
      %s108 = smul.u32 %s107, 3
      %p109 = scmp.lt.s32.totalorder %s108, 8
      %s110 = scalar_select %p109, %s108, 8
      %s111 = sadd.s32 %s38, 1
      %s112 = smul.u32 %s111, 3
      %p113 = scmp.lt.s32.totalorder %s112, 8
      %s114 = scalar_select %p113, %s112, 8
      %s115 = ssub.s32 %s30, %s42
      %s116 = ssub.s32 %s110, %s114
      %s117 = sor.u32 %s115, %s116
      %p118 = scmp.eq.s32.totalorder %s117, 0
      %s120 = sadd.s32 %s119, 1
      %s121 = scalar_select %p118, %s119, %s120
      %p124 = pneg %p118
      %p125 = scmp.eq.s32.totalorder %s23, 5
      %p126 = por %p124, %p125
      %p127 = scmp.ne.s32.totalorder %s119, %s122
      %p128 = scmp.eq.s32.totalorder %s23, 0
      %p129 = por %p127, %p128
      %p130 = scmp.ne.s32.totalorder %s119, %s122
      %p131 = scmp.eq.s32.totalorder %s28, 5
      %p132 = por %p130, %p131
      %p133 = scmp.ne.s32.totalorder %s122, %s123
      %p134 = scmp.eq.s32.totalorder %s28, 0
      %p135 = por %p133, %p134
      %p136 = scmp.ne.s32.totalorder %s122, %s123
      %p137 = scmp.eq.s32.totalorder %s29, 5
      %p138 = por %p136, %p137
      %p140 = scmp.ne.s32.totalorder %s123, %s139
      %p141 = scmp.eq.s32.totalorder %s29, 0
      %p142 = por %p140, %p141
      %s144 = sadd.s32 %s143, 1
      %p147 = scmp.eq.s32.totalorder %s23, 5
      %p148 = scmp.ne.s32.totalorder %s143, %s145
      %p149 = scmp.eq.s32.totalorder %s23, 0
      %p150 = por %p148, %p149
      %p151 = scmp.ne.s32.totalorder %s143, %s145
      %p152 = scmp.eq.s32.totalorder %s28, 5
      %p153 = por %p151, %p152
      %p154 = scmp.ne.s32.totalorder %s145, %s146
      %p155 = scmp.eq.s32.totalorder %s28, 0
      %p156 = por %p154, %p155
      %p157 = scmp.ne.s32.totalorder %s145, %s146
      %p158 = scmp.eq.s32.totalorder %s29, 5
      %p159 = por %p157, %p158
      %p161 = scmp.ne.s32.totalorder %s146, %s160
      %p162 = scmp.eq.s32.totalorder %s29, 0
      %p163 = por %p161, %p162
      %s165 = sadd.s32 %s164, 1
      %p168 = scmp.eq.s32.totalorder %s23, 5
      %p169 = scmp.ne.s32.totalorder %s164, %s166
      %p170 = scmp.eq.s32.totalorder %s23, 0
      %p171 = por %p169, %p170
      %p172 = scmp.ne.s32.totalorder %s164, %s166
      %p173 = scmp.eq.s32.totalorder %s28, 5
      %p174 = por %p172, %p173
      %p175 = scmp.ne.s32.totalorder %s166, %s167
      %p176 = scmp.eq.s32.totalorder %s28, 0
      %p177 = por %p175, %p176
      %p178 = scmp.ne.s32.totalorder %s166, %s167
      %p179 = scmp.eq.s32.totalorder %s29, 5
      %p180 = por %p178, %p179
      %p182 = scmp.ne.s32.totalorder %s167, %s181
      %p183 = scmp.eq.s32.totalorder %s29, 0
      %p184 = por %p182, %p183
      %s186 = sadd.s32 %s185, 1
      %p189 = scmp.eq.s32.totalorder %s23, 5
      %p190 = scmp.ne.s32.totalorder %s185, %s187
      %p191 = scmp.eq.s32.totalorder %s23, 0
      %p192 = por %p190, %p191
      %p193 = scmp.ne.s32.totalorder %s185, %s187
      %p194 = scmp.eq.s32.totalorder %s28, 5
      %p195 = por %p193, %p194
      %p196 = scmp.ne.s32.totalorder %s187, %s188
      %p197 = scmp.eq.s32.totalorder %s28, 0
      %p198 = por %p196, %p197
      %p199 = scmp.ne.s32.totalorder %s187, %s188
      %p200 = scmp.eq.s32.totalorder %s29, 5
      %p201 = por %p199, %p200
      %p203 = scmp.ne.s32.totalorder %s188, %s202
      %p204 = scmp.eq.s32.totalorder %s29, 0
      %p205 = por %p203, %p204
      %s207 = sadd.s32 %s206, 1
      %p210 = scmp.eq.s32.totalorder %s23, 5
      %p211 = scmp.ne.s32.totalorder %s206, %s208
      %p212 = scmp.eq.s32.totalorder %s23, 0
      %p213 = por %p211, %p212
      %p214 = scmp.ne.s32.totalorder %s206, %s208
      %p215 = scmp.eq.s32.totalorder %s28, 5
      %p216 = por %p214, %p215
      %p217 = scmp.ne.s32.totalorder %s208, %s209
      %p218 = scmp.eq.s32.totalorder %s28, 0
      %p219 = por %p217, %p218
      %p220 = scmp.ne.s32.totalorder %s208, %s209
      %p221 = scmp.eq.s32.totalorder %s29, 5
      %p222 = por %p220, %p221
      %p224 = scmp.ne.s32.totalorder %s209, %s223
      %p225 = scmp.eq.s32.totalorder %s29, 0
      %p226 = por %p224, %p225
      %s227 = ssub.s32 %s30, %s42
      %s228 = ssub.s32 %s31, %s38
      %s229 = sor.u32 %s227, %s228
      %p230 = scmp.eq.s32.totalorder %s229, 0
      %s232 = sadd.s32 %s231, 1
      %s233 = scalar_select %p230, %s231, %s232
      %p236 = pneg %p230
      %p237 = scmp.eq.s32.totalorder %s23, 5
      %p238 = por %p236, %p237
      %p239 = scmp.ne.s32.totalorder %s231, %s234
      %p240 = scmp.eq.s32.totalorder %s23, 0
      %p241 = por %p239, %p240
      %p242 = scmp.ne.s32.totalorder %s231, %s234
      %p243 = scmp.eq.s32.totalorder %s28, 5
      %p244 = por %p242, %p243
      %p245 = scmp.ne.s32.totalorder %s234, %s235
      %p246 = scmp.eq.s32.totalorder %s28, 0
      %p247 = por %p245, %p246
      %p248 = scmp.ne.s32.totalorder %s234, %s235
      %p249 = scmp.eq.s32.totalorder %s29, 5
      %p250 = por %p248, %p249
      %p252 = scmp.ne.s32.totalorder %s235, %s251
      %p253 = scmp.eq.s32.totalorder %s29, 0
      %p254 = por %p252, %p253
      %p255 = scmp.le.s32.totalorder 1, %s23
      %p256 = scmp.lt.s32.totalorder %s23, 7
      %p257 = pnand %p255, %p256
      %p258 = pneg %p257
      // Predicated region
      $region9: #{tpu_custom_call.1} parent=5 // pred_check
        _
      $region10: #{tpu_custom_call.1} parent=5 // pred_check_branch
        %260 = sbr.rel (%p257) target = $region12
      $region11: #{tpu_custom_call.1} parent=5 // pred_region
        %s261 = ssub.s32 %s23, 1
        // Predicated region
        $region13: #{tpu_custom_call.1} parent=11 // pred_check
          %p262 = pneg %p156
        $region14: #{tpu_custom_call.1} parent=11 // pred_check_branch
          %264 = sbr.rel (%p262) target = $region16
        $region15: #{tpu_custom_call.1} parent=11 // pred_region
          %s266 = ssub.s32 9216, 9216
          %267 = vsyncadd [#allocation9], %s266
          %s268 = sshll.u32 [#allocation8], 4
          %s269 = int_to_ptr.vmem [resolvable:$true] %s268
          %274 = dma.hbm_to_vmem [thread:$0]  %s3, 9216, %s269, [#allocation9], 64, 64, 4
        $region16: #{tpu_custom_call.1} parent=11 // pred_fallthru
          _
        // Predicated region
        $region17: #{tpu_custom_call.1} parent=11 // pred_check
          %p275 = pneg %p177
        $region18: #{tpu_custom_call.1} parent=11 // pred_check_branch
          %277 = sbr.rel (%p275) target = $region20
        $region19: #{tpu_custom_call.1} parent=11 // pred_region
          _
        $region20: #{tpu_custom_call.1} parent=11 // pred_fallthru
          _
        // Predicated region
        $region21: #{tpu_custom_call.1} parent=11 // pred_check
          %p278 = pneg %p198
        $region22: #{tpu_custom_call.1} parent=11 // pred_check_branch
          %280 = sbr.rel (%p278) target = $region24
        $region23: #{tpu_custom_call.1} parent=11 // pred_region
          %s282 = ssub.s32 9216, 9216
          %283 = vsyncadd [#allocation9], %s282
          %s284 = sshll.u32 [#allocation10], 4
          %s285 = int_to_ptr.vmem [resolvable:$true] %s284
          %290 = dma.hbm_to_vmem [thread:$0]  %s5, 9216, %s285, [#allocation9], 64, 64, 4
        $region24: #{tpu_custom_call.1} parent=11 // pred_fallthru
          _
        // Predicated region
        $region25: #{tpu_custom_call.1} parent=11 // pred_check
          %p291 = pneg %p219
        $region26: #{tpu_custom_call.1} parent=11 // pred_check_branch
          %293 = sbr.rel (%p291) target = $region28
        $region27: #{tpu_custom_call.1} parent=11 // pred_region
          _
        $region28: #{tpu_custom_call.1} parent=11 // pred_fallthru
          _
      $region12: #{tpu_custom_call.1} parent=5 // pred_fallthru
        _
      %p294 = scmp.lt.s32.totalorder %s23, 6
      // Predicated region
      $region29: #{tpu_custom_call.1} parent=5 // pred_check
        %p295 = pneg %p294
      $region30: #{tpu_custom_call.1} parent=5 // pred_check_branch
        %297 = sbr.rel (%p295) target = $region32
      $region31: #{tpu_custom_call.1} parent=5 // pred_region
        // Predicated region
        $region33: #{tpu_custom_call.1} parent=31 // pred_check
          %p298 = pneg %p57
        $region34: #{tpu_custom_call.1} parent=31 // pred_check_branch
          %300 = sbr.rel (%p298) target = $region36
        $region35: #{tpu_custom_call.1} parent=31 // pred_region
          %s301 = sand.u32 %s47, 1
          %s302 = scalar_lea.sflag [#allocation3], %s301
          %s303 = sand.u32 %s47, 1
          %s304 = smul.addr %s303, 96
          %s305 = scalar_lea.vmem [#allocation2], %s304
          %s306 = smul.u32 12, %s31
          %s308 = ssub.s32 1536, 1536
          %309 = vsyncadd %s302, %s308
          %s310 = smul.addr %s30, 36
          %s311 = sadd.s32 %s306, %s310
          %s312 = smul.addr %s311, 128
          %s313 = scalar_lea.hbm %s0, %s312
          %s314 = sshll.u32 %s305, 4
          %s315 = int_to_ptr.vmem [resolvable:$true] %s314
          %320 = dma.hbm_to_vmem [thread:$0]  %s313, 1536, %s315, %s302, 128, 128, 8
        $region36: #{tpu_custom_call.1} parent=31 // pred_fallthru
          _
        // Predicated region
        $region37: #{tpu_custom_call.1} parent=31 // pred_check
          %p321 = pneg %p93
        $region38: #{tpu_custom_call.1} parent=31 // pred_check_branch
          %323 = sbr.rel (%p321) target = $region40
        $region39: #{tpu_custom_call.1} parent=31 // pred_region
          %s324 = sand.u32 %s23, 1
          %s325 = scalar_lea.sflag [#allocation6], %s324
          %s326 = sand.u32 %s83, 1
          %s327 = smul.addr %s326, 32
          %s328 = scalar_lea.vmem [#allocation5], %s327
          %s329 = smul.u32 %s31, 3
          %s330 = ssub.s32 %s329, 1
          %p331 = scmp.gt.s32.totalorder %s330, 0
          %s332 = scalar_select %p331, %s330, 0
          %s333 = smul.u32 4, %s332
          %s335 = ssub.s32 512, 512
          %336 = vsyncadd %s325, %s335
          %s337 = smul.addr %s30, 36
          %s338 = sadd.s32 %s333, %s337
          %s339 = smul.addr %s338, 128
          %s340 = scalar_lea.hbm %s1, %s339
          %s341 = sshll.u32 %s328, 4
          %s342 = int_to_ptr.vmem [resolvable:$true] %s341
          %347 = dma.hbm_to_vmem [thread:$0]  %s340, 512, %s342, %s325, 128, 128, 8
        $region40: #{tpu_custom_call.1} parent=31 // pred_fallthru
          _
        // Predicated region
        $region41: #{tpu_custom_call.1} parent=31 // pred_check
          %p348 = pneg %p129
        $region42: #{tpu_custom_call.1} parent=31 // pred_check_branch
          %350 = sbr.rel (%p348) target = $region44
        $region43: #{tpu_custom_call.1} parent=31 // pred_region
          %s351 = sand.u32 %s23, 1
          %s352 = scalar_lea.sflag [#allocation6], %s351
          %s353 = sand.u32 %s119, 1
          %s354 = smul.addr %s353, 32
          %s355 = scalar_lea.vmem [#allocation7], %s354
          %s356 = sadd.s32 %s31, 1
          %s357 = smul.u32 %s356, 3
          %p358 = scmp.lt.s32.totalorder %s357, 8
          %s359 = scalar_select %p358, %s357, 8
          %s360 = smul.u32 4, %s359
          %s362 = ssub.s32 512, 512
          %363 = vsyncadd %s352, %s362
          %s364 = smul.addr %s30, 36
          %s365 = sadd.s32 %s360, %s364
          %s366 = smul.addr %s365, 128
          %s367 = scalar_lea.hbm %s2, %s366
          %s368 = sshll.u32 %s355, 4
          %s369 = int_to_ptr.vmem [resolvable:$true] %s368
          %374 = dma.hbm_to_vmem [thread:$0]  %s367, 512, %s369, %s352, 128, 128, 8
        $region44: #{tpu_custom_call.1} parent=31 // pred_fallthru
          _
      $region32: #{tpu_custom_call.1} parent=5 // pred_fallthru
        _
      %p375 = scmp.le.s32.totalorder 1, %s23
      %p376 = scmp.lt.s32.totalorder %s23, 7
      %p377 = pnand %p375, %p376
      %p378 = pneg %p377
      // Predicated region
      $region45: #{tpu_custom_call.1} parent=5 // pred_check
        _
      $region46: #{tpu_custom_call.1} parent=5 // pred_check_branch
        %380 = sbr.rel (%p377) target = $region48
      $region47: #{tpu_custom_call.1} parent=5 // pred_region
        %s381 = ssub.s32 %s23, 1
        %s382 = sand.u32 %s50, 1
        %s383 = scalar_lea.sflag [#allocation3], %s382
        %s384 = sand.u32 %s50, 1
        %s385 = smul.addr %s384, 96
        %s386 = scalar_lea.vmem [#allocation2], %s385
        // Predicated region
        $region49: #{tpu_custom_call.1} parent=47 // pred_check
          %p387 = pneg %p63
        $region50: #{tpu_custom_call.1} parent=47 // pred_check_branch
          %389 = sbr.rel (%p387) target = $region52
        $region51: #{tpu_custom_call.1} parent=47 // pred_region
          %390 = dma.done %s383, 1536
        $region52: #{tpu_custom_call.1} parent=47 // pred_fallthru
          _
        %s391 = sand.u32 %s28, 1
        %s392 = scalar_lea.sflag [#allocation6], %s391
        %s393 = sand.u32 %s86, 1
        %s394 = smul.addr %s393, 32
        %s395 = scalar_lea.vmem [#allocation5], %s394
        // Predicated region
        $region53: #{tpu_custom_call.1} parent=47 // pred_check
          %p396 = pneg %p99
        $region54: #{tpu_custom_call.1} parent=47 // pred_check_branch
          %398 = sbr.rel (%p396) target = $region56
        $region55: #{tpu_custom_call.1} parent=47 // pred_region
          %399 = dma.done %s392, 512
        $region56: #{tpu_custom_call.1} parent=47 // pred_fallthru
          _
        %s400 = sand.u32 %s28, 1
        %s401 = scalar_lea.sflag [#allocation6], %s400
        %s402 = sand.u32 %s122, 1
        %s403 = smul.addr %s402, 32
        %s404 = scalar_lea.vmem [#allocation7], %s403
        // Predicated region
        $region57: #{tpu_custom_call.1} parent=47 // pred_check
          %p405 = pneg %p135
        $region58: #{tpu_custom_call.1} parent=47 // pred_check_branch
          %407 = sbr.rel (%p405) target = $region60
        $region59: #{tpu_custom_call.1} parent=47 // pred_region
          %408 = dma.done %s401, 512
        $region60: #{tpu_custom_call.1} parent=47 // pred_fallthru
          _
        // Predicated region
        $region61: #{tpu_custom_call.1} parent=47 // pred_check
          %p409 = pneg %p156
        $region62: #{tpu_custom_call.1} parent=47 // pred_check_branch
          %411 = sbr.rel (%p409) target = $region64
        $region63: #{tpu_custom_call.1} parent=47 // pred_region
          %412 = dma.done [#allocation9], 9216
        $region64: #{tpu_custom_call.1} parent=47 // pred_fallthru
          _
        // Predicated region
        $region65: #{tpu_custom_call.1} parent=47 // pred_check
          %p413 = pneg %p198
        $region66: #{tpu_custom_call.1} parent=47 // pred_check_branch
          %415 = sbr.rel (%p413) target = $region68
        $region67: #{tpu_custom_call.1} parent=47 // pred_region
          %416 = dma.done [#allocation9], 9216
        $region68: #{tpu_custom_call.1} parent=47 // pred_fallthru
          _
        %s417 = sand.u32 %s50, 1
        %s418 = scalar_lea.sflag [#allocation3], %s417
        %s419 = sand.u32 %s50, 1
        %s420 = smul.addr %s419, 96
        %s421 = scalar_lea.vmem [#allocation2], %s420
        %p422 = pneg %p63
        %p423 = pneg %p60
        %s424 = sand.u32 %s28, 1
        %s425 = scalar_lea.sflag [#allocation6], %s424
        %s426 = sand.u32 %s86, 1
        %s427 = smul.addr %s426, 32
        %s428 = scalar_lea.vmem [#allocation5], %s427
        %p429 = pneg %p99
        %p430 = pneg %p96
        %s431 = sand.u32 %s28, 1
        %s432 = scalar_lea.sflag [#allocation6], %s431
        %s433 = sand.u32 %s122, 1
        %s434 = smul.addr %s433, 32
        %s435 = scalar_lea.vmem [#allocation7], %s434
        %p436 = pneg %p135
        %p437 = pneg %p132
        %p438 = pneg %p156
        %p439 = pneg %p153
        %p440 = pneg %p177
        %p441 = pneg %p174
        %p442 = pneg %p198
        %p443 = pneg %p195
        %p444 = pneg %p219
        %p445 = pneg %p216
        %p446 = pneg %p247
        %p447 = pneg %p244
        %s448 = sand.u32 %s234, 1
        %s449 = scalar_lea.sflag [#allocation4], %s448
        %s450 = sand.u32 %s234, 1
        %s451 = smul.addr %s450, 96
        %s452 = scalar_lea.vmem [#allocation11], %s451
        %s453 = smul.u32 12, %s33
        %s454 = smul.u32 %s33, 3
        %s455 = ssub.s32 %s454, 1
        %p456 = scmp.gt.s32.totalorder %s455, 0
        %s457 = scalar_select %p456, %s455, 0
        %s458 = smul.u32 4, %s457
        %s459 = sadd.s32 %s33, 1
        %s460 = smul.u32 %s459, 3
        %p461 = scmp.lt.s32.totalorder %s460, 8
        %s462 = scalar_select %p461, %s460, 8
        %s463 = smul.u32 4, %s462
        %s464 = smul.u32 12, %s33
        %v466 = vld [vmem:[%s395 + $0x8] sm:$0xff]
        %v467 = vld [vmem:[%s395 + $0x10] sm:$0xff]
        %v468 = vld [vmem:[%s395 + $0x18] sm:$0xff]
        %v469 = vld [vmem:[%s404] sm:$0xff]
        %v470 = vld [vmem:[%s404 + $0x8] sm:$0xff]
        %v471 = vld [vmem:[%s404 + $0x10] sm:$0xff]
        %v472 = vld [vmem:[%s386] sm:$0xff]
        %v473 = vld [vmem:[%s386 + $0x8] sm:$0xff]
        %v474 = vld [vmem:[%s386 + $0x10] sm:$0xff]
        %v475 = vld [vmem:[%s386 + $0x18] sm:$0xff]
        %v476 = vld [vmem:[%s386 + $0x20] sm:$0xff]
        %v477 = vld [vmem:[%s386 + $0x28] sm:$0xff]
        %v478 = vld [vmem:[%s386 + $0x30] sm:$0xff]
        %v479 = vld [vmem:[%s386 + $0x38] sm:$0xff]
        %v480 = vld [vmem:[%s386 + $0x40] sm:$0xff]
        %v481 = vld [vmem:[%s386 + $0x48] sm:$0xff]
        %v482 = vld [vmem:[%s386 + $0x50] sm:$0xff]
        %v483 = vld [vmem:[%s386 + $0x58] sm:$0xff]
        %s484 = smul.u32 %s33, 96
        %s485 = ssub.s32 %s484, 24
        %v486 = vlaneseq
        %v487 = vshrl.u32 %v486, 7
        %v488 = vadd.s32 %v487, 8
        %v489 = vadd.s32 %v487, 16
        %v490 = vadd.s32 %v487, 24
        %v491 = vadd.s32 %v487, 32
        %v492 = vadd.s32 %v487, 40
        %v493 = vadd.s32 %v487, 48
        %v494 = vadd.s32 %v487, 56
        %v495 = vadd.s32 %v487, 64
        %v496 = vadd.s32 %v487, 72
        %v497 = vadd.s32 %v487, 80
        %v498 = vadd.s32 %v487, 88
        %v499 = vadd.s32 %v487, 96
        %v500 = vadd.s32 %v487, 104
        %v501 = vadd.s32 %v487, 112
        %v502 = vadd.s32 %v487, 120
        %v503 = vadd.s32 %v487, 128
        %v504 = vadd.s32 %v487, 136
        %v505 = vstv %s485
        %v506 = vadd.s32 %v505, %v487
        %v507 = vadd.s32 %v505, %v488
        %v508 = vadd.s32 %v505, %v489
        %v509 = vadd.s32 %v505, %v490
        %v510 = vadd.s32 %v505, %v491
        %v511 = vadd.s32 %v505, %v492
        %v512 = vadd.s32 %v505, %v493
        %v513 = vadd.s32 %v505, %v494
        %v514 = vadd.s32 %v505, %v495
        %v515 = vadd.s32 %v505, %v496
        %v516 = vadd.s32 %v505, %v497
        %v517 = vadd.s32 %v505, %v498
        %v518 = vadd.s32 %v505, %v499
        %v519 = vadd.s32 %v505, %v500
        %v520 = vadd.s32 %v505, %v501
        %v521 = vadd.s32 %v505, %v502
        %v522 = vadd.s32 %v505, %v503
        %v523 = vadd.s32 %v505, %v504
        %vm524 = vcmp.ge.s32.totalorder %v506, 0
        %vm525 = vcmp.ge.s32.totalorder %v507, 0
        %vm526 = vcmp.ge.s32.totalorder %v508, 0
        %vm527 = vcmp.ge.s32.totalorder %v509, 0
        %vm528 = vcmp.ge.s32.totalorder %v510, 0
        %vm529 = vcmp.ge.s32.totalorder %v511, 0
        %vm530 = vcmp.ge.s32.totalorder %v512, 0
        %vm531 = vcmp.ge.s32.totalorder %v513, 0
        %vm532 = vcmp.ge.s32.totalorder %v514, 0
        %vm533 = vcmp.ge.s32.totalorder %v515, 0
        %vm534 = vcmp.ge.s32.totalorder %v516, 0
        %vm535 = vcmp.ge.s32.totalorder %v517, 0
        %vm536 = vcmp.ge.s32.totalorder %v518, 0
        %vm537 = vcmp.ge.s32.totalorder %v519, 0
        %vm538 = vcmp.ge.s32.totalorder %v520, 0
        %vm539 = vcmp.ge.s32.totalorder %v521, 0
        %vm540 = vcmp.ge.s32.totalorder %v522, 0
        %vm541 = vcmp.ge.s32.totalorder %v523, 0
        %vm542 = vcmp.lt.s32.totalorder %v506, 200
        %vm543 = vcmp.lt.s32.totalorder %v507, 200
        %vm544 = vcmp.lt.s32.totalorder %v508, 200
        %vm545 = vcmp.lt.s32.totalorder %v509, 200
        %vm546 = vcmp.lt.s32.totalorder %v510, 200
        %vm547 = vcmp.lt.s32.totalorder %v511, 200
        %vm548 = vcmp.lt.s32.totalorder %v512, 200
        %vm549 = vcmp.lt.s32.totalorder %v513, 200
        %vm550 = vcmp.lt.s32.totalorder %v514, 200
        %vm551 = vcmp.lt.s32.totalorder %v515, 200
        %vm552 = vcmp.lt.s32.totalorder %v516, 200
        %vm553 = vcmp.lt.s32.totalorder %v517, 200
        %vm554 = vcmp.lt.s32.totalorder %v518, 200
        %vm555 = vcmp.lt.s32.totalorder %v519, 200
        %vm556 = vcmp.lt.s32.totalorder %v520, 200
        %vm557 = vcmp.lt.s32.totalorder %v521, 200
        %vm558 = vcmp.lt.s32.totalorder %v522, 200
        %vm559 = vcmp.lt.s32.totalorder %v523, 200
        %vm560 = vmand %vm524, %vm542
        %vm561 = vmand %vm525, %vm543
        %vm562 = vmand %vm526, %vm544
        %vm563 = vmand %vm527, %vm545
        %vm564 = vmand %vm528, %vm546
        %vm565 = vmand %vm529, %vm547
        %vm566 = vmand %vm530, %vm548
        %vm567 = vmand %vm531, %vm549
        %vm568 = vmand %vm532, %vm550
        %vm569 = vmand %vm533, %vm551
        %vm570 = vmand %vm534, %vm552
        %vm571 = vmand %vm535, %vm553
        %vm572 = vmand %vm536, %vm554
        %vm573 = vmand %vm537, %vm555
        %vm574 = vmand %vm538, %vm556
        %vm575 = vmand %vm539, %vm557
        %vm576 = vmand %vm540, %vm558
        %vm577 = vmand %vm541, %vm559
        %vm578 = vcmp.ge.f32.partialorder %v466, 0.0
        %vm579 = vcmp.ge.f32.partialorder %v467, 0.0
        %vm580 = vcmp.ge.f32.partialorder %v468, 0.0
        %vm581 = vcmp.ge.f32.partialorder %v472, 0.0
        %vm582 = vcmp.ge.f32.partialorder %v473, 0.0
        %vm583 = vcmp.ge.f32.partialorder %v474, 0.0
        %vm584 = vcmp.ge.f32.partialorder %v475, 0.0
        %vm585 = vcmp.ge.f32.partialorder %v476, 0.0
        %vm586 = vcmp.ge.f32.partialorder %v477, 0.0
        %vm587 = vcmp.ge.f32.partialorder %v478, 0.0
        %vm588 = vcmp.ge.f32.partialorder %v479, 0.0
        %vm589 = vcmp.ge.f32.partialorder %v480, 0.0
        %vm590 = vcmp.ge.f32.partialorder %v481, 0.0
        %vm591 = vcmp.ge.f32.partialorder %v482, 0.0
        %vm592 = vcmp.ge.f32.partialorder %v483, 0.0
        %vm593 = vcmp.ge.f32.partialorder %v469, 0.0
        %vm594 = vcmp.ge.f32.partialorder %v470, 0.0
        %vm595 = vcmp.ge.f32.partialorder %v471, 0.0
        %v596 = vmul.f32 %v466, 0.1
        %v597 = vmul.f32 %v467, 0.1
        %v598 = vmul.f32 %v468, 0.1
        %v599 = vmul.f32 %v472, 0.1
        %v600 = vmul.f32 %v473, 0.1
        %v601 = vmul.f32 %v474, 0.1
        %v602 = vmul.f32 %v475, 0.1
        %v603 = vmul.f32 %v476, 0.1
        %v604 = vmul.f32 %v477, 0.1
        %v605 = vmul.f32 %v478, 0.1
        %v606 = vmul.f32 %v479, 0.1
        %v607 = vmul.f32 %v480, 0.1
        %v608 = vmul.f32 %v481, 0.1
        %v609 = vmul.f32 %v482, 0.1
        %v610 = vmul.f32 %v483, 0.1
        %v611 = vmul.f32 %v469, 0.1
        %v612 = vmul.f32 %v470, 0.1
        %v613 = vmul.f32 %v471, 0.1
        %v614 = vsel %vm578, %v466, %v596
        %v615 = vsel %vm579, %v467, %v597
        %v616 = vsel %vm580, %v468, %v598
        %v617 = vsel %vm581, %v472, %v599
        %v618 = vsel %vm582, %v473, %v600
        %v619 = vsel %vm583, %v474, %v601
        %v620 = vsel %vm584, %v475, %v602
        %v621 = vsel %vm585, %v476, %v603
        %v622 = vsel %vm586, %v477, %v604
        %v623 = vsel %vm587, %v478, %v605
        %v624 = vsel %vm588, %v479, %v606
        %v625 = vsel %vm589, %v480, %v607
        %v626 = vsel %vm590, %v481, %v608
        %v627 = vsel %vm591, %v482, %v609
        %v628 = vsel %vm592, %v483, %v610
        %v629 = vsel %vm593, %v469, %v611
        %v630 = vsel %vm594, %v470, %v612
        %v631 = vsel %vm595, %v471, %v613
        %v632 = vsel %vm560, 1, 0
        %v633 = vsel %vm561, 1, 0
        %v634 = vsel %vm562, 1, 0
        %v635 = vsel %vm563, 1, 0
        %v636 = vsel %vm564, 1, 0
        %v637 = vsel %vm565, 1, 0
        %v638 = vsel %vm566, 1, 0
        %v639 = vsel %vm567, 1, 0
        %v640 = vsel %vm568, 1, 0
        %v641 = vsel %vm569, 1, 0
        %v642 = vsel %vm570, 1, 0
        %v643 = vsel %vm571, 1, 0
        %v644 = vsel %vm572, 1, 0
        %v645 = vsel %vm573, 1, 0
        %v646 = vsel %vm574, 1, 0
        %v647 = vsel %vm575, 1, 0
        %v648 = vsel %vm576, 1, 0
        %v649 = vsel %vm577, 1, 0
        %vm650 = vcmp.eq.s32.totalorder %v632, 1
        %vm651 = vcmp.eq.s32.totalorder %v633, 1
        %vm652 = vcmp.eq.s32.totalorder %v634, 1
        %vm653 = vcmp.eq.s32.totalorder %v635, 1
        %vm654 = vcmp.eq.s32.totalorder %v636, 1
        %vm655 = vcmp.eq.s32.totalorder %v637, 1
        %vm656 = vcmp.eq.s32.totalorder %v638, 1
        %vm657 = vcmp.eq.s32.totalorder %v639, 1
        %vm658 = vcmp.eq.s32.totalorder %v640, 1
        %vm659 = vcmp.eq.s32.totalorder %v641, 1
        %vm660 = vcmp.eq.s32.totalorder %v642, 1
        %vm661 = vcmp.eq.s32.totalorder %v643, 1
        %vm662 = vcmp.eq.s32.totalorder %v644, 1
        %vm663 = vcmp.eq.s32.totalorder %v645, 1
        %vm664 = vcmp.eq.s32.totalorder %v646, 1
        %vm665 = vcmp.eq.s32.totalorder %v647, 1
        %vm666 = vcmp.eq.s32.totalorder %v648, 1
        %vm667 = vcmp.eq.s32.totalorder %v649, 1
        %v668 = vsel %vm650, %v614, 0.0
        %v669 = vsel %vm651, %v615, 0.0
        %v670 = vsel %vm652, %v616, 0.0
        %v671 = vsel %vm653, %v617, 0.0
        %v672 = vsel %vm654, %v618, 0.0
        %v673 = vsel %vm655, %v619, 0.0
        %v674 = vsel %vm656, %v620, 0.0
        %v675 = vsel %vm657, %v621, 0.0
        %v676 = vsel %vm658, %v622, 0.0
        %v677 = vsel %vm659, %v623, 0.0
        %v678 = vsel %vm660, %v624, 0.0
        %v679 = vsel %vm661, %v625, 0.0
        %v680 = vsel %vm662, %v626, 0.0
        %v681 = vsel %vm663, %v627, 0.0
        %v682 = vsel %vm664, %v628, 0.0
        %v683 = vsel %vm665, %v629, 0.0
        %v684 = vsel %vm666, %v630, 0.0
        %v685 = vsel %vm667, %v631, 0.0
        %v686 = vpack.c.bf16 %v669, %v668
        %v687 = vpack.c.bf16 %v671, %v670
        %v688 = vpack.c.bf16 %v673, %v672
        %v689 = vpack.c.bf16 %v675, %v674
        %v690 = vpack.c.bf16 %v677, %v676
        %v691 = vpack.c.bf16 %v679, %v678
        %v692 = vpack.c.bf16 %v681, %v680
        %v693 = vpack.c.bf16 %v683, %v682
        %v694 = vpack.c.bf16 %v685, %v684
        %v695 = vld [vmem:[#allocation8] sm:$0xf]
        %v696 = vld [vmem:[#allocation8 + $0x4] sm:$0xf]
        %v697 = vld [vmem:[#allocation8 + $0x8] sm:$0xf]
        %v698 = vld [vmem:[#allocation8 + $0xc] sm:$0xf]
        %v699 = vld [vmem:[#allocation8 + $0x10] sm:$0xf]
        %v700 = vld [vmem:[#allocation8 + $0x14] sm:$0xf]
        %v701 = vld [vmem:[#allocation8 + $0x18] sm:$0xf]
        %v702 = vld [vmem:[#allocation8 + $0x1c] sm:$0xf]
        %v703 = vld [vmem:[#allocation8 + $0x20] sm:$0xf]
        %v704 = vld [vmem:[#allocation8 + $0x24] sm:$0xf]
        %v705 = vld [vmem:[#allocation8 + $0x28] sm:$0xf]
        %v706 = vld [vmem:[#allocation8 + $0x2c] sm:$0xf]
        %v707 = vld [vmem:[#allocation8 + $0x30] sm:$0xf]
        %v708 = vld [vmem:[#allocation8 + $0x34] sm:$0xf]
        %v709 = vld [vmem:[#allocation8 + $0x38] sm:$0xf]
        %v710 = vld [vmem:[#allocation8 + $0x3c] sm:$0xf]
        %s711 = scalar_lea.vmem [#allocation8], 64
        %v712 = vld [vmem:[%s711] sm:$0xf]
        %v713 = vld [vmem:[%s711 + $0x4] sm:$0xf]
        %v714 = vld [vmem:[%s711 + $0x8] sm:$0xf]
        %v715 = vld [vmem:[%s711 + $0xc] sm:$0xf]
        %v716 = vld [vmem:[%s711 + $0x10] sm:$0xf]
        %v717 = vld [vmem:[%s711 + $0x14] sm:$0xf]
        %v718 = vld [vmem:[%s711 + $0x18] sm:$0xf]
        %v719 = vld [vmem:[%s711 + $0x1c] sm:$0xf]
        %v720 = vld [vmem:[%s711 + $0x20] sm:$0xf]
        %v721 = vld [vmem:[%s711 + $0x24] sm:$0xf]
        %v722 = vld [vmem:[%s711 + $0x28] sm:$0xf]
        %v723 = vld [vmem:[%s711 + $0x2c] sm:$0xf]
        %v724 = vld [vmem:[%s711 + $0x30] sm:$0xf]
        %v725 = vld [vmem:[%s711 + $0x34] sm:$0xf]
        %v726 = vld [vmem:[%s711 + $0x38] sm:$0xf]
        %v727 = vld [vmem:[%s711 + $0x3c] sm:$0xf]
        %vm728 = vsmask.f32 4352
        %v730 = vshrl.u32 %v686, 16
        %v732 = vrot.slane %v730, 3
        %v733 = vshll.u32 %v686, 16
        %v735 = vrot.slane %v733, 4
        %v736 = vor.u32 %v732, %v735
        %v738 = vshrl.u32 %v687, 16
        %v740 = vrot.slane %v738, 3
        %v741 = vshll.u32 %v687, 16
        %v743 = vrot.slane %v741, 4
        %v744 = vor.u32 %v740, %v743
        %v745 = vsel %vm728, %v736, %v744
        %v747 = vshrl.u32 %v688, 16
        %v749 = vrot.slane %v747, 3
        %v750 = vshll.u32 %v688, 16
        %v752 = vrot.slane %v750, 4
        %v753 = vor.u32 %v749, %v752
        %v754 = vsel %vm728, %v744, %v753
        %v756 = vshrl.u32 %v689, 16
        %v758 = vrot.slane %v756, 3
        %v759 = vshll.u32 %v689, 16
        %v761 = vrot.slane %v759, 4
        %v762 = vor.u32 %v758, %v761
        %v763 = vsel %vm728, %v753, %v762
        %v765 = vshrl.u32 %v690, 16
        %v767 = vrot.slane %v765, 3
        %v768 = vshll.u32 %v690, 16
        %v770 = vrot.slane %v768, 4
        %v771 = vor.u32 %v767, %v770
        %v772 = vsel %vm728, %v762, %v771
        %v774 = vshrl.u32 %v691, 16
        %v776 = vrot.slane %v774, 3
        %v777 = vshll.u32 %v691, 16
        %v779 = vrot.slane %v777, 4
        %v780 = vor.u32 %v776, %v779
        %v781 = vsel %vm728, %v771, %v780
        %v783 = vshrl.u32 %v692, 16
        %v785 = vrot.slane %v783, 3
        %v786 = vshll.u32 %v692, 16
        %v788 = vrot.slane %v786, 4
        %v789 = vor.u32 %v785, %v788
        %v790 = vsel %vm728, %v780, %v789
        %v792 = vshrl.u32 %v693, 16
        %v794 = vrot.slane %v792, 3
        %v795 = vshll.u32 %v693, 16
        %v797 = vrot.slane %v795, 4
        %v798 = vor.u32 %v794, %v797
        %v799 = vsel %vm728, %v789, %v798
        %v801 = vshrl.u32 %v694, 16
        %v803 = vrot.slane %v801, 3
        %v804 = vshll.u32 %v694, 16
        %v806 = vrot.slane %v804, 4
        %v807 = vor.u32 %v803, %v806
        %v808 = vsel %vm728, %v798, %v807
        %v834 = vunpack.c.l.b16 %v712
        %v835 = vunpack.c.l.b16 %v713
        %v836 = vunpack.c.l.b16 %v714
        %v837 = vunpack.c.l.b16 %v715
        %v838 = vunpack.c.l.b16 %v716
        %v839 = vunpack.c.l.b16 %v717
        %v840 = vunpack.c.l.b16 %v718
        %v841 = vunpack.c.l.b16 %v719
        %v842 = vunpack.c.l.b16 %v720
        %v843 = vunpack.c.l.b16 %v721
        %v844 = vunpack.c.l.b16 %v722
        %v845 = vunpack.c.l.b16 %v723
        %v846 = vunpack.c.l.b16 %v724
        %v847 = vunpack.c.l.b16 %v725
        %v848 = vunpack.c.l.b16 %v726
        %v849 = vunpack.c.l.b16 %v727
        %v850 = vpack.c.b16 %v835, %v834
        %v851 = vpack.c.b16 %v837, %v836
        %v852 = vpack.c.b16 %v839, %v838
        %v853 = vpack.c.b16 %v841, %v840
        %v854 = vpack.c.b16 %v843, %v842
        %v855 = vpack.c.b16 %v845, %v844
        %v856 = vpack.c.b16 %v847, %v846
        %v857 = vpack.c.b16 %v849, %v848
        %866 = vmatprep.subr.bf16.mxu0 0
        %867 = vmatpush1.bf16.msra.mxu0 %v850
        %868 = vmatprep.subr.bf16.mxu0 0
        %869 = vmatpush1.bf16.msra.mxu0 %v851
        %870 = vmatprep.subr.bf16.mxu0 0
        %871 = vmatpush1.bf16.msra.mxu0 %v852
        %872 = vmatprep.subr.bf16.mxu0 0
        %873 = vmatpush1.bf16.msra.mxu0 %v853
        %874 = vmatprep.subr.bf16.mxu0 0
        %875 = vmatpush1.bf16.msra.mxu0 %v854
        %876 = vmatprep.subr.bf16.mxu0 0
        %877 = vmatpush1.bf16.msra.mxu0 %v855
        %878 = vmatprep.subr.bf16.mxu0 0
        %879 = vmatpush1.bf16.msra.mxu0 %v856
        %880 = vmatprep.subr.bf16.mxu0 0
        %881 = vmatpush1.bf16.msra.mxu0 %v857
        %882 = vmatprep.subr.bf16.mxu0 0
        %883 = vmatpush1.bf16.msra.mxu0 0
        %884 = vmatprep.subr.bf16.mxu0 0
        %885 = vmatpush1.bf16.msra.mxu0 0
        %886 = vmatprep.subr.bf16.mxu0 0
        %887 = vmatpush1.bf16.msra.mxu0 0
        %888 = vmatprep.subr.bf16.mxu0 0
        %889 = vmatpush1.bf16.msra.mxu0 0
        %890 = vmatprep.subr.bf16.mxu0 0
        %891 = vmatpush1.bf16.msra.mxu0 0
        %892 = vmatprep.subr.bf16.mxu0 0
        %893 = vmatpush1.bf16.msra.mxu0 0
        %894 = vmatprep.subr.bf16.mxu0 0
        %895 = vmatpush1.bf16.msra.mxu0 0
        %896 = vmatprep.subr.bf16.mxu0 0
        %897 = vmatpush1.bf16.msra.mxu0 0
        %898 = vmatprep.mubr.bf16.mxu0 0
        %899 = vmatmul.mubr.bf16.gmra.mrb[0].mxu0 %v745
        %v900 = vpop.f32.mrb[0].mxu0
        %v901 = vadd.f32 0.0, %v900
        %v902 = vpop.f32.mrb[0].mxu0
        %v903 = vpop.f32.mrb[0].mxu0
        %v904 = vadd.f32 0.0, %v903
        %v905 = vpop.f32.mrb[0].mxu0
        %906 = vmatprep.mubr.bf16.mxu0 0
        %907 = vmatmul.mubr.bf16.gmra.mrb[0].mxu0 %v754
        %v908 = vpop.f32.mrb[0].mxu0
        %v909 = vadd.f32 0.0, %v908
        %v910 = vpop.f32.mrb[0].mxu0
        %v911 = vpop.f32.mrb[0].mxu0
        %v912 = vadd.f32 0.0, %v911
        %v913 = vpop.f32.mrb[0].mxu0
        %914 = vmatprep.mubr.bf16.mxu0 0
        %915 = vmatmul.mubr.bf16.gmra.mrb[0].mxu0 %v763
        %v916 = vpop.f32.mrb[0].mxu0
        %v917 = vadd.f32 0.0, %v916
        %v918 = vpop.f32.mrb[0].mxu0
        %v919 = vpop.f32.mrb[0].mxu0
        %v920 = vadd.f32 0.0, %v919
        %v921 = vpop.f32.mrb[0].mxu0
        %922 = vmatprep.mubr.bf16.mxu0 0
        %923 = vmatmul.mubr.bf16.gmra.mrb[0].mxu0 %v772
        %v924 = vpop.f32.mrb[0].mxu0
        %v925 = vadd.f32 0.0, %v924
        %v926 = vpop.f32.mrb[0].mxu0
        %v927 = vpop.f32.mrb[0].mxu0
        %v928 = vadd.f32 0.0, %v927
        %v929 = vpop.f32.mrb[0].mxu0
        %930 = vmatprep.mubr.bf16.mxu0 0
        %931 = vmatmul.mubr.bf16.gmra.mrb[0].mxu0 %v781
        %v932 = vpop.f32.mrb[0].mxu0
        %v933 = vadd.f32 0.0, %v932
        %v934 = vpop.f32.mrb[0].mxu0
        %v935 = vpop.f32.mrb[0].mxu0
        %v936 = vadd.f32 0.0, %v935
        %v937 = vpop.f32.mrb[0].mxu0
        %938 = vmatprep.mubr.bf16.mxu0 0
        %939 = vmatmul.mubr.bf16.gmra.mrb[0].mxu0 %v790
        %v940 = vpop.f32.mrb[0].mxu0
        %v941 = vadd.f32 0.0, %v940
        %v942 = vpop.f32.mrb[0].mxu0
        %v943 = vpop.f32.mrb[0].mxu0
        %v944 = vadd.f32 0.0, %v943
        %v945 = vpop.f32.mrb[0].mxu0
        %946 = vmatprep.mubr.bf16.mxu0 0
        %947 = vmatmul.mubr.bf16.gmra.mrb[0].mxu0 %v799
        %v948 = vpop.f32.mrb[0].mxu0
        %v949 = vadd.f32 0.0, %v948
        %v950 = vpop.f32.mrb[0].mxu0
        %v951 = vpop.f32.mrb[0].mxu0
        %v952 = vadd.f32 0.0, %v951
        %v953 = vpop.f32.mrb[0].mxu0
        %954 = vmatprep.mubr.bf16.mxu0 0
        %955 = vmatmul.mubr.bf16.gmra.mrb[0].mxu0 %v808
        %v956 = vpop.f32.mrb[0].mxu0
        %v957 = vadd.f32 0.0, %v956
        %v958 = vpop.f32.mrb[0].mxu0
        %v959 = vpop.f32.mrb[0].mxu0
        %v960 = vadd.f32 0.0, %v959
        %v961 = vpop.f32.mrb[0].mxu0
        %962 = vmatprep.mubr.bf16.mxu0 0
        %963 = vmatmul.mubr.bf16.gmra.mrb[0].mxu0 %v807
        %v964 = vpop.f32.mrb[0].mxu0
        %v965 = vadd.f32 0.0, %v964
        %v966 = vpop.f32.mrb[0].mxu0
        %v967 = vpop.f32.mrb[0].mxu0
        %v968 = vpop.f32.mrb[0].mxu0
        %969 = vdwg.mxu0
        %vm979 = vcmask 1044480
        %v980 = vrot.slane %v686, 3
        %v981 = vrot.slane %v687, 3
        %v982 = vsel %vm979, %v980, %v981
        %v983 = vrot.slane %v688, 3
        %v984 = vsel %vm979, %v981, %v983
        %v985 = vrot.slane %v689, 3
        %v986 = vsel %vm979, %v983, %v985
        %v987 = vrot.slane %v690, 3
        %v988 = vsel %vm979, %v985, %v987
        %v989 = vrot.slane %v691, 3
        %v990 = vsel %vm979, %v987, %v989
        %v991 = vrot.slane %v692, 3
        %v992 = vsel %vm979, %v989, %v991
        %v993 = vrot.slane %v693, 3
        %v994 = vsel %vm979, %v991, %v993
        %v995 = vrot.slane %v694, 3
        %v996 = vsel %vm979, %v993, %v995
        %v1022 = vunpack.c.l.b16 %v695
        %v1023 = vunpack.c.l.b16 %v696
        %v1024 = vunpack.c.l.b16 %v697
        %v1025 = vunpack.c.l.b16 %v698
        %v1026 = vunpack.c.l.b16 %v699
        %v1027 = vunpack.c.l.b16 %v700
        %v1028 = vunpack.c.l.b16 %v701
        %v1029 = vunpack.c.l.b16 %v702
        %v1030 = vunpack.c.l.b16 %v703
        %v1031 = vunpack.c.l.b16 %v704
        %v1032 = vunpack.c.l.b16 %v705
        %v1033 = vunpack.c.l.b16 %v706
        %v1034 = vunpack.c.l.b16 %v707
        %v1035 = vunpack.c.l.b16 %v708
        %v1036 = vunpack.c.l.b16 %v709
        %v1037 = vunpack.c.l.b16 %v710
        %v1038 = vpack.c.b16 %v1023, %v1022
        %v1039 = vpack.c.b16 %v1025, %v1024
        %v1040 = vpack.c.b16 %v1027, %v1026
        %v1041 = vpack.c.b16 %v1029, %v1028
        %v1042 = vpack.c.b16 %v1031, %v1030
        %v1043 = vpack.c.b16 %v1033, %v1032
        %v1044 = vpack.c.b16 %v1035, %v1034
        %v1045 = vpack.c.b16 %v1037, %v1036
        %1054 = vmatprep.subr.bf16.mxu0 0
        %1055 = vmatpush1.bf16.msra.mxu0 %v1038
        %1056 = vmatprep.subr.bf16.mxu0 0
        %1057 = vmatpush1.bf16.msra.mxu0 %v1039
        %1058 = vmatprep.subr.bf16.mxu0 0
        %1059 = vmatpush1.bf16.msra.mxu0 %v1040
        %1060 = vmatprep.subr.bf16.mxu0 0
        %1061 = vmatpush1.bf16.msra.mxu0 %v1041
        %1062 = vmatprep.subr.bf16.mxu0 0
        %1063 = vmatpush1.bf16.msra.mxu0 %v1042
        %1064 = vmatprep.subr.bf16.mxu0 0
        %1065 = vmatpush1.bf16.msra.mxu0 %v1043
        %1066 = vmatprep.subr.bf16.mxu0 0
        %1067 = vmatpush1.bf16.msra.mxu0 %v1044
        %1068 = vmatprep.subr.bf16.mxu0 0
        %1069 = vmatpush1.bf16.msra.mxu0 %v1045
        %1070 = vmatprep.subr.bf16.mxu0 0
        %1071 = vmatpush1.bf16.msra.mxu0 0
        %1072 = vmatprep.subr.bf16.mxu0 0
        %1073 = vmatpush1.bf16.msra.mxu0 0
        %1074 = vmatprep.subr.bf16.mxu0 0
        %1075 = vmatpush1.bf16.msra.mxu0 0
        %1076 = vmatprep.subr.bf16.mxu0 0
        %1077 = vmatpush1.bf16.msra.mxu0 0
        %1078 = vmatprep.subr.bf16.mxu0 0
        %1079 = vmatpush1.bf16.msra.mxu0 0
        %1080 = vmatprep.subr.bf16.mxu0 0
        %1081 = vmatpush1.bf16.msra.mxu0 0
        %1082 = vmatprep.subr.bf16.mxu0 0
        %1083 = vmatpush1.bf16.msra.mxu0 0
        %1084 = vmatprep.subr.bf16.mxu0 0
        %1085 = vmatpush1.bf16.msra.mxu0 0
        %1086 = vmatprep.mubr.bf16.mxu0 0
        %1087 = vmatmul.mubr.bf16.gmra.mrb[0].mxu0 %v982
        %v1088 = vpop.f32.mrb[0].mxu0
        %v1089 = vadd.f32 %v901, %v1088
        %v1090 = vpop.f32.mrb[0].mxu0
        %v1091 = vpop.f32.mrb[0].mxu0
        %v1092 = vadd.f32 %v904, %v1091
        %v1093 = vpop.f32.mrb[0].mxu0
        %1094 = vmatprep.mubr.bf16.mxu0 0
        %1095 = vmatmul.mubr.bf16.gmra.mrb[0].mxu0 %v984
        %v1096 = vpop.f32.mrb[0].mxu0
        %v1097 = vadd.f32 %v909, %v1096
        %v1098 = vpop.f32.mrb[0].mxu0
        %v1099 = vpop.f32.mrb[0].mxu0
        %v1100 = vadd.f32 %v912, %v1099
        %v1101 = vpop.f32.mrb[0].mxu0
        %1102 = vmatprep.mubr.bf16.mxu0 0
        %1103 = vmatmul.mubr.bf16.gmra.mrb[0].mxu0 %v986
        %v1104 = vpop.f32.mrb[0].mxu0
        %v1105 = vadd.f32 %v917, %v1104
        %v1106 = vpop.f32.mrb[0].mxu0
        %v1107 = vpop.f32.mrb[0].mxu0
        %v1108 = vadd.f32 %v920, %v1107
        %v1109 = vpop.f32.mrb[0].mxu0
        %1110 = vmatprep.mubr.bf16.mxu0 0
        %1111 = vmatmul.mubr.bf16.gmra.mrb[0].mxu0 %v988
        %v1112 = vpop.f32.mrb[0].mxu0
        %v1113 = vadd.f32 %v925, %v1112
        %v1114 = vpop.f32.mrb[0].mxu0
        %v1115 = vpop.f32.mrb[0].mxu0
        %v1116 = vadd.f32 %v928, %v1115
        %v1117 = vpop.f32.mrb[0].mxu0
        %1118 = vmatprep.mubr.bf16.mxu0 0
        %1119 = vmatmul.mubr.bf16.gmra.mrb[0].mxu0 %v990
        %v1120 = vpop.f32.mrb[0].mxu0
        %v1121 = vadd.f32 %v933, %v1120
        %v1122 = vpop.f32.mrb[0].mxu0
        %v1123 = vpop.f32.mrb[0].mxu0
        %v1124 = vadd.f32 %v936, %v1123
        %v1125 = vpop.f32.mrb[0].mxu0
        %1126 = vmatprep.mubr.bf16.mxu0 0
        %1127 = vmatmul.mubr.bf16.gmra.mrb[0].mxu0 %v992
        %v1128 = vpop.f32.mrb[0].mxu0
        %v1129 = vadd.f32 %v941, %v1128
        %v1130 = vpop.f32.mrb[0].mxu0
        %v1131 = vpop.f32.mrb[0].mxu0
        %v1132 = vadd.f32 %v944, %v1131
        %v1133 = vpop.f32.mrb[0].mxu0
        %1134 = vmatprep.mubr.bf16.mxu0 0
        %1135 = vmatmul.mubr.bf16.gmra.mrb[0].mxu0 %v994
        %v1136 = vpop.f32.mrb[0].mxu0
        %v1137 = vadd.f32 %v949, %v1136
        %v1138 = vpop.f32.mrb[0].mxu0
        %v1139 = vpop.f32.mrb[0].mxu0
        %v1140 = vadd.f32 %v952, %v1139
        %v1141 = vpop.f32.mrb[0].mxu0
        %1142 = vmatprep.mubr.bf16.mxu0 0
        %1143 = vmatmul.mubr.bf16.gmra.mrb[0].mxu0 %v996
        %v1144 = vpop.f32.mrb[0].mxu0
        %v1145 = vadd.f32 %v957, %v1144
        %v1146 = vpop.f32.mrb[0].mxu0
        %v1147 = vpop.f32.mrb[0].mxu0
        %v1148 = vadd.f32 %v960, %v1147
        %v1149 = vpop.f32.mrb[0].mxu0
        %1150 = vmatprep.mubr.bf16.mxu0 0
        %1151 = vmatmul.mubr.bf16.gmra.mrb[0].mxu0 %v995
        %v1152 = vpop.f32.mrb[0].mxu0
        %v1153 = vadd.f32 %v965, %v1152
        %v1154 = vpop.f32.mrb[0].mxu0
        %v1155 = vpop.f32.mrb[0].mxu0
        %v1156 = vpop.f32.mrb[0].mxu0
        %1157 = vdwg.mxu0
        %s1158 = scalar_lea.vmem [#allocation8], 128
        %v1159 = vld [vmem:[%s1158] sm:$0xf]
        %v1160 = vld [vmem:[%s1158 + $0x4] sm:$0xf]
        %v1161 = vld [vmem:[%s1158 + $0x8] sm:$0xf]
        %v1162 = vld [vmem:[%s1158 + $0xc] sm:$0xf]
        %v1163 = vld [vmem:[%s1158 + $0x10] sm:$0xf]
        %v1164 = vld [vmem:[%s1158 + $0x14] sm:$0xf]
        %v1165 = vld [vmem:[%s1158 + $0x18] sm:$0xf]
        %v1166 = vld [vmem:[%s1158 + $0x1c] sm:$0xf]
        %v1167 = vld [vmem:[%s1158 + $0x20] sm:$0xf]
        %v1168 = vld [vmem:[%s1158 + $0x24] sm:$0xf]
        %v1169 = vld [vmem:[%s1158 + $0x28] sm:$0xf]
        %v1170 = vld [vmem:[%s1158 + $0x2c] sm:$0xf]
        %v1171 = vld [vmem:[%s1158 + $0x30] sm:$0xf]
        %v1172 = vld [vmem:[%s1158 + $0x34] sm:$0xf]
        %v1173 = vld [vmem:[%s1158 + $0x38] sm:$0xf]
        %v1174 = vld [vmem:[%s1158 + $0x3c] sm:$0xf]
        %vm1175 = vcmask 1043456
        %v1176 = vrot.slane %v686, 4
        %v1177 = vrot.slane %v687, 4
        %v1178 = vsel %vm1175, %v1176, %v1177
        %v1179 = vrot.slane %v688, 4
        %v1180 = vsel %vm1175, %v1177, %v1179
        %v1181 = vrot.slane %v689, 4
        %v1182 = vsel %vm1175, %v1179, %v1181
        %v1183 = vrot.slane %v690, 4
        %v1184 = vsel %vm1175, %v1181, %v1183
        %v1185 = vrot.slane %v691, 4
        %v1186 = vsel %vm1175, %v1183, %v1185
        %v1187 = vrot.slane %v692, 4
        %v1188 = vsel %vm1175, %v1185, %v1187
        %v1189 = vrot.slane %v693, 4
        %v1190 = vsel %vm1175, %v1187, %v1189
        %v1191 = vrot.slane %v694, 4
        %v1192 = vsel %vm1175, %v1189, %v1191
        %v1218 = vunpack.c.l.b16 %v1159
        %v1219 = vunpack.c.l.b16 %v1160
        %v1220 = vunpack.c.l.b16 %v1161
        %v1221 = vunpack.c.l.b16 %v1162
        %v1222 = vunpack.c.l.b16 %v1163
        %v1223 = vunpack.c.l.b16 %v1164
        %v1224 = vunpack.c.l.b16 %v1165
        %v1225 = vunpack.c.l.b16 %v1166
        %v1226 = vunpack.c.l.b16 %v1167
        %v1227 = vunpack.c.l.b16 %v1168
        %v1228 = vunpack.c.l.b16 %v1169
        %v1229 = vunpack.c.l.b16 %v1170
        %v1230 = vunpack.c.l.b16 %v1171
        %v1231 = vunpack.c.l.b16 %v1172
        %v1232 = vunpack.c.l.b16 %v1173
        %v1233 = vunpack.c.l.b16 %v1174
        %v1234 = vpack.c.b16 %v1219, %v1218
        %v1235 = vpack.c.b16 %v1221, %v1220
        %v1236 = vpack.c.b16 %v1223, %v1222
        %v1237 = vpack.c.b16 %v1225, %v1224
        %v1238 = vpack.c.b16 %v1227, %v1226
        %v1239 = vpack.c.b16 %v1229, %v1228
        %v1240 = vpack.c.b16 %v1231, %v1230
        %v1241 = vpack.c.b16 %v1233, %v1232
        %1250 = vmatprep.subr.bf16.mxu0 0
        %1251 = vmatpush1.bf16.msra.mxu0 %v1234
        %1252 = vmatprep.subr.bf16.mxu0 0
        %1253 = vmatpush1.bf16.msra.mxu0 %v1235
        %1254 = vmatprep.subr.bf16.mxu0 0
        %1255 = vmatpush1.bf16.msra.mxu0 %v1236
        %1256 = vmatprep.subr.bf16.mxu0 0
        %1257 = vmatpush1.bf16.msra.mxu0 %v1237
        %1258 = vmatprep.subr.bf16.mxu0 0
        %1259 = vmatpush1.bf16.msra.mxu0 %v1238
        %1260 = vmatprep.subr.bf16.mxu0 0
        %1261 = vmatpush1.bf16.msra.mxu0 %v1239
        %1262 = vmatprep.subr.bf16.mxu0 0
        %1263 = vmatpush1.bf16.msra.mxu0 %v1240
        %1264 = vmatprep.subr.bf16.mxu0 0
        %1265 = vmatpush1.bf16.msra.mxu0 %v1241
        %1266 = vmatprep.subr.bf16.mxu0 0
        %1267 = vmatpush1.bf16.msra.mxu0 0
        %1268 = vmatprep.subr.bf16.mxu0 0
        %1269 = vmatpush1.bf16.msra.mxu0 0
        %1270 = vmatprep.subr.bf16.mxu0 0
        %1271 = vmatpush1.bf16.msra.mxu0 0
        %1272 = vmatprep.subr.bf16.mxu0 0
        %1273 = vmatpush1.bf16.msra.mxu0 0
        %1274 = vmatprep.subr.bf16.mxu0 0
        %1275 = vmatpush1.bf16.msra.mxu0 0
        %1276 = vmatprep.subr.bf16.mxu0 0
        %1277 = vmatpush1.bf16.msra.mxu0 0
        %1278 = vmatprep.subr.bf16.mxu0 0
        %1279 = vmatpush1.bf16.msra.mxu0 0
        %1280 = vmatprep.subr.bf16.mxu0 0
        %1281 = vmatpush1.bf16.msra.mxu0 0
        %1282 = vmatprep.mubr.bf16.mxu0 0
        %1283 = vmatmul.mubr.bf16.gmra.mrb[0].mxu0 %v1178
        %v1284 = vpop.f32.mrb[0].mxu0
        %v1285 = vadd.f32 0.0, %v1284
        %v1286 = vpop.f32.mrb[0].mxu0
        %v1287 = vpop.f32.mrb[0].mxu0
        %v1288 = vadd.f32 0.0, %v1287
        %v1289 = vpop.f32.mrb[0].mxu0
        %1290 = vmatprep.mubr.bf16.mxu0 0
        %1291 = vmatmul.mubr.bf16.gmra.mrb[0].mxu0 %v1180
        %v1292 = vpop.f32.mrb[0].mxu0
        %v1293 = vadd.f32 0.0, %v1292
        %v1294 = vpop.f32.mrb[0].mxu0
        %v1295 = vpop.f32.mrb[0].mxu0
        %v1296 = vadd.f32 0.0, %v1295
        %v1297 = vpop.f32.mrb[0].mxu0
        %1298 = vmatprep.mubr.bf16.mxu0 0
        %1299 = vmatmul.mubr.bf16.gmra.mrb[0].mxu0 %v1182
        %v1300 = vpop.f32.mrb[0].mxu0
        %v1301 = vadd.f32 0.0, %v1300
        %v1302 = vpop.f32.mrb[0].mxu0
        %v1303 = vpop.f32.mrb[0].mxu0
        %v1304 = vadd.f32 0.0, %v1303
        %v1305 = vpop.f32.mrb[0].mxu0
        %1306 = vmatprep.mubr.bf16.mxu0 0
        %1307 = vmatmul.mubr.bf16.gmra.mrb[0].mxu0 %v1184
        %v1308 = vpop.f32.mrb[0].mxu0
        %v1309 = vadd.f32 0.0, %v1308
        %v1310 = vpop.f32.mrb[0].mxu0
        %v1311 = vpop.f32.mrb[0].mxu0
        %v1312 = vadd.f32 0.0, %v1311
        %v1313 = vpop.f32.mrb[0].mxu0
        %1314 = vmatprep.mubr.bf16.mxu0 0
        %1315 = vmatmul.mubr.bf16.gmra.mrb[0].mxu0 %v1186
        %v1316 = vpop.f32.mrb[0].mxu0
        %v1317 = vadd.f32 0.0, %v1316
        %v1318 = vpop.f32.mrb[0].mxu0
        %v1319 = vpop.f32.mrb[0].mxu0
        %v1320 = vadd.f32 0.0, %v1319
        %v1321 = vpop.f32.mrb[0].mxu0
        %1322 = vmatprep.mubr.bf16.mxu0 0
        %1323 = vmatmul.mubr.bf16.gmra.mrb[0].mxu0 %v1188
        %v1324 = vpop.f32.mrb[0].mxu0
        %v1325 = vadd.f32 0.0, %v1324
        %v1326 = vpop.f32.mrb[0].mxu0
        %v1327 = vpop.f32.mrb[0].mxu0
        %v1328 = vadd.f32 0.0, %v1327
        %v1329 = vpop.f32.mrb[0].mxu0
        %1330 = vmatprep.mubr.bf16.mxu0 0
        %1331 = vmatmul.mubr.bf16.gmra.mrb[0].mxu0 %v1190
        %v1332 = vpop.f32.mrb[0].mxu0
        %v1333 = vadd.f32 0.0, %v1332
        %v1334 = vpop.f32.mrb[0].mxu0
        %v1335 = vpop.f32.mrb[0].mxu0
        %v1336 = vadd.f32 0.0, %v1335
        %v1337 = vpop.f32.mrb[0].mxu0
        %1338 = vmatprep.mubr.bf16.mxu0 0
        %1339 = vmatmul.mubr.bf16.gmra.mrb[0].mxu0 %v1192
        %v1340 = vpop.f32.mrb[0].mxu0
        %v1341 = vadd.f32 0.0, %v1340
        %v1342 = vpop.f32.mrb[0].mxu0
        %v1343 = vpop.f32.mrb[0].mxu0
        %v1344 = vadd.f32 0.0, %v1343
        %v1345 = vpop.f32.mrb[0].mxu0
        %1346 = vmatprep.mubr.bf16.mxu0 0
        %1347 = vmatmul.mubr.bf16.gmra.mrb[0].mxu0 %v1191
        %v1348 = vpop.f32.mrb[0].mxu0
        %v1349 = vadd.f32 0.0, %v1348
        %v1350 = vpop.f32.mrb[0].mxu0
        %v1351 = vpop.f32.mrb[0].mxu0
        %v1352 = vpop.f32.mrb[0].mxu0
        %1353 = vdwg.mxu0
        %v1354 = vadd.f32 %v1089, %v1285
        %v1355 = vadd.f32 %v1092, %v1288
        %v1356 = vadd.f32 %v1097, %v1293
        %v1357 = vadd.f32 %v1100, %v1296
        %v1358 = vadd.f32 %v1105, %v1301
        %v1359 = vadd.f32 %v1108, %v1304
        %v1360 = vadd.f32 %v1113, %v1309
        %v1361 = vadd.f32 %v1116, %v1312
        %v1362 = vadd.f32 %v1121, %v1317
        %v1363 = vadd.f32 %v1124, %v1320
        %v1364 = vadd.f32 %v1129, %v1325
        %v1365 = vadd.f32 %v1132, %v1328
        %v1366 = vadd.f32 %v1137, %v1333
        %v1367 = vadd.f32 %v1140, %v1336
        %v1368 = vadd.f32 %v1145, %v1341
        %v1369 = vadd.f32 %v1148, %v1344
        %v1370 = vadd.f32 %v1153, %v1349
        %v1371 = vld [vmem:[%s4] sm:$0x1]
        %v1373 = vlaneseq
        %v1374 = vshrl.u32 %v1373, 7
        %v1375 = vsub.s32 0, %v1374
        %v1376 = vrot.slane %v1371, %v1375
        %v1378 = vadd.f32 %v1354, %v1376
        %v1379 = vadd.f32 %v1355, %v1376
        %v1380 = vadd.f32 %v1356, %v1376
        %v1381 = vadd.f32 %v1357, %v1376
        %v1382 = vadd.f32 %v1358, %v1376
        %v1383 = vadd.f32 %v1359, %v1376
        %v1384 = vadd.f32 %v1360, %v1376
        %v1385 = vadd.f32 %v1361, %v1376
        %v1386 = vadd.f32 %v1362, %v1376
        %v1387 = vadd.f32 %v1363, %v1376
        %v1388 = vadd.f32 %v1364, %v1376
        %v1389 = vadd.f32 %v1365, %v1376
        %v1390 = vadd.f32 %v1366, %v1376
        %v1391 = vadd.f32 %v1367, %v1376
        %v1392 = vadd.f32 %v1368, %v1376
        %v1393 = vadd.f32 %v1369, %v1376
        %v1394 = vadd.f32 %v1370, %v1376
        %vm1395 = vcmp.ge.f32.partialorder %v1378, 0.0
        %vm1396 = vcmp.ge.f32.partialorder %v1379, 0.0
        %vm1397 = vcmp.ge.f32.partialorder %v1380, 0.0
        %vm1398 = vcmp.ge.f32.partialorder %v1381, 0.0
        %vm1399 = vcmp.ge.f32.partialorder %v1382, 0.0
        %vm1400 = vcmp.ge.f32.partialorder %v1383, 0.0
        %vm1401 = vcmp.ge.f32.partialorder %v1384, 0.0
        %vm1402 = vcmp.ge.f32.partialorder %v1385, 0.0
        %vm1403 = vcmp.ge.f32.partialorder %v1386, 0.0
        %vm1404 = vcmp.ge.f32.partialorder %v1387, 0.0
        %vm1405 = vcmp.ge.f32.partialorder %v1388, 0.0
        %vm1406 = vcmp.ge.f32.partialorder %v1389, 0.0
        %vm1407 = vcmp.ge.f32.partialorder %v1390, 0.0
        %vm1408 = vcmp.ge.f32.partialorder %v1391, 0.0
        %vm1409 = vcmp.ge.f32.partialorder %v1392, 0.0
        %vm1410 = vcmp.ge.f32.partialorder %v1393, 0.0
        %vm1411 = vcmp.ge.f32.partialorder %v1394, 0.0
        %v1412 = vmul.f32 %v1378, 0.1
        %v1413 = vmul.f32 %v1379, 0.1
        %v1414 = vmul.f32 %v1380, 0.1
        %v1415 = vmul.f32 %v1381, 0.1
        %v1416 = vmul.f32 %v1382, 0.1
        %v1417 = vmul.f32 %v1383, 0.1
        %v1418 = vmul.f32 %v1384, 0.1
        %v1419 = vmul.f32 %v1385, 0.1
        %v1420 = vmul.f32 %v1386, 0.1
        %v1421 = vmul.f32 %v1387, 0.1
        %v1422 = vmul.f32 %v1388, 0.1
        %v1423 = vmul.f32 %v1389, 0.1
        %v1424 = vmul.f32 %v1390, 0.1
        %v1425 = vmul.f32 %v1391, 0.1
        %v1426 = vmul.f32 %v1392, 0.1
        %v1427 = vmul.f32 %v1393, 0.1
        %v1428 = vmul.f32 %v1394, 0.1
        %v1429 = vsel %vm1395, %v1378, %v1412
        %v1430 = vsel %vm1396, %v1379, %v1413
        %v1431 = vsel %vm1397, %v1380, %v1414
        %v1432 = vsel %vm1398, %v1381, %v1415
        %v1433 = vsel %vm1399, %v1382, %v1416
        %v1434 = vsel %vm1400, %v1383, %v1417
        %v1435 = vsel %vm1401, %v1384, %v1418
        %v1436 = vsel %vm1402, %v1385, %v1419
        %v1437 = vsel %vm1403, %v1386, %v1420
        %v1438 = vsel %vm1404, %v1387, %v1421
        %v1439 = vsel %vm1405, %v1388, %v1422
        %v1440 = vsel %vm1406, %v1389, %v1423
        %v1441 = vsel %vm1407, %v1390, %v1424
        %v1442 = vsel %vm1408, %v1391, %v1425
        %v1443 = vsel %vm1409, %v1392, %v1426
        %v1444 = vsel %vm1410, %v1393, %v1427
        %v1445 = vsel %vm1411, %v1394, %v1428
        %vm1463 = vcmask 1046528
        %v1464 = vrot.slane %v1429, 1
        %v1465 = vrot.slane %v1430, 1
        %v1466 = vsel %vm1463, %v1464, %v1465
        %v1467 = vrot.slane %v1431, 1
        %v1468 = vsel %vm1463, %v1465, %v1467
        %v1469 = vrot.slane %v1432, 1
        %v1470 = vsel %vm1463, %v1467, %v1469
        %v1471 = vrot.slane %v1433, 1
        %v1472 = vsel %vm1463, %v1469, %v1471
        %v1473 = vrot.slane %v1434, 1
        %v1474 = vsel %vm1463, %v1471, %v1473
        %v1475 = vrot.slane %v1435, 1
        %v1476 = vsel %vm1463, %v1473, %v1475
        %v1477 = vrot.slane %v1436, 1
        %v1478 = vsel %vm1463, %v1475, %v1477
        %v1479 = vrot.slane %v1437, 1
        %v1480 = vsel %vm1463, %v1477, %v1479
        %v1481 = vrot.slane %v1438, 1
        %v1482 = vsel %vm1463, %v1479, %v1481
        %v1483 = vrot.slane %v1439, 1
        %v1484 = vsel %vm1463, %v1481, %v1483
        %v1485 = vrot.slane %v1440, 1
        %v1486 = vsel %vm1463, %v1483, %v1485
        %v1487 = vrot.slane %v1441, 1
        %v1488 = vsel %vm1463, %v1485, %v1487
        %v1489 = vrot.slane %v1442, 1
        %v1490 = vsel %vm1463, %v1487, %v1489
        %v1491 = vrot.slane %v1443, 1
        %v1492 = vsel %vm1463, %v1489, %v1491
        %v1493 = vrot.slane %v1444, 1
        %v1494 = vsel %vm1463, %v1491, %v1493
        %v1495 = vrot.slane %v1445, 1
        %v1496 = vsel %vm1463, %v1493, %v1495
        %v1515 = vsel %vm650, %v1464, 0.0
        %v1516 = vsel %vm651, %v1466, 0.0
        %v1517 = vsel %vm652, %v1468, 0.0
        %v1518 = vsel %vm653, %v1470, 0.0
        %v1519 = vsel %vm654, %v1472, 0.0
        %v1520 = vsel %vm655, %v1474, 0.0
        %v1521 = vsel %vm656, %v1476, 0.0
        %v1522 = vsel %vm657, %v1478, 0.0
        %v1523 = vsel %vm658, %v1480, 0.0
        %v1524 = vsel %vm659, %v1482, 0.0
        %v1525 = vsel %vm660, %v1484, 0.0
        %v1526 = vsel %vm661, %v1486, 0.0
        %v1527 = vsel %vm662, %v1488, 0.0
        %v1528 = vsel %vm663, %v1490, 0.0
        %v1529 = vsel %vm664, %v1492, 0.0
        %v1530 = vsel %vm665, %v1494, 0.0
        %v1531 = vsel %vm666, %v1496, 0.0
        %v1532 = vsel %vm667, %v1495, 0.0
        %v1533 = vpack.c.bf16 %v1516, %v1515
        %v1534 = vpack.c.bf16 %v1518, %v1517
        %v1535 = vpack.c.bf16 %v1520, %v1519
        %v1536 = vpack.c.bf16 %v1522, %v1521
        %v1537 = vpack.c.bf16 %v1524, %v1523
        %v1538 = vpack.c.bf16 %v1526, %v1525
        %v1539 = vpack.c.bf16 %v1528, %v1527
        %v1540 = vpack.c.bf16 %v1530, %v1529
        %v1541 = vpack.c.bf16 %v1532, %v1531
        %v1542 = vld [vmem:[#allocation10] sm:$0xf]
        %v1543 = vld [vmem:[#allocation10 + $0x4] sm:$0xf]
        %v1544 = vld [vmem:[#allocation10 + $0x8] sm:$0xf]
        %v1545 = vld [vmem:[#allocation10 + $0xc] sm:$0xf]
        %v1546 = vld [vmem:[#allocation10 + $0x10] sm:$0xf]
        %v1547 = vld [vmem:[#allocation10 + $0x14] sm:$0xf]
        %v1548 = vld [vmem:[#allocation10 + $0x18] sm:$0xf]
        %v1549 = vld [vmem:[#allocation10 + $0x1c] sm:$0xf]
        %v1550 = vld [vmem:[#allocation10 + $0x20] sm:$0xf]
        %v1551 = vld [vmem:[#allocation10 + $0x24] sm:$0xf]
        %v1552 = vld [vmem:[#allocation10 + $0x28] sm:$0xf]
        %v1553 = vld [vmem:[#allocation10 + $0x2c] sm:$0xf]
        %v1554 = vld [vmem:[#allocation10 + $0x30] sm:$0xf]
        %v1555 = vld [vmem:[#allocation10 + $0x34] sm:$0xf]
        %v1556 = vld [vmem:[#allocation10 + $0x38] sm:$0xf]
        %v1557 = vld [vmem:[#allocation10 + $0x3c] sm:$0xf]
        %s1558 = scalar_lea.vmem [#allocation10], 64
        %v1559 = vld [vmem:[%s1558] sm:$0xf]
        %v1560 = vld [vmem:[%s1558 + $0x4] sm:$0xf]
        %v1561 = vld [vmem:[%s1558 + $0x8] sm:$0xf]
        %v1562 = vld [vmem:[%s1558 + $0xc] sm:$0xf]
        %v1563 = vld [vmem:[%s1558 + $0x10] sm:$0xf]
        %v1564 = vld [vmem:[%s1558 + $0x14] sm:$0xf]
        %v1565 = vld [vmem:[%s1558 + $0x18] sm:$0xf]
        %v1566 = vld [vmem:[%s1558 + $0x1c] sm:$0xf]
        %v1567 = vld [vmem:[%s1558 + $0x20] sm:$0xf]
        %v1568 = vld [vmem:[%s1558 + $0x24] sm:$0xf]
        %v1569 = vld [vmem:[%s1558 + $0x28] sm:$0xf]
        %v1570 = vld [vmem:[%s1558 + $0x2c] sm:$0xf]
        %v1571 = vld [vmem:[%s1558 + $0x30] sm:$0xf]
        %v1572 = vld [vmem:[%s1558 + $0x34] sm:$0xf]
        %v1573 = vld [vmem:[%s1558 + $0x38] sm:$0xf]
        %v1574 = vld [vmem:[%s1558 + $0x3c] sm:$0xf]
        %v1584 = vrot.slane %v1533, 4
        %v1585 = vrot.slane %v1534, 4
        %v1586 = vsel %vm1175, %v1584, %v1585
        %v1587 = vrot.slane %v1535, 4
        %v1588 = vsel %vm1175, %v1585, %v1587
        %v1589 = vrot.slane %v1536, 4
        %v1590 = vsel %vm1175, %v1587, %v1589
        %v1591 = vrot.slane %v1537, 4
        %v1592 = vsel %vm1175, %v1589, %v1591
        %v1593 = vrot.slane %v1538, 4
        %v1594 = vsel %vm1175, %v1591, %v1593
        %v1595 = vrot.slane %v1539, 4
        %v1596 = vsel %vm1175, %v1593, %v1595
        %v1597 = vrot.slane %v1540, 4
        %v1598 = vsel %vm1175, %v1595, %v1597
        %v1599 = vrot.slane %v1541, 4
        %v1600 = vsel %vm1175, %v1597, %v1599
        %v1625 = vunpack.c.l.b16 %v1559
        %v1626 = vunpack.c.l.b16 %v1560
        %v1627 = vunpack.c.l.b16 %v1561
        %v1628 = vunpack.c.l.b16 %v1562
        %v1629 = vunpack.c.l.b16 %v1563
        %v1630 = vunpack.c.l.b16 %v1564
        %v1631 = vunpack.c.l.b16 %v1565
        %v1632 = vunpack.c.l.b16 %v1566
        %v1633 = vunpack.c.l.b16 %v1567
        %v1634 = vunpack.c.l.b16 %v1568
        %v1635 = vunpack.c.l.b16 %v1569
        %v1636 = vunpack.c.l.b16 %v1570
        %v1637 = vunpack.c.l.b16 %v1571
        %v1638 = vunpack.c.l.b16 %v1572
        %v1639 = vunpack.c.l.b16 %v1573
        %v1640 = vunpack.c.l.b16 %v1574
        %v1641 = vpack.c.b16 %v1626, %v1625
        %v1642 = vpack.c.b16 %v1628, %v1627
        %v1643 = vpack.c.b16 %v1630, %v1629
        %v1644 = vpack.c.b16 %v1632, %v1631
        %v1645 = vpack.c.b16 %v1634, %v1633
        %v1646 = vpack.c.b16 %v1636, %v1635
        %v1647 = vpack.c.b16 %v1638, %v1637
        %v1648 = vpack.c.b16 %v1640, %v1639
        %1657 = vmatprep.subr.bf16.mxu0 0
        %1658 = vmatpush1.bf16.msra.mxu0 %v1641
        %1659 = vmatprep.subr.bf16.mxu0 0
        %1660 = vmatpush1.bf16.msra.mxu0 %v1642
        %1661 = vmatprep.subr.bf16.mxu0 0
        %1662 = vmatpush1.bf16.msra.mxu0 %v1643
        %1663 = vmatprep.subr.bf16.mxu0 0
        %1664 = vmatpush1.bf16.msra.mxu0 %v1644
        %1665 = vmatprep.subr.bf16.mxu0 0
        %1666 = vmatpush1.bf16.msra.mxu0 %v1645
        %1667 = vmatprep.subr.bf16.mxu0 0
        %1668 = vmatpush1.bf16.msra.mxu0 %v1646
        %1669 = vmatprep.subr.bf16.mxu0 0
        %1670 = vmatpush1.bf16.msra.mxu0 %v1647
        %1671 = vmatprep.subr.bf16.mxu0 0
        %1672 = vmatpush1.bf16.msra.mxu0 %v1648
        %1673 = vmatprep.subr.bf16.mxu0 0
        %1674 = vmatpush1.bf16.msra.mxu0 0
        %1675 = vmatprep.subr.bf16.mxu0 0
        %1676 = vmatpush1.bf16.msra.mxu0 0
        %1677 = vmatprep.subr.bf16.mxu0 0
        %1678 = vmatpush1.bf16.msra.mxu0 0
        %1679 = vmatprep.subr.bf16.mxu0 0
        %1680 = vmatpush1.bf16.msra.mxu0 0
        %1681 = vmatprep.subr.bf16.mxu0 0
        %1682 = vmatpush1.bf16.msra.mxu0 0
        %1683 = vmatprep.subr.bf16.mxu0 0
        %1684 = vmatpush1.bf16.msra.mxu0 0
        %1685 = vmatprep.subr.bf16.mxu0 0
        %1686 = vmatpush1.bf16.msra.mxu0 0
        %1687 = vmatprep.subr.bf16.mxu0 0
        %1688 = vmatpush1.bf16.msra.mxu0 0
        %1689 = vmatprep.mubr.bf16.mxu0 0
        %1690 = vmatmul.mubr.bf16.gmra.mrb[0].mxu0 %v1586
        %v1691 = vpop.f32.mrb[0].mxu0
        %v1692 = vadd.f32 0.0, %v1691
        %v1693 = vpop.f32.mrb[0].mxu0
        %v1694 = vpop.f32.mrb[0].mxu0
        %v1695 = vadd.f32 0.0, %v1694
        %v1696 = vpop.f32.mrb[0].mxu0
        %1697 = vmatprep.mubr.bf16.mxu0 0
        %1698 = vmatmul.mubr.bf16.gmra.mrb[0].mxu0 %v1588
        %v1699 = vpop.f32.mrb[0].mxu0
        %v1700 = vadd.f32 0.0, %v1699
        %v1701 = vpop.f32.mrb[0].mxu0
        %v1702 = vpop.f32.mrb[0].mxu0
        %v1703 = vadd.f32 0.0, %v1702
        %v1704 = vpop.f32.mrb[0].mxu0
        %1705 = vmatprep.mubr.bf16.mxu0 0
        %1706 = vmatmul.mubr.bf16.gmra.mrb[0].mxu0 %v1590
        %v1707 = vpop.f32.mrb[0].mxu0
        %v1708 = vadd.f32 0.0, %v1707
        %v1709 = vpop.f32.mrb[0].mxu0
        %v1710 = vpop.f32.mrb[0].mxu0
        %v1711 = vadd.f32 0.0, %v1710
        %v1712 = vpop.f32.mrb[0].mxu0
        %1713 = vmatprep.mubr.bf16.mxu0 0
        %1714 = vmatmul.mubr.bf16.gmra.mrb[0].mxu0 %v1592
        %v1715 = vpop.f32.mrb[0].mxu0
        %v1716 = vadd.f32 0.0, %v1715
        %v1717 = vpop.f32.mrb[0].mxu0
        %v1718 = vpop.f32.mrb[0].mxu0
        %v1719 = vadd.f32 0.0, %v1718
        %v1720 = vpop.f32.mrb[0].mxu0
        %1721 = vmatprep.mubr.bf16.mxu0 0
        %1722 = vmatmul.mubr.bf16.gmra.mrb[0].mxu0 %v1594
        %v1723 = vpop.f32.mrb[0].mxu0
        %v1724 = vadd.f32 0.0, %v1723
        %v1725 = vpop.f32.mrb[0].mxu0
        %v1726 = vpop.f32.mrb[0].mxu0
        %v1727 = vadd.f32 0.0, %v1726
        %v1728 = vpop.f32.mrb[0].mxu0
        %1729 = vmatprep.mubr.bf16.mxu0 0
        %1730 = vmatmul.mubr.bf16.gmra.mrb[0].mxu0 %v1596
        %v1731 = vpop.f32.mrb[0].mxu0
        %v1732 = vadd.f32 0.0, %v1731
        %v1733 = vpop.f32.mrb[0].mxu0
        %v1734 = vpop.f32.mrb[0].mxu0
        %v1735 = vadd.f32 0.0, %v1734
        %v1736 = vpop.f32.mrb[0].mxu0
        %1737 = vmatprep.mubr.bf16.mxu0 0
        %1738 = vmatmul.mubr.bf16.gmra.mrb[0].mxu0 %v1598
        %v1739 = vpop.f32.mrb[0].mxu0
        %v1740 = vadd.f32 0.0, %v1739
        %v1741 = vpop.f32.mrb[0].mxu0
        %v1742 = vpop.f32.mrb[0].mxu0
        %v1743 = vadd.f32 0.0, %v1742
        %v1744 = vpop.f32.mrb[0].mxu0
        %1745 = vmatprep.mubr.bf16.mxu0 0
        %1746 = vmatmul.mubr.bf16.gmra.mrb[0].mxu0 %v1600
        %v1747 = vpop.f32.mrb[0].mxu0
        %v1748 = vadd.f32 0.0, %v1747
        %v1749 = vpop.f32.mrb[0].mxu0
        %v1750 = vpop.f32.mrb[0].mxu0
        %v1751 = vadd.f32 0.0, %v1750
        %v1752 = vpop.f32.mrb[0].mxu0
        %1753 = vdwg.mxu0
        %v1755 = vshrl.u32 %v1533, 16
        %v1757 = vrot.slane %v1755, 3
        %v1758 = vshll.u32 %v1533, 16
        %v1760 = vrot.slane %v1758, 4
        %v1761 = vor.u32 %v1757, %v1760
        %v1763 = vshrl.u32 %v1534, 16
        %v1765 = vrot.slane %v1763, 3
        %v1766 = vshll.u32 %v1534, 16
        %v1768 = vrot.slane %v1766, 4
        %v1769 = vor.u32 %v1765, %v1768
        %v1770 = vsel %vm728, %v1761, %v1769
        %v1772 = vshrl.u32 %v1535, 16
        %v1774 = vrot.slane %v1772, 3
        %v1775 = vshll.u32 %v1535, 16
        %v1777 = vrot.slane %v1775, 4
        %v1778 = vor.u32 %v1774, %v1777
        %v1779 = vsel %vm728, %v1769, %v1778
        %v1781 = vshrl.u32 %v1536, 16
        %v1783 = vrot.slane %v1781, 3
        %v1784 = vshll.u32 %v1536, 16
        %v1786 = vrot.slane %v1784, 4
        %v1787 = vor.u32 %v1783, %v1786
        %v1788 = vsel %vm728, %v1778, %v1787
        %v1790 = vshrl.u32 %v1537, 16
        %v1792 = vrot.slane %v1790, 3
        %v1793 = vshll.u32 %v1537, 16
        %v1795 = vrot.slane %v1793, 4
        %v1796 = vor.u32 %v1792, %v1795
        %v1797 = vsel %vm728, %v1787, %v1796
        %v1799 = vshrl.u32 %v1538, 16
        %v1801 = vrot.slane %v1799, 3
        %v1802 = vshll.u32 %v1538, 16
        %v1804 = vrot.slane %v1802, 4
        %v1805 = vor.u32 %v1801, %v1804
        %v1806 = vsel %vm728, %v1796, %v1805
        %v1808 = vshrl.u32 %v1539, 16
        %v1810 = vrot.slane %v1808, 3
        %v1811 = vshll.u32 %v1539, 16
        %v1813 = vrot.slane %v1811, 4
        %v1814 = vor.u32 %v1810, %v1813
        %v1815 = vsel %vm728, %v1805, %v1814
        %v1817 = vshrl.u32 %v1540, 16
        %v1819 = vrot.slane %v1817, 3
        %v1820 = vshll.u32 %v1540, 16
        %v1822 = vrot.slane %v1820, 4
        %v1823 = vor.u32 %v1819, %v1822
        %v1824 = vsel %vm728, %v1814, %v1823
        %v1826 = vshrl.u32 %v1541, 16
        %v1828 = vrot.slane %v1826, 3
        %v1829 = vshll.u32 %v1541, 16
        %v1831 = vrot.slane %v1829, 4
        %v1832 = vor.u32 %v1828, %v1831
        %v1833 = vsel %vm728, %v1823, %v1832
        %v1858 = vunpack.c.l.b16 %v1542
        %v1859 = vunpack.c.l.b16 %v1543
        %v1860 = vunpack.c.l.b16 %v1544
        %v1861 = vunpack.c.l.b16 %v1545
        %v1862 = vunpack.c.l.b16 %v1546
        %v1863 = vunpack.c.l.b16 %v1547
        %v1864 = vunpack.c.l.b16 %v1548
        %v1865 = vunpack.c.l.b16 %v1549
        %v1866 = vunpack.c.l.b16 %v1550
        %v1867 = vunpack.c.l.b16 %v1551
        %v1868 = vunpack.c.l.b16 %v1552
        %v1869 = vunpack.c.l.b16 %v1553
        %v1870 = vunpack.c.l.b16 %v1554
        %v1871 = vunpack.c.l.b16 %v1555
        %v1872 = vunpack.c.l.b16 %v1556
        %v1873 = vunpack.c.l.b16 %v1557
        %v1874 = vpack.c.b16 %v1859, %v1858
        %v1875 = vpack.c.b16 %v1861, %v1860
        %v1876 = vpack.c.b16 %v1863, %v1862
        %v1877 = vpack.c.b16 %v1865, %v1864
        %v1878 = vpack.c.b16 %v1867, %v1866
        %v1879 = vpack.c.b16 %v1869, %v1868
        %v1880 = vpack.c.b16 %v1871, %v1870
        %v1881 = vpack.c.b16 %v1873, %v1872
        %1890 = vmatprep.subr.bf16.mxu0 0
        %1891 = vmatpush1.bf16.msra.mxu0 %v1874
        %1892 = vmatprep.subr.bf16.mxu0 0
        %1893 = vmatpush1.bf16.msra.mxu0 %v1875
        %1894 = vmatprep.subr.bf16.mxu0 0
        %1895 = vmatpush1.bf16.msra.mxu0 %v1876
        %1896 = vmatprep.subr.bf16.mxu0 0
        %1897 = vmatpush1.bf16.msra.mxu0 %v1877
        %1898 = vmatprep.subr.bf16.mxu0 0
        %1899 = vmatpush1.bf16.msra.mxu0 %v1878
        %1900 = vmatprep.subr.bf16.mxu0 0
        %1901 = vmatpush1.bf16.msra.mxu0 %v1879
        %1902 = vmatprep.subr.bf16.mxu0 0
        %1903 = vmatpush1.bf16.msra.mxu0 %v1880
        %1904 = vmatprep.subr.bf16.mxu0 0
        %1905 = vmatpush1.bf16.msra.mxu0 %v1881
        %1906 = vmatprep.subr.bf16.mxu0 0
        %1907 = vmatpush1.bf16.msra.mxu0 0
        %1908 = vmatprep.subr.bf16.mxu0 0
        %1909 = vmatpush1.bf16.msra.mxu0 0
        %1910 = vmatprep.subr.bf16.mxu0 0
        %1911 = vmatpush1.bf16.msra.mxu0 0
        %1912 = vmatprep.subr.bf16.mxu0 0
        %1913 = vmatpush1.bf16.msra.mxu0 0
        %1914 = vmatprep.subr.bf16.mxu0 0
        %1915 = vmatpush1.bf16.msra.mxu0 0
        %1916 = vmatprep.subr.bf16.mxu0 0
        %1917 = vmatpush1.bf16.msra.mxu0 0
        %1918 = vmatprep.subr.bf16.mxu0 0
        %1919 = vmatpush1.bf16.msra.mxu0 0
        %1920 = vmatprep.subr.bf16.mxu0 0
        %1921 = vmatpush1.bf16.msra.mxu0 0
        %1922 = vmatprep.mubr.bf16.mxu0 0
        %1923 = vmatmul.mubr.bf16.gmra.mrb[0].mxu0 %v1770
        %v1924 = vpop.f32.mrb[0].mxu0
        %v1925 = vadd.f32 %v1692, %v1924
        %v1926 = vpop.f32.mrb[0].mxu0
        %v1927 = vpop.f32.mrb[0].mxu0
        %v1928 = vadd.f32 %v1695, %v1927
        %v1929 = vpop.f32.mrb[0].mxu0
        %1930 = vmatprep.mubr.bf16.mxu0 0
        %1931 = vmatmul.mubr.bf16.gmra.mrb[0].mxu0 %v1779
        %v1932 = vpop.f32.mrb[0].mxu0
        %v1933 = vadd.f32 %v1700, %v1932
        %v1934 = vpop.f32.mrb[0].mxu0
        %v1935 = vpop.f32.mrb[0].mxu0
        %v1936 = vadd.f32 %v1703, %v1935
        %v1937 = vpop.f32.mrb[0].mxu0
        %1938 = vmatprep.mubr.bf16.mxu0 0
        %1939 = vmatmul.mubr.bf16.gmra.mrb[0].mxu0 %v1788
        %v1940 = vpop.f32.mrb[0].mxu0
        %v1941 = vadd.f32 %v1708, %v1940
        %v1942 = vpop.f32.mrb[0].mxu0
        %v1943 = vpop.f32.mrb[0].mxu0
        %v1944 = vadd.f32 %v1711, %v1943
        %v1945 = vpop.f32.mrb[0].mxu0
        %1946 = vmatprep.mubr.bf16.mxu0 0
        %1947 = vmatmul.mubr.bf16.gmra.mrb[0].mxu0 %v1797
        %v1948 = vpop.f32.mrb[0].mxu0
        %v1949 = vadd.f32 %v1716, %v1948
        %v1950 = vpop.f32.mrb[0].mxu0
        %v1951 = vpop.f32.mrb[0].mxu0
        %v1952 = vadd.f32 %v1719, %v1951
        %v1953 = vpop.f32.mrb[0].mxu0
        %1954 = vmatprep.mubr.bf16.mxu0 0
        %1955 = vmatmul.mubr.bf16.gmra.mrb[0].mxu0 %v1806
        %v1956 = vpop.f32.mrb[0].mxu0
        %v1957 = vadd.f32 %v1724, %v1956
        %v1958 = vpop.f32.mrb[0].mxu0
        %v1959 = vpop.f32.mrb[0].mxu0
        %v1960 = vadd.f32 %v1727, %v1959
        %v1961 = vpop.f32.mrb[0].mxu0
        %1962 = vmatprep.mubr.bf16.mxu0 0
        %1963 = vmatmul.mubr.bf16.gmra.mrb[0].mxu0 %v1815
        %v1964 = vpop.f32.mrb[0].mxu0
        %v1965 = vadd.f32 %v1732, %v1964
        %v1966 = vpop.f32.mrb[0].mxu0
        %v1967 = vpop.f32.mrb[0].mxu0
        %v1968 = vadd.f32 %v1735, %v1967
        %v1969 = vpop.f32.mrb[0].mxu0
        %1970 = vmatprep.mubr.bf16.mxu0 0
        %1971 = vmatmul.mubr.bf16.gmra.mrb[0].mxu0 %v1824
        %v1972 = vpop.f32.mrb[0].mxu0
        %v1973 = vadd.f32 %v1740, %v1972
        %v1974 = vpop.f32.mrb[0].mxu0
        %v1975 = vpop.f32.mrb[0].mxu0
        %v1976 = vadd.f32 %v1743, %v1975
        %v1977 = vpop.f32.mrb[0].mxu0
        %1978 = vmatprep.mubr.bf16.mxu0 0
        %1979 = vmatmul.mubr.bf16.gmra.mrb[0].mxu0 %v1833
        %v1980 = vpop.f32.mrb[0].mxu0
        %v1981 = vadd.f32 %v1748, %v1980
        %v1982 = vpop.f32.mrb[0].mxu0
        %v1983 = vpop.f32.mrb[0].mxu0
        %v1984 = vadd.f32 %v1751, %v1983
        %v1985 = vpop.f32.mrb[0].mxu0
        %1986 = vdwg.mxu0
        %s1987 = scalar_lea.vmem [#allocation10], 128
        %v1988 = vld [vmem:[%s1987] sm:$0xf]
        %v1989 = vld [vmem:[%s1987 + $0x4] sm:$0xf]
        %v1990 = vld [vmem:[%s1987 + $0x8] sm:$0xf]
        %v1991 = vld [vmem:[%s1987 + $0xc] sm:$0xf]
        %v1992 = vld [vmem:[%s1987 + $0x10] sm:$0xf]
        %v1993 = vld [vmem:[%s1987 + $0x14] sm:$0xf]
        %v1994 = vld [vmem:[%s1987 + $0x18] sm:$0xf]
        %v1995 = vld [vmem:[%s1987 + $0x1c] sm:$0xf]
        %v1996 = vld [vmem:[%s1987 + $0x20] sm:$0xf]
        %v1997 = vld [vmem:[%s1987 + $0x24] sm:$0xf]
        %v1998 = vld [vmem:[%s1987 + $0x28] sm:$0xf]
        %v1999 = vld [vmem:[%s1987 + $0x2c] sm:$0xf]
        %v2000 = vld [vmem:[%s1987 + $0x30] sm:$0xf]
        %v2001 = vld [vmem:[%s1987 + $0x34] sm:$0xf]
        %v2002 = vld [vmem:[%s1987 + $0x38] sm:$0xf]
        %v2003 = vld [vmem:[%s1987 + $0x3c] sm:$0xf]
        %vm2004 = vsmask.f32 3328
        %v2005 = vrot.slane %v1755, 4
        %v2006 = vrot.slane %v1758, 5
        %v2007 = vor.u32 %v2005, %v2006
        %v2008 = vrot.slane %v1763, 4
        %v2009 = vrot.slane %v1766, 5
        %v2010 = vor.u32 %v2008, %v2009
        %v2011 = vsel %vm2004, %v2007, %v2010
        %v2012 = vrot.slane %v1772, 4
        %v2013 = vrot.slane %v1775, 5
        %v2014 = vor.u32 %v2012, %v2013
        %v2015 = vsel %vm2004, %v2010, %v2014
        %v2016 = vrot.slane %v1781, 4
        %v2017 = vrot.slane %v1784, 5
        %v2018 = vor.u32 %v2016, %v2017
        %v2019 = vsel %vm2004, %v2014, %v2018
        %v2020 = vrot.slane %v1790, 4
        %v2021 = vrot.slane %v1793, 5
        %v2022 = vor.u32 %v2020, %v2021
        %v2023 = vsel %vm2004, %v2018, %v2022
        %v2024 = vrot.slane %v1799, 4
        %v2025 = vrot.slane %v1802, 5
        %v2026 = vor.u32 %v2024, %v2025
        %v2027 = vsel %vm2004, %v2022, %v2026
        %v2028 = vrot.slane %v1808, 4
        %v2029 = vrot.slane %v1811, 5
        %v2030 = vor.u32 %v2028, %v2029
        %v2031 = vsel %vm2004, %v2026, %v2030
        %v2032 = vrot.slane %v1817, 4
        %v2033 = vrot.slane %v1820, 5
        %v2034 = vor.u32 %v2032, %v2033
        %v2035 = vsel %vm2004, %v2030, %v2034
        %v2036 = vrot.slane %v1826, 4
        %v2037 = vrot.slane %v1829, 5
        %v2038 = vor.u32 %v2036, %v2037
        %v2039 = vsel %vm2004, %v2034, %v2038
        %v2064 = vunpack.c.l.b16 %v1988
        %v2065 = vunpack.c.l.b16 %v1989
        %v2066 = vunpack.c.l.b16 %v1990
        %v2067 = vunpack.c.l.b16 %v1991
        %v2068 = vunpack.c.l.b16 %v1992
        %v2069 = vunpack.c.l.b16 %v1993
        %v2070 = vunpack.c.l.b16 %v1994
        %v2071 = vunpack.c.l.b16 %v1995
        %v2072 = vunpack.c.l.b16 %v1996
        %v2073 = vunpack.c.l.b16 %v1997
        %v2074 = vunpack.c.l.b16 %v1998
        %v2075 = vunpack.c.l.b16 %v1999
        %v2076 = vunpack.c.l.b16 %v2000
        %v2077 = vunpack.c.l.b16 %v2001
        %v2078 = vunpack.c.l.b16 %v2002
        %v2079 = vunpack.c.l.b16 %v2003
        %v2080 = vpack.c.b16 %v2065, %v2064
        %v2081 = vpack.c.b16 %v2067, %v2066
        %v2082 = vpack.c.b16 %v2069, %v2068
        %v2083 = vpack.c.b16 %v2071, %v2070
        %v2084 = vpack.c.b16 %v2073, %v2072
        %v2085 = vpack.c.b16 %v2075, %v2074
        %v2086 = vpack.c.b16 %v2077, %v2076
        %v2087 = vpack.c.b16 %v2079, %v2078
        %2096 = vmatprep.subr.bf16.mxu0 0
        %2097 = vmatpush1.bf16.msra.mxu0 %v2080
        %2098 = vmatprep.subr.bf16.mxu0 0
        %2099 = vmatpush1.bf16.msra.mxu0 %v2081
        %2100 = vmatprep.subr.bf16.mxu0 0
        %2101 = vmatpush1.bf16.msra.mxu0 %v2082
        %2102 = vmatprep.subr.bf16.mxu0 0
        %2103 = vmatpush1.bf16.msra.mxu0 %v2083
        %2104 = vmatprep.subr.bf16.mxu0 0
        %2105 = vmatpush1.bf16.msra.mxu0 %v2084
        %2106 = vmatprep.subr.bf16.mxu0 0
        %2107 = vmatpush1.bf16.msra.mxu0 %v2085
        %2108 = vmatprep.subr.bf16.mxu0 0
        %2109 = vmatpush1.bf16.msra.mxu0 %v2086
        %2110 = vmatprep.subr.bf16.mxu0 0
        %2111 = vmatpush1.bf16.msra.mxu0 %v2087
        %2112 = vmatprep.subr.bf16.mxu0 0
        %2113 = vmatpush1.bf16.msra.mxu0 0
        %2114 = vmatprep.subr.bf16.mxu0 0
        %2115 = vmatpush1.bf16.msra.mxu0 0
        %2116 = vmatprep.subr.bf16.mxu0 0
        %2117 = vmatpush1.bf16.msra.mxu0 0
        %2118 = vmatprep.subr.bf16.mxu0 0
        %2119 = vmatpush1.bf16.msra.mxu0 0
        %2120 = vmatprep.subr.bf16.mxu0 0
        %2121 = vmatpush1.bf16.msra.mxu0 0
        %2122 = vmatprep.subr.bf16.mxu0 0
        %2123 = vmatpush1.bf16.msra.mxu0 0
        %2124 = vmatprep.subr.bf16.mxu0 0
        %2125 = vmatpush1.bf16.msra.mxu0 0
        %2126 = vmatprep.subr.bf16.mxu0 0
        %2127 = vmatpush1.bf16.msra.mxu0 0
        %2128 = vmatprep.mubr.bf16.mxu0 0
        %2129 = vmatmul.mubr.bf16.gmra.mrb[0].mxu0 %v2011
        %v2130 = vpop.f32.mrb[0].mxu0
        %v2131 = vadd.f32 0.0, %v2130
        %v2132 = vpop.f32.mrb[0].mxu0
        %v2133 = vpop.f32.mrb[0].mxu0
        %v2134 = vadd.f32 0.0, %v2133
        %v2135 = vpop.f32.mrb[0].mxu0
        %2136 = vmatprep.mubr.bf16.mxu0 0
        %2137 = vmatmul.mubr.bf16.gmra.mrb[0].mxu0 %v2015
        %v2138 = vpop.f32.mrb[0].mxu0
        %v2139 = vadd.f32 0.0, %v2138
        %v2140 = vpop.f32.mrb[0].mxu0
        %v2141 = vpop.f32.mrb[0].mxu0
        %v2142 = vadd.f32 0.0, %v2141
        %v2143 = vpop.f32.mrb[0].mxu0
        %2144 = vmatprep.mubr.bf16.mxu0 0
        %2145 = vmatmul.mubr.bf16.gmra.mrb[0].mxu0 %v2019
        %v2146 = vpop.f32.mrb[0].mxu0
        %v2147 = vadd.f32 0.0, %v2146
        %v2148 = vpop.f32.mrb[0].mxu0
        %v2149 = vpop.f32.mrb[0].mxu0
        %v2150 = vadd.f32 0.0, %v2149
        %v2151 = vpop.f32.mrb[0].mxu0
        %2152 = vmatprep.mubr.bf16.mxu0 0
        %2153 = vmatmul.mubr.bf16.gmra.mrb[0].mxu0 %v2023
        %v2154 = vpop.f32.mrb[0].mxu0
        %v2155 = vadd.f32 0.0, %v2154
        %v2156 = vpop.f32.mrb[0].mxu0
        %v2157 = vpop.f32.mrb[0].mxu0
        %v2158 = vadd.f32 0.0, %v2157
        %v2159 = vpop.f32.mrb[0].mxu0
        %2160 = vmatprep.mubr.bf16.mxu0 0
        %2161 = vmatmul.mubr.bf16.gmra.mrb[0].mxu0 %v2027
        %v2162 = vpop.f32.mrb[0].mxu0
        %v2163 = vadd.f32 0.0, %v2162
        %v2164 = vpop.f32.mrb[0].mxu0
        %v2165 = vpop.f32.mrb[0].mxu0
        %v2166 = vadd.f32 0.0, %v2165
        %v2167 = vpop.f32.mrb[0].mxu0
        %2168 = vmatprep.mubr.bf16.mxu0 0
        %2169 = vmatmul.mubr.bf16.gmra.mrb[0].mxu0 %v2031
        %v2170 = vpop.f32.mrb[0].mxu0
        %v2171 = vadd.f32 0.0, %v2170
        %v2172 = vpop.f32.mrb[0].mxu0
        %v2173 = vpop.f32.mrb[0].mxu0
        %v2174 = vadd.f32 0.0, %v2173
        %v2175 = vpop.f32.mrb[0].mxu0
        %2176 = vmatprep.mubr.bf16.mxu0 0
        %2177 = vmatmul.mubr.bf16.gmra.mrb[0].mxu0 %v2035
        %v2178 = vpop.f32.mrb[0].mxu0
        %v2179 = vadd.f32 0.0, %v2178
        %v2180 = vpop.f32.mrb[0].mxu0
        %v2181 = vpop.f32.mrb[0].mxu0
        %v2182 = vadd.f32 0.0, %v2181
        %v2183 = vpop.f32.mrb[0].mxu0
        %2184 = vmatprep.mubr.bf16.mxu0 0
        %2185 = vmatmul.mubr.bf16.gmra.mrb[0].mxu0 %v2039
        %v2186 = vpop.f32.mrb[0].mxu0
        %v2187 = vadd.f32 0.0, %v2186
        %v2188 = vpop.f32.mrb[0].mxu0
        %v2189 = vpop.f32.mrb[0].mxu0
        %v2190 = vadd.f32 0.0, %v2189
        %v2191 = vpop.f32.mrb[0].mxu0
        %2192 = vdwg.mxu0
        %v2193 = vadd.f32 %v1925, %v2131
        %v2194 = vadd.f32 %v1928, %v2134
        %v2195 = vadd.f32 %v1933, %v2139
        %v2196 = vadd.f32 %v1936, %v2142
        %v2197 = vadd.f32 %v1941, %v2147
        %v2198 = vadd.f32 %v1944, %v2150
        %v2199 = vadd.f32 %v1949, %v2155
        %v2200 = vadd.f32 %v1952, %v2158
        %v2201 = vadd.f32 %v1957, %v2163
        %v2202 = vadd.f32 %v1960, %v2166
        %v2203 = vadd.f32 %v1965, %v2171
        %v2204 = vadd.f32 %v1968, %v2174
        %v2205 = vadd.f32 %v1973, %v2179
        %v2206 = vadd.f32 %v1976, %v2182
        %v2207 = vadd.f32 %v1981, %v2187
        %v2208 = vadd.f32 %v1984, %v2190
        %v2209 = vld [vmem:[%s6] sm:$0x1]
        %v2211 = vlaneseq
        %v2212 = vshrl.u32 %v2211, 7
        %v2213 = vsub.s32 0, %v2212
        %v2214 = vrot.slane %v2209, %v2213
        %v2216 = vadd.f32 %v2193, %v2214
        %v2217 = vadd.f32 %v2194, %v2214
        %v2218 = vadd.f32 %v2195, %v2214
        %v2219 = vadd.f32 %v2196, %v2214
        %v2220 = vadd.f32 %v2197, %v2214
        %v2221 = vadd.f32 %v2198, %v2214
        %v2222 = vadd.f32 %v2199, %v2214
        %v2223 = vadd.f32 %v2200, %v2214
        %v2224 = vadd.f32 %v2201, %v2214
        %v2225 = vadd.f32 %v2202, %v2214
        %v2226 = vadd.f32 %v2203, %v2214
        %v2227 = vadd.f32 %v2204, %v2214
        %v2228 = vadd.f32 %v2205, %v2214
        %v2229 = vadd.f32 %v2206, %v2214
        %v2230 = vadd.f32 %v2207, %v2214
        %v2231 = vadd.f32 %v2208, %v2214
        %v2232 = vadd.f32 %v2216, %v467
        %v2233 = vadd.f32 %v2217, %v468
        %v2234 = vadd.f32 %v2218, %v472
        %v2235 = vadd.f32 %v2219, %v473
        %v2236 = vadd.f32 %v2220, %v474
        %v2237 = vadd.f32 %v2221, %v475
        %v2238 = vadd.f32 %v2222, %v476
        %v2239 = vadd.f32 %v2223, %v477
        %v2240 = vadd.f32 %v2224, %v478
        %v2241 = vadd.f32 %v2225, %v479
        %v2242 = vadd.f32 %v2226, %v480
        %v2243 = vadd.f32 %v2227, %v481
        %v2244 = vadd.f32 %v2228, %v482
        %v2245 = vadd.f32 %v2229, %v483
        %v2246 = vadd.f32 %v2230, %v469
        %v2247 = vadd.f32 %v2231, %v470
        %vm2248 = vcmp.ge.f32.partialorder %v2232, 0.0
        %vm2249 = vcmp.ge.f32.partialorder %v2233, 0.0
        %vm2250 = vcmp.ge.f32.partialorder %v2234, 0.0
        %vm2251 = vcmp.ge.f32.partialorder %v2235, 0.0
        %vm2252 = vcmp.ge.f32.partialorder %v2236, 0.0
        %vm2253 = vcmp.ge.f32.partialorder %v2237, 0.0
        %vm2254 = vcmp.ge.f32.partialorder %v2238, 0.0
        %vm2255 = vcmp.ge.f32.partialorder %v2239, 0.0
        %vm2256 = vcmp.ge.f32.partialorder %v2240, 0.0
        %vm2257 = vcmp.ge.f32.partialorder %v2241, 0.0
        %vm2258 = vcmp.ge.f32.partialorder %v2242, 0.0
        %vm2259 = vcmp.ge.f32.partialorder %v2243, 0.0
        %vm2260 = vcmp.ge.f32.partialorder %v2244, 0.0
        %vm2261 = vcmp.ge.f32.partialorder %v2245, 0.0
        %vm2262 = vcmp.ge.f32.partialorder %v2246, 0.0
        %vm2263 = vcmp.ge.f32.partialorder %v2247, 0.0
        %v2264 = vmul.f32 %v2232, 0.1
        %v2265 = vmul.f32 %v2233, 0.1
        %v2266 = vmul.f32 %v2234, 0.1
        %v2267 = vmul.f32 %v2235, 0.1
        %v2268 = vmul.f32 %v2236, 0.1
        %v2269 = vmul.f32 %v2237, 0.1
        %v2270 = vmul.f32 %v2238, 0.1
        %v2271 = vmul.f32 %v2239, 0.1
        %v2272 = vmul.f32 %v2240, 0.1
        %v2273 = vmul.f32 %v2241, 0.1
        %v2274 = vmul.f32 %v2242, 0.1
        %v2275 = vmul.f32 %v2243, 0.1
        %v2276 = vmul.f32 %v2244, 0.1
        %v2277 = vmul.f32 %v2245, 0.1
        %v2278 = vmul.f32 %v2246, 0.1
        %v2279 = vmul.f32 %v2247, 0.1
        %v2280 = vsel %vm2248, %v2232, %v2264
        %v2281 = vsel %vm2249, %v2233, %v2265
        %v2282 = vsel %vm2250, %v2234, %v2266
        %v2283 = vsel %vm2251, %v2235, %v2267
        %v2284 = vsel %vm2252, %v2236, %v2268
        %v2285 = vsel %vm2253, %v2237, %v2269
        %v2286 = vsel %vm2254, %v2238, %v2270
        %v2287 = vsel %vm2255, %v2239, %v2271
        %v2288 = vsel %vm2256, %v2240, %v2272
        %v2289 = vsel %vm2257, %v2241, %v2273
        %v2290 = vsel %vm2258, %v2242, %v2274
        %v2291 = vsel %vm2259, %v2243, %v2275
        %v2292 = vsel %vm2260, %v2244, %v2276
        %v2293 = vsel %vm2261, %v2245, %v2277
        %v2294 = vsel %vm2262, %v2246, %v2278
        %v2295 = vsel %vm2263, %v2247, %v2279
        %v2296 = vsel %vm651, %v2280, 0.0
        %v2297 = vsel %vm652, %v2281, 0.0
        %v2298 = vsel %vm653, %v2282, 0.0
        %v2299 = vsel %vm654, %v2283, 0.0
        %v2300 = vsel %vm655, %v2284, 0.0
        %v2301 = vsel %vm656, %v2285, 0.0
        %v2302 = vsel %vm657, %v2286, 0.0
        %v2303 = vsel %vm658, %v2287, 0.0
        %v2304 = vsel %vm659, %v2288, 0.0
        %v2305 = vsel %vm660, %v2289, 0.0
        %v2306 = vsel %vm661, %v2290, 0.0
        %v2307 = vsel %vm662, %v2291, 0.0
        %v2308 = vsel %vm663, %v2292, 0.0
        %v2309 = vsel %vm664, %v2293, 0.0
        %v2310 = vsel %vm665, %v2294, 0.0
        %v2311 = vsel %vm666, %v2295, 0.0
        %v2312 = vpack.c.bf16 %v2297, %v2296
        %v2313 = vpack.c.bf16 %v2299, %v2298
        %v2314 = vpack.c.bf16 %v2301, %v2300
        %v2315 = vpack.c.bf16 %v2303, %v2302
        %v2316 = vpack.c.bf16 %v2305, %v2304
        %v2317 = vpack.c.bf16 %v2307, %v2306
        %v2318 = vpack.c.bf16 %v2309, %v2308
        %v2319 = vpack.c.bf16 %v2311, %v2310
        %s2320 = scalar_lea.vmem [#allocation8], 192
        %v2321 = vld [vmem:[%s2320] sm:$0xf]
        %v2322 = vld [vmem:[%s2320 + $0x4] sm:$0xf]
        %v2323 = vld [vmem:[%s2320 + $0x8] sm:$0xf]
        %v2324 = vld [vmem:[%s2320 + $0xc] sm:$0xf]
        %v2325 = vld [vmem:[%s2320 + $0x10] sm:$0xf]
        %v2326 = vld [vmem:[%s2320 + $0x14] sm:$0xf]
        %v2327 = vld [vmem:[%s2320 + $0x18] sm:$0xf]
        %v2328 = vld [vmem:[%s2320 + $0x1c] sm:$0xf]
        %v2329 = vld [vmem:[%s2320 + $0x20] sm:$0xf]
        %v2330 = vld [vmem:[%s2320 + $0x24] sm:$0xf]
        %v2331 = vld [vmem:[%s2320 + $0x28] sm:$0xf]
        %v2332 = vld [vmem:[%s2320 + $0x2c] sm:$0xf]
        %v2333 = vld [vmem:[%s2320 + $0x30] sm:$0xf]
        %v2334 = vld [vmem:[%s2320 + $0x34] sm:$0xf]
        %v2335 = vld [vmem:[%s2320 + $0x38] sm:$0xf]
        %v2336 = vld [vmem:[%s2320 + $0x3c] sm:$0xf]
        %s2337 = scalar_lea.vmem [#allocation8], 256
        %v2338 = vld [vmem:[%s2337] sm:$0xf]
        %v2339 = vld [vmem:[%s2337 + $0x4] sm:$0xf]
        %v2340 = vld [vmem:[%s2337 + $0x8] sm:$0xf]
        %v2341 = vld [vmem:[%s2337 + $0xc] sm:$0xf]
        %v2342 = vld [vmem:[%s2337 + $0x10] sm:$0xf]
        %v2343 = vld [vmem:[%s2337 + $0x14] sm:$0xf]
        %v2344 = vld [vmem:[%s2337 + $0x18] sm:$0xf]
        %v2345 = vld [vmem:[%s2337 + $0x1c] sm:$0xf]
        %v2346 = vld [vmem:[%s2337 + $0x20] sm:$0xf]
        %v2347 = vld [vmem:[%s2337 + $0x24] sm:$0xf]
        %v2348 = vld [vmem:[%s2337 + $0x28] sm:$0xf]
        %v2349 = vld [vmem:[%s2337 + $0x2c] sm:$0xf]
        %v2350 = vld [vmem:[%s2337 + $0x30] sm:$0xf]
        %v2351 = vld [vmem:[%s2337 + $0x34] sm:$0xf]
        %v2352 = vld [vmem:[%s2337 + $0x38] sm:$0xf]
        %v2353 = vld [vmem:[%s2337 + $0x3c] sm:$0xf]
        %v2355 = vshrl.u32 %v2312, 16
        %v2357 = vrot.slane %v2355, 3
        %v2358 = vshll.u32 %v2312, 16
        %v2360 = vrot.slane %v2358, 4
        %v2361 = vor.u32 %v2357, %v2360
        %v2363 = vshrl.u32 %v2313, 16
        %v2365 = vrot.slane %v2363, 3
        %v2366 = vshll.u32 %v2313, 16
        %v2368 = vrot.slane %v2366, 4
        %v2369 = vor.u32 %v2365, %v2368
        %v2370 = vsel %vm728, %v2361, %v2369
        %v2372 = vshrl.u32 %v2314, 16
        %v2374 = vrot.slane %v2372, 3
        %v2375 = vshll.u32 %v2314, 16
        %v2377 = vrot.slane %v2375, 4
        %v2378 = vor.u32 %v2374, %v2377
        %v2379 = vsel %vm728, %v2369, %v2378
        %v2381 = vshrl.u32 %v2315, 16
        %v2383 = vrot.slane %v2381, 3
        %v2384 = vshll.u32 %v2315, 16
        %v2386 = vrot.slane %v2384, 4
        %v2387 = vor.u32 %v2383, %v2386
        %v2388 = vsel %vm728, %v2378, %v2387
        %v2390 = vshrl.u32 %v2316, 16
        %v2392 = vrot.slane %v2390, 3
        %v2393 = vshll.u32 %v2316, 16
        %v2395 = vrot.slane %v2393, 4
        %v2396 = vor.u32 %v2392, %v2395
        %v2397 = vsel %vm728, %v2387, %v2396
        %v2399 = vshrl.u32 %v2317, 16
        %v2401 = vrot.slane %v2399, 3
        %v2402 = vshll.u32 %v2317, 16
        %v2404 = vrot.slane %v2402, 4
        %v2405 = vor.u32 %v2401, %v2404
        %v2406 = vsel %vm728, %v2396, %v2405
        %v2408 = vshrl.u32 %v2318, 16
        %v2410 = vrot.slane %v2408, 3
        %v2411 = vshll.u32 %v2318, 16
        %v2413 = vrot.slane %v2411, 4
        %v2414 = vor.u32 %v2410, %v2413
        %v2415 = vsel %vm728, %v2405, %v2414
        %v2417 = vshrl.u32 %v2319, 16
        %v2419 = vrot.slane %v2417, 3
        %v2420 = vshll.u32 %v2319, 16
        %v2422 = vrot.slane %v2420, 4
        %v2423 = vor.u32 %v2419, %v2422
        %v2424 = vsel %vm728, %v2414, %v2423
        %v2449 = vunpack.c.l.b16 %v2338
        %v2450 = vunpack.c.l.b16 %v2339
        %v2451 = vunpack.c.l.b16 %v2340
        %v2452 = vunpack.c.l.b16 %v2341
        %v2453 = vunpack.c.l.b16 %v2342
        %v2454 = vunpack.c.l.b16 %v2343
        %v2455 = vunpack.c.l.b16 %v2344
        %v2456 = vunpack.c.l.b16 %v2345
        %v2457 = vunpack.c.l.b16 %v2346
        %v2458 = vunpack.c.l.b16 %v2347
        %v2459 = vunpack.c.l.b16 %v2348
        %v2460 = vunpack.c.l.b16 %v2349
        %v2461 = vunpack.c.l.b16 %v2350
        %v2462 = vunpack.c.l.b16 %v2351
        %v2463 = vunpack.c.l.b16 %v2352
        %v2464 = vunpack.c.l.b16 %v2353
        %v2465 = vpack.c.b16 %v2450, %v2449
        %v2466 = vpack.c.b16 %v2452, %v2451
        %v2467 = vpack.c.b16 %v2454, %v2453
        %v2468 = vpack.c.b16 %v2456, %v2455
        %v2469 = vpack.c.b16 %v2458, %v2457
        %v2470 = vpack.c.b16 %v2460, %v2459
        %v2471 = vpack.c.b16 %v2462, %v2461
        %v2472 = vpack.c.b16 %v2464, %v2463
        %2481 = vmatprep.subr.bf16.mxu0 0
        %2482 = vmatpush1.bf16.msra.mxu0 %v2465
        %2483 = vmatprep.subr.bf16.mxu0 0
        %2484 = vmatpush1.bf16.msra.mxu0 %v2466
        %2485 = vmatprep.subr.bf16.mxu0 0
        %2486 = vmatpush1.bf16.msra.mxu0 %v2467
        %2487 = vmatprep.subr.bf16.mxu0 0
        %2488 = vmatpush1.bf16.msra.mxu0 %v2468
        %2489 = vmatprep.subr.bf16.mxu0 0
        %2490 = vmatpush1.bf16.msra.mxu0 %v2469
        %2491 = vmatprep.subr.bf16.mxu0 0
        %2492 = vmatpush1.bf16.msra.mxu0 %v2470
        %2493 = vmatprep.subr.bf16.mxu0 0
        %2494 = vmatpush1.bf16.msra.mxu0 %v2471
        %2495 = vmatprep.subr.bf16.mxu0 0
        %2496 = vmatpush1.bf16.msra.mxu0 %v2472
        %2497 = vmatprep.subr.bf16.mxu0 0
        %2498 = vmatpush1.bf16.msra.mxu0 0
        %2499 = vmatprep.subr.bf16.mxu0 0
        %2500 = vmatpush1.bf16.msra.mxu0 0
        %2501 = vmatprep.subr.bf16.mxu0 0
        %2502 = vmatpush1.bf16.msra.mxu0 0
        %2503 = vmatprep.subr.bf16.mxu0 0
        %2504 = vmatpush1.bf16.msra.mxu0 0
        %2505 = vmatprep.subr.bf16.mxu0 0
        %2506 = vmatpush1.bf16.msra.mxu0 0
        %2507 = vmatprep.subr.bf16.mxu0 0
        %2508 = vmatpush1.bf16.msra.mxu0 0
        %2509 = vmatprep.subr.bf16.mxu0 0
        %2510 = vmatpush1.bf16.msra.mxu0 0
        %2511 = vmatprep.subr.bf16.mxu0 0
        %2512 = vmatpush1.bf16.msra.mxu0 0
        %2513 = vmatprep.mubr.bf16.mxu0 0
        %2514 = vmatmul.mubr.bf16.gmra.mrb[0].mxu0 %v2370
        %v2515 = vpop.f32.mrb[0].mxu0
        %v2516 = vadd.f32 0.0, %v2515
        %v2517 = vpop.f32.mrb[0].mxu0
        %v2518 = vpop.f32.mrb[0].mxu0
        %v2519 = vadd.f32 0.0, %v2518
        %v2520 = vpop.f32.mrb[0].mxu0
        %2521 = vmatprep.mubr.bf16.mxu0 0
        %2522 = vmatmul.mubr.bf16.gmra.mrb[0].mxu0 %v2379
        %v2523 = vpop.f32.mrb[0].mxu0
        %v2524 = vadd.f32 0.0, %v2523
        %v2525 = vpop.f32.mrb[0].mxu0
        %v2526 = vpop.f32.mrb[0].mxu0
        %v2527 = vadd.f32 0.0, %v2526
        %v2528 = vpop.f32.mrb[0].mxu0
        %2529 = vmatprep.mubr.bf16.mxu0 0
        %2530 = vmatmul.mubr.bf16.gmra.mrb[0].mxu0 %v2388
        %v2531 = vpop.f32.mrb[0].mxu0
        %v2532 = vadd.f32 0.0, %v2531
        %v2533 = vpop.f32.mrb[0].mxu0
        %v2534 = vpop.f32.mrb[0].mxu0
        %v2535 = vadd.f32 0.0, %v2534
        %v2536 = vpop.f32.mrb[0].mxu0
        %2537 = vmatprep.mubr.bf16.mxu0 0
        %2538 = vmatmul.mubr.bf16.gmra.mrb[0].mxu0 %v2397
        %v2539 = vpop.f32.mrb[0].mxu0
        %v2540 = vadd.f32 0.0, %v2539
        %v2541 = vpop.f32.mrb[0].mxu0
        %v2542 = vpop.f32.mrb[0].mxu0
        %v2543 = vadd.f32 0.0, %v2542
        %v2544 = vpop.f32.mrb[0].mxu0
        %2545 = vmatprep.mubr.bf16.mxu0 0
        %2546 = vmatmul.mubr.bf16.gmra.mrb[0].mxu0 %v2406
        %v2547 = vpop.f32.mrb[0].mxu0
        %v2548 = vadd.f32 0.0, %v2547
        %v2549 = vpop.f32.mrb[0].mxu0
        %v2550 = vpop.f32.mrb[0].mxu0
        %v2551 = vadd.f32 0.0, %v2550
        %v2552 = vpop.f32.mrb[0].mxu0
        %2553 = vmatprep.mubr.bf16.mxu0 0
        %2554 = vmatmul.mubr.bf16.gmra.mrb[0].mxu0 %v2415
        %v2555 = vpop.f32.mrb[0].mxu0
        %v2556 = vadd.f32 0.0, %v2555
        %v2557 = vpop.f32.mrb[0].mxu0
        %v2558 = vpop.f32.mrb[0].mxu0
        %v2559 = vadd.f32 0.0, %v2558
        %v2560 = vpop.f32.mrb[0].mxu0
        %2561 = vmatprep.mubr.bf16.mxu0 0
        %2562 = vmatmul.mubr.bf16.gmra.mrb[0].mxu0 %v2424
        %v2563 = vpop.f32.mrb[0].mxu0
        %v2564 = vadd.f32 0.0, %v2563
        %v2565 = vpop.f32.mrb[0].mxu0
        %v2566 = vpop.f32.mrb[0].mxu0
        %v2567 = vadd.f32 0.0, %v2566
        %v2568 = vpop.f32.mrb[0].mxu0
        %2569 = vmatprep.mubr.bf16.mxu0 0
        %2570 = vmatmul.mubr.bf16.gmra.mrb[0].mxu0 %v2423
        %v2571 = vpop.f32.mrb[0].mxu0
        %v2572 = vadd.f32 0.0, %v2571
        %v2573 = vpop.f32.mrb[0].mxu0
        %v2574 = vpop.f32.mrb[0].mxu0
        %v2575 = vpop.f32.mrb[0].mxu0
        %2576 = vdwg.mxu0
        %vm2585 = vcmask 1045504
        %v2586 = vrot.slane %v2312, 2
        %v2587 = vrot.slane %v2313, 2
        %v2588 = vsel %vm2585, %v2586, %v2587
        %v2589 = vrot.slane %v2314, 2
        %v2590 = vsel %vm2585, %v2587, %v2589
        %v2591 = vrot.slane %v2315, 2
        %v2592 = vsel %vm2585, %v2589, %v2591
        %v2593 = vrot.slane %v2316, 2
        %v2594 = vsel %vm2585, %v2591, %v2593
        %v2595 = vrot.slane %v2317, 2
        %v2596 = vsel %vm2585, %v2593, %v2595
        %v2597 = vrot.slane %v2318, 2
        %v2598 = vsel %vm2585, %v2595, %v2597
        %v2599 = vrot.slane %v2319, 2
        %v2600 = vsel %vm2585, %v2597, %v2599
        %v2625 = vunpack.c.l.b16 %v2321
        %v2626 = vunpack.c.l.b16 %v2322
        %v2627 = vunpack.c.l.b16 %v2323
        %v2628 = vunpack.c.l.b16 %v2324
        %v2629 = vunpack.c.l.b16 %v2325
        %v2630 = vunpack.c.l.b16 %v2326
        %v2631 = vunpack.c.l.b16 %v2327
        %v2632 = vunpack.c.l.b16 %v2328
        %v2633 = vunpack.c.l.b16 %v2329
        %v2634 = vunpack.c.l.b16 %v2330
        %v2635 = vunpack.c.l.b16 %v2331
        %v2636 = vunpack.c.l.b16 %v2332
        %v2637 = vunpack.c.l.b16 %v2333
        %v2638 = vunpack.c.l.b16 %v2334
        %v2639 = vunpack.c.l.b16 %v2335
        %v2640 = vunpack.c.l.b16 %v2336
        %v2641 = vpack.c.b16 %v2626, %v2625
        %v2642 = vpack.c.b16 %v2628, %v2627
        %v2643 = vpack.c.b16 %v2630, %v2629
        %v2644 = vpack.c.b16 %v2632, %v2631
        %v2645 = vpack.c.b16 %v2634, %v2633
        %v2646 = vpack.c.b16 %v2636, %v2635
        %v2647 = vpack.c.b16 %v2638, %v2637
        %v2648 = vpack.c.b16 %v2640, %v2639
        %2657 = vmatprep.subr.bf16.mxu0 0
        %2658 = vmatpush1.bf16.msra.mxu0 %v2641
        %2659 = vmatprep.subr.bf16.mxu0 0
        %2660 = vmatpush1.bf16.msra.mxu0 %v2642
        %2661 = vmatprep.subr.bf16.mxu0 0
        %2662 = vmatpush1.bf16.msra.mxu0 %v2643
        %2663 = vmatprep.subr.bf16.mxu0 0
        %2664 = vmatpush1.bf16.msra.mxu0 %v2644
        %2665 = vmatprep.subr.bf16.mxu0 0
        %2666 = vmatpush1.bf16.msra.mxu0 %v2645
        %2667 = vmatprep.subr.bf16.mxu0 0
        %2668 = vmatpush1.bf16.msra.mxu0 %v2646
        %2669 = vmatprep.subr.bf16.mxu0 0
        %2670 = vmatpush1.bf16.msra.mxu0 %v2647
        %2671 = vmatprep.subr.bf16.mxu0 0
        %2672 = vmatpush1.bf16.msra.mxu0 %v2648
        %2673 = vmatprep.subr.bf16.mxu0 0
        %2674 = vmatpush1.bf16.msra.mxu0 0
        %2675 = vmatprep.subr.bf16.mxu0 0
        %2676 = vmatpush1.bf16.msra.mxu0 0
        %2677 = vmatprep.subr.bf16.mxu0 0
        %2678 = vmatpush1.bf16.msra.mxu0 0
        %2679 = vmatprep.subr.bf16.mxu0 0
        %2680 = vmatpush1.bf16.msra.mxu0 0
        %2681 = vmatprep.subr.bf16.mxu0 0
        %2682 = vmatpush1.bf16.msra.mxu0 0
        %2683 = vmatprep.subr.bf16.mxu0 0
        %2684 = vmatpush1.bf16.msra.mxu0 0
        %2685 = vmatprep.subr.bf16.mxu0 0
        %2686 = vmatpush1.bf16.msra.mxu0 0
        %2687 = vmatprep.subr.bf16.mxu0 0
        %2688 = vmatpush1.bf16.msra.mxu0 0
        %2689 = vmatprep.mubr.bf16.mxu0 0
        %2690 = vmatmul.mubr.bf16.gmra.mrb[0].mxu0 %v2588
        %v2691 = vpop.f32.mrb[0].mxu0
        %v2692 = vadd.f32 %v2516, %v2691
        %v2693 = vpop.f32.mrb[0].mxu0
        %v2694 = vpop.f32.mrb[0].mxu0
        %v2695 = vadd.f32 %v2519, %v2694
        %v2696 = vpop.f32.mrb[0].mxu0
        %2697 = vmatprep.mubr.bf16.mxu0 0
        %2698 = vmatmul.mubr.bf16.gmra.mrb[0].mxu0 %v2590
        %v2699 = vpop.f32.mrb[0].mxu0
        %v2700 = vadd.f32 %v2524, %v2699
        %v2701 = vpop.f32.mrb[0].mxu0
        %v2702 = vpop.f32.mrb[0].mxu0
        %v2703 = vadd.f32 %v2527, %v2702
        %v2704 = vpop.f32.mrb[0].mxu0
        %2705 = vmatprep.mubr.bf16.mxu0 0
        %2706 = vmatmul.mubr.bf16.gmra.mrb[0].mxu0 %v2592
        %v2707 = vpop.f32.mrb[0].mxu0
        %v2708 = vadd.f32 %v2532, %v2707
        %v2709 = vpop.f32.mrb[0].mxu0
        %v2710 = vpop.f32.mrb[0].mxu0
        %v2711 = vadd.f32 %v2535, %v2710
        %v2712 = vpop.f32.mrb[0].mxu0
        %2713 = vmatprep.mubr.bf16.mxu0 0
        %2714 = vmatmul.mubr.bf16.gmra.mrb[0].mxu0 %v2594
        %v2715 = vpop.f32.mrb[0].mxu0
        %v2716 = vadd.f32 %v2540, %v2715
        %v2717 = vpop.f32.mrb[0].mxu0
        %v2718 = vpop.f32.mrb[0].mxu0
        %v2719 = vadd.f32 %v2543, %v2718
        %v2720 = vpop.f32.mrb[0].mxu0
        %2721 = vmatprep.mubr.bf16.mxu0 0
        %2722 = vmatmul.mubr.bf16.gmra.mrb[0].mxu0 %v2596
        %v2723 = vpop.f32.mrb[0].mxu0
        %v2724 = vadd.f32 %v2548, %v2723
        %v2725 = vpop.f32.mrb[0].mxu0
        %v2726 = vpop.f32.mrb[0].mxu0
        %v2727 = vadd.f32 %v2551, %v2726
        %v2728 = vpop.f32.mrb[0].mxu0
        %2729 = vmatprep.mubr.bf16.mxu0 0
        %2730 = vmatmul.mubr.bf16.gmra.mrb[0].mxu0 %v2598
        %v2731 = vpop.f32.mrb[0].mxu0
        %v2732 = vadd.f32 %v2556, %v2731
        %v2733 = vpop.f32.mrb[0].mxu0
        %v2734 = vpop.f32.mrb[0].mxu0
        %v2735 = vadd.f32 %v2559, %v2734
        %v2736 = vpop.f32.mrb[0].mxu0
        %2737 = vmatprep.mubr.bf16.mxu0 0
        %2738 = vmatmul.mubr.bf16.gmra.mrb[0].mxu0 %v2600
        %v2739 = vpop.f32.mrb[0].mxu0
        %v2740 = vadd.f32 %v2564, %v2739
        %v2741 = vpop.f32.mrb[0].mxu0
        %v2742 = vpop.f32.mrb[0].mxu0
        %v2743 = vadd.f32 %v2567, %v2742
        %v2744 = vpop.f32.mrb[0].mxu0
        %2745 = vmatprep.mubr.bf16.mxu0 0
        %2746 = vmatmul.mubr.bf16.gmra.mrb[0].mxu0 %v2599
        %v2747 = vpop.f32.mrb[0].mxu0
        %v2748 = vadd.f32 %v2572, %v2747
        %v2749 = vpop.f32.mrb[0].mxu0
        %v2750 = vpop.f32.mrb[0].mxu0
        %v2751 = vpop.f32.mrb[0].mxu0
        %2752 = vdwg.mxu0
        %s2753 = scalar_lea.vmem [#allocation8], 320
        %v2754 = vld [vmem:[%s2753] sm:$0xf]
        %v2755 = vld [vmem:[%s2753 + $0x4] sm:$0xf]
        %v2756 = vld [vmem:[%s2753 + $0x8] sm:$0xf]
        %v2757 = vld [vmem:[%s2753 + $0xc] sm:$0xf]
        %v2758 = vld [vmem:[%s2753 + $0x10] sm:$0xf]
        %v2759 = vld [vmem:[%s2753 + $0x14] sm:$0xf]
        %v2760 = vld [vmem:[%s2753 + $0x18] sm:$0xf]
        %v2761 = vld [vmem:[%s2753 + $0x1c] sm:$0xf]
        %v2762 = vld [vmem:[%s2753 + $0x20] sm:$0xf]
        %v2763 = vld [vmem:[%s2753 + $0x24] sm:$0xf]
        %v2764 = vld [vmem:[%s2753 + $0x28] sm:$0xf]
        %v2765 = vld [vmem:[%s2753 + $0x2c] sm:$0xf]
        %v2766 = vld [vmem:[%s2753 + $0x30] sm:$0xf]
        %v2767 = vld [vmem:[%s2753 + $0x34] sm:$0xf]
        %v2768 = vld [vmem:[%s2753 + $0x38] sm:$0xf]
        %v2769 = vld [vmem:[%s2753 + $0x3c] sm:$0xf]
        %vm2770 = vcmask 1042432
        %v2771 = vrot.slane %v2312, 5
        %v2772 = vrot.slane %v2313, 5
        %v2773 = vsel %vm2770, %v2771, %v2772
        %v2774 = vrot.slane %v2314, 5
        %v2775 = vsel %vm2770, %v2772, %v2774
        %v2776 = vrot.slane %v2315, 5
        %v2777 = vsel %vm2770, %v2774, %v2776
        %v2778 = vrot.slane %v2316, 5
        %v2779 = vsel %vm2770, %v2776, %v2778
        %v2780 = vrot.slane %v2317, 5
        %v2781 = vsel %vm2770, %v2778, %v2780
        %v2782 = vrot.slane %v2318, 5
        %v2783 = vsel %vm2770, %v2780, %v2782
        %v2784 = vrot.slane %v2319, 5
        %v2785 = vsel %vm2770, %v2782, %v2784
        %v2810 = vunpack.c.l.b16 %v2754
        %v2811 = vunpack.c.l.b16 %v2755
        %v2812 = vunpack.c.l.b16 %v2756
        %v2813 = vunpack.c.l.b16 %v2757
        %v2814 = vunpack.c.l.b16 %v2758
        %v2815 = vunpack.c.l.b16 %v2759
        %v2816 = vunpack.c.l.b16 %v2760
        %v2817 = vunpack.c.l.b16 %v2761
        %v2818 = vunpack.c.l.b16 %v2762
        %v2819 = vunpack.c.l.b16 %v2763
        %v2820 = vunpack.c.l.b16 %v2764
        %v2821 = vunpack.c.l.b16 %v2765
        %v2822 = vunpack.c.l.b16 %v2766
        %v2823 = vunpack.c.l.b16 %v2767
        %v2824 = vunpack.c.l.b16 %v2768
        %v2825 = vunpack.c.l.b16 %v2769
        %v2826 = vpack.c.b16 %v2811, %v2810
        %v2827 = vpack.c.b16 %v2813, %v2812
        %v2828 = vpack.c.b16 %v2815, %v2814
        %v2829 = vpack.c.b16 %v2817, %v2816
        %v2830 = vpack.c.b16 %v2819, %v2818
        %v2831 = vpack.c.b16 %v2821, %v2820
        %v2832 = vpack.c.b16 %v2823, %v2822
        %v2833 = vpack.c.b16 %v2825, %v2824
        %2842 = vmatprep.subr.bf16.mxu0 0
        %2843 = vmatpush1.bf16.msra.mxu0 %v2826
        %2844 = vmatprep.subr.bf16.mxu0 0
        %2845 = vmatpush1.bf16.msra.mxu0 %v2827
        %2846 = vmatprep.subr.bf16.mxu0 0
        %2847 = vmatpush1.bf16.msra.mxu0 %v2828
        %2848 = vmatprep.subr.bf16.mxu0 0
        %2849 = vmatpush1.bf16.msra.mxu0 %v2829
        %2850 = vmatprep.subr.bf16.mxu0 0
        %2851 = vmatpush1.bf16.msra.mxu0 %v2830
        %2852 = vmatprep.subr.bf16.mxu0 0
        %2853 = vmatpush1.bf16.msra.mxu0 %v2831
        %2854 = vmatprep.subr.bf16.mxu0 0
        %2855 = vmatpush1.bf16.msra.mxu0 %v2832
        %2856 = vmatprep.subr.bf16.mxu0 0
        %2857 = vmatpush1.bf16.msra.mxu0 %v2833
        %2858 = vmatprep.subr.bf16.mxu0 0
        %2859 = vmatpush1.bf16.msra.mxu0 0
        %2860 = vmatprep.subr.bf16.mxu0 0
        %2861 = vmatpush1.bf16.msra.mxu0 0
        %2862 = vmatprep.subr.bf16.mxu0 0
        %2863 = vmatpush1.bf16.msra.mxu0 0
        %2864 = vmatprep.subr.bf16.mxu0 0
        %2865 = vmatpush1.bf16.msra.mxu0 0
        %2866 = vmatprep.subr.bf16.mxu0 0
        %2867 = vmatpush1.bf16.msra.mxu0 0
        %2868 = vmatprep.subr.bf16.mxu0 0
        %2869 = vmatpush1.bf16.msra.mxu0 0
        %2870 = vmatprep.subr.bf16.mxu0 0
        %2871 = vmatpush1.bf16.msra.mxu0 0
        %2872 = vmatprep.subr.bf16.mxu0 0
        %2873 = vmatpush1.bf16.msra.mxu0 0
        %2874 = vmatprep.mubr.bf16.mxu0 0
        %2875 = vmatmul.mubr.bf16.gmra.mrb[0].mxu0 %v2773
        %v2876 = vpop.f32.mrb[0].mxu0
        %v2877 = vadd.f32 0.0, %v2876
        %v2878 = vpop.f32.mrb[0].mxu0
        %v2879 = vpop.f32.mrb[0].mxu0
        %v2880 = vadd.f32 0.0, %v2879
        %v2881 = vpop.f32.mrb[0].mxu0
        %2882 = vmatprep.mubr.bf16.mxu0 0
        %2883 = vmatmul.mubr.bf16.gmra.mrb[0].mxu0 %v2775
        %v2884 = vpop.f32.mrb[0].mxu0
        %v2885 = vadd.f32 0.0, %v2884
        %v2886 = vpop.f32.mrb[0].mxu0
        %v2887 = vpop.f32.mrb[0].mxu0
        %v2888 = vadd.f32 0.0, %v2887
        %v2889 = vpop.f32.mrb[0].mxu0
        %2890 = vmatprep.mubr.bf16.mxu0 0
        %2891 = vmatmul.mubr.bf16.gmra.mrb[0].mxu0 %v2777
        %v2892 = vpop.f32.mrb[0].mxu0
        %v2893 = vadd.f32 0.0, %v2892
        %v2894 = vpop.f32.mrb[0].mxu0
        %v2895 = vpop.f32.mrb[0].mxu0
        %v2896 = vadd.f32 0.0, %v2895
        %v2897 = vpop.f32.mrb[0].mxu0
        %2898 = vmatprep.mubr.bf16.mxu0 0
        %2899 = vmatmul.mubr.bf16.gmra.mrb[0].mxu0 %v2779
        %v2900 = vpop.f32.mrb[0].mxu0
        %v2901 = vadd.f32 0.0, %v2900
        %v2902 = vpop.f32.mrb[0].mxu0
        %v2903 = vpop.f32.mrb[0].mxu0
        %v2904 = vadd.f32 0.0, %v2903
        %v2905 = vpop.f32.mrb[0].mxu0
        %2906 = vmatprep.mubr.bf16.mxu0 0
        %2907 = vmatmul.mubr.bf16.gmra.mrb[0].mxu0 %v2781
        %v2908 = vpop.f32.mrb[0].mxu0
        %v2909 = vadd.f32 0.0, %v2908
        %v2910 = vpop.f32.mrb[0].mxu0
        %v2911 = vpop.f32.mrb[0].mxu0
        %v2912 = vadd.f32 0.0, %v2911
        %v2913 = vpop.f32.mrb[0].mxu0
        %2914 = vmatprep.mubr.bf16.mxu0 0
        %2915 = vmatmul.mubr.bf16.gmra.mrb[0].mxu0 %v2783
        %v2916 = vpop.f32.mrb[0].mxu0
        %v2917 = vadd.f32 0.0, %v2916
        %v2918 = vpop.f32.mrb[0].mxu0
        %v2919 = vpop.f32.mrb[0].mxu0
        %v2920 = vadd.f32 0.0, %v2919
        %v2921 = vpop.f32.mrb[0].mxu0
        %2922 = vmatprep.mubr.bf16.mxu0 0
        %2923 = vmatmul.mubr.bf16.gmra.mrb[0].mxu0 %v2785
        %v2924 = vpop.f32.mrb[0].mxu0
        %v2925 = vadd.f32 0.0, %v2924
        %v2926 = vpop.f32.mrb[0].mxu0
        %v2927 = vpop.f32.mrb[0].mxu0
        %v2928 = vadd.f32 0.0, %v2927
        %v2929 = vpop.f32.mrb[0].mxu0
        %2930 = vmatprep.mubr.bf16.mxu0 0
        %2931 = vmatmul.mubr.bf16.gmra.mrb[0].mxu0 %v2784
        %v2932 = vpop.f32.mrb[0].mxu0
        %v2933 = vadd.f32 0.0, %v2932
        %v2934 = vpop.f32.mrb[0].mxu0
        %v2935 = vpop.f32.mrb[0].mxu0
        %v2936 = vpop.f32.mrb[0].mxu0
        %2937 = vdwg.mxu0
        %v2938 = vadd.f32 %v2692, %v2877
        %v2939 = vadd.f32 %v2695, %v2880
        %v2940 = vadd.f32 %v2700, %v2885
        %v2941 = vadd.f32 %v2703, %v2888
        %v2942 = vadd.f32 %v2708, %v2893
        %v2943 = vadd.f32 %v2711, %v2896
        %v2944 = vadd.f32 %v2716, %v2901
        %v2945 = vadd.f32 %v2719, %v2904
        %v2946 = vadd.f32 %v2724, %v2909
        %v2947 = vadd.f32 %v2727, %v2912
        %v2948 = vadd.f32 %v2732, %v2917
        %v2949 = vadd.f32 %v2735, %v2920
        %v2950 = vadd.f32 %v2740, %v2925
        %v2951 = vadd.f32 %v2743, %v2928
        %v2952 = vadd.f32 %v2748, %v2933
        %s2953 = scalar_lea.vmem %s4, 1
        %v2954 = vld [vmem:[%s2953] sm:$0x1]
        %v2956 = vlaneseq
        %v2957 = vshrl.u32 %v2956, 7
        %v2958 = vsub.s32 0, %v2957
        %v2959 = vrot.slane %v2954, %v2958
        %v2961 = vadd.f32 %v2938, %v2959
        %v2962 = vadd.f32 %v2939, %v2959
        %v2963 = vadd.f32 %v2940, %v2959
        %v2964 = vadd.f32 %v2941, %v2959
        %v2965 = vadd.f32 %v2942, %v2959
        %v2966 = vadd.f32 %v2943, %v2959
        %v2967 = vadd.f32 %v2944, %v2959
        %v2968 = vadd.f32 %v2945, %v2959
        %v2969 = vadd.f32 %v2946, %v2959
        %v2970 = vadd.f32 %v2947, %v2959
        %v2971 = vadd.f32 %v2948, %v2959
        %v2972 = vadd.f32 %v2949, %v2959
        %v2973 = vadd.f32 %v2950, %v2959
        %v2974 = vadd.f32 %v2951, %v2959
        %v2975 = vadd.f32 %v2952, %v2959
        %vm2976 = vcmp.ge.f32.partialorder %v2961, 0.0
        %vm2977 = vcmp.ge.f32.partialorder %v2962, 0.0
        %vm2978 = vcmp.ge.f32.partialorder %v2963, 0.0
        %vm2979 = vcmp.ge.f32.partialorder %v2964, 0.0
        %vm2980 = vcmp.ge.f32.partialorder %v2965, 0.0
        %vm2981 = vcmp.ge.f32.partialorder %v2966, 0.0
        %vm2982 = vcmp.ge.f32.partialorder %v2967, 0.0
        %vm2983 = vcmp.ge.f32.partialorder %v2968, 0.0
        %vm2984 = vcmp.ge.f32.partialorder %v2969, 0.0
        %vm2985 = vcmp.ge.f32.partialorder %v2970, 0.0
        %vm2986 = vcmp.ge.f32.partialorder %v2971, 0.0
        %vm2987 = vcmp.ge.f32.partialorder %v2972, 0.0
        %vm2988 = vcmp.ge.f32.partialorder %v2973, 0.0
        %vm2989 = vcmp.ge.f32.partialorder %v2974, 0.0
        %vm2990 = vcmp.ge.f32.partialorder %v2975, 0.0
        %v2991 = vmul.f32 %v2961, 0.1
        %v2992 = vmul.f32 %v2962, 0.1
        %v2993 = vmul.f32 %v2963, 0.1
        %v2994 = vmul.f32 %v2964, 0.1
        %v2995 = vmul.f32 %v2965, 0.1
        %v2996 = vmul.f32 %v2966, 0.1
        %v2997 = vmul.f32 %v2967, 0.1
        %v2998 = vmul.f32 %v2968, 0.1
        %v2999 = vmul.f32 %v2969, 0.1
        %v3000 = vmul.f32 %v2970, 0.1
        %v3001 = vmul.f32 %v2971, 0.1
        %v3002 = vmul.f32 %v2972, 0.1
        %v3003 = vmul.f32 %v2973, 0.1
        %v3004 = vmul.f32 %v2974, 0.1
        %v3005 = vmul.f32 %v2975, 0.1
        %v3006 = vsel %vm2976, %v2961, %v2991
        %v3007 = vsel %vm2977, %v2962, %v2992
        %v3008 = vsel %vm2978, %v2963, %v2993
        %v3009 = vsel %vm2979, %v2964, %v2994
        %v3010 = vsel %vm2980, %v2965, %v2995
        %v3011 = vsel %vm2981, %v2966, %v2996
        %v3012 = vsel %vm2982, %v2967, %v2997
        %v3013 = vsel %vm2983, %v2968, %v2998
        %v3014 = vsel %vm2984, %v2969, %v2999
        %v3015 = vsel %vm2985, %v2970, %v3000
        %v3016 = vsel %vm2986, %v2971, %v3001
        %v3017 = vsel %vm2987, %v2972, %v3002
        %v3018 = vsel %vm2988, %v2973, %v3003
        %v3019 = vsel %vm2989, %v2974, %v3004
        %v3020 = vsel %vm2990, %v2975, %v3005
        %v3036 = vrot.slane %v3006, 1
        %v3037 = vrot.slane %v3007, 1
        %v3038 = vsel %vm1463, %v3036, %v3037
        %v3039 = vrot.slane %v3008, 1
        %v3040 = vsel %vm1463, %v3037, %v3039
        %v3041 = vrot.slane %v3009, 1
        %v3042 = vsel %vm1463, %v3039, %v3041
        %v3043 = vrot.slane %v3010, 1
        %v3044 = vsel %vm1463, %v3041, %v3043
        %v3045 = vrot.slane %v3011, 1
        %v3046 = vsel %vm1463, %v3043, %v3045
        %v3047 = vrot.slane %v3012, 1
        %v3048 = vsel %vm1463, %v3045, %v3047
        %v3049 = vrot.slane %v3013, 1
        %v3050 = vsel %vm1463, %v3047, %v3049
        %v3051 = vrot.slane %v3014, 1
        %v3052 = vsel %vm1463, %v3049, %v3051
        %v3053 = vrot.slane %v3015, 1
        %v3054 = vsel %vm1463, %v3051, %v3053
        %v3055 = vrot.slane %v3016, 1
        %v3056 = vsel %vm1463, %v3053, %v3055
        %v3057 = vrot.slane %v3017, 1
        %v3058 = vsel %vm1463, %v3055, %v3057
        %v3059 = vrot.slane %v3018, 1
        %v3060 = vsel %vm1463, %v3057, %v3059
        %v3061 = vrot.slane %v3019, 1
        %v3062 = vsel %vm1463, %v3059, %v3061
        %v3063 = vrot.slane %v3020, 1
        %v3064 = vsel %vm1463, %v3061, %v3063
        %v3081 = vsel %vm651, %v3036, 0.0
        %v3082 = vsel %vm652, %v3038, 0.0
        %v3083 = vsel %vm653, %v3040, 0.0
        %v3084 = vsel %vm654, %v3042, 0.0
        %v3085 = vsel %vm655, %v3044, 0.0
        %v3086 = vsel %vm656, %v3046, 0.0
        %v3087 = vsel %vm657, %v3048, 0.0
        %v3088 = vsel %vm658, %v3050, 0.0
        %v3089 = vsel %vm659, %v3052, 0.0
        %v3090 = vsel %vm660, %v3054, 0.0
        %v3091 = vsel %vm661, %v3056, 0.0
        %v3092 = vsel %vm662, %v3058, 0.0
        %v3093 = vsel %vm663, %v3060, 0.0
        %v3094 = vsel %vm664, %v3062, 0.0
        %v3095 = vsel %vm665, %v3064, 0.0
        %v3096 = vsel %vm666, %v3063, 0.0
        %v3097 = vpack.c.bf16 %v3082, %v3081
        %v3098 = vpack.c.bf16 %v3084, %v3083
        %v3099 = vpack.c.bf16 %v3086, %v3085
        %v3100 = vpack.c.bf16 %v3088, %v3087
        %v3101 = vpack.c.bf16 %v3090, %v3089
        %v3102 = vpack.c.bf16 %v3092, %v3091
        %v3103 = vpack.c.bf16 %v3094, %v3093
        %v3104 = vpack.c.bf16 %v3096, %v3095
        %s3105 = scalar_lea.vmem [#allocation10], 192
        %v3106 = vld [vmem:[%s3105] sm:$0xf]
        %v3107 = vld [vmem:[%s3105 + $0x4] sm:$0xf]
        %v3108 = vld [vmem:[%s3105 + $0x8] sm:$0xf]
        %v3109 = vld [vmem:[%s3105 + $0xc] sm:$0xf]
        %v3110 = vld [vmem:[%s3105 + $0x10] sm:$0xf]
        %v3111 = vld [vmem:[%s3105 + $0x14] sm:$0xf]
        %v3112 = vld [vmem:[%s3105 + $0x18] sm:$0xf]
        %v3113 = vld [vmem:[%s3105 + $0x1c] sm:$0xf]
        %v3114 = vld [vmem:[%s3105 + $0x20] sm:$0xf]
        %v3115 = vld [vmem:[%s3105 + $0x24] sm:$0xf]
        %v3116 = vld [vmem:[%s3105 + $0x28] sm:$0xf]
        %v3117 = vld [vmem:[%s3105 + $0x2c] sm:$0xf]
        %v3118 = vld [vmem:[%s3105 + $0x30] sm:$0xf]
        %v3119 = vld [vmem:[%s3105 + $0x34] sm:$0xf]
        %v3120 = vld [vmem:[%s3105 + $0x38] sm:$0xf]
        %v3121 = vld [vmem:[%s3105 + $0x3c] sm:$0xf]
        %s3122 = scalar_lea.vmem [#allocation10], 256
        %v3123 = vld [vmem:[%s3122] sm:$0xf]
        %v3124 = vld [vmem:[%s3122 + $0x4] sm:$0xf]
        %v3125 = vld [vmem:[%s3122 + $0x8] sm:$0xf]
        %v3126 = vld [vmem:[%s3122 + $0xc] sm:$0xf]
        %v3127 = vld [vmem:[%s3122 + $0x10] sm:$0xf]
        %v3128 = vld [vmem:[%s3122 + $0x14] sm:$0xf]
        %v3129 = vld [vmem:[%s3122 + $0x18] sm:$0xf]
        %v3130 = vld [vmem:[%s3122 + $0x1c] sm:$0xf]
        %v3131 = vld [vmem:[%s3122 + $0x20] sm:$0xf]
        %v3132 = vld [vmem:[%s3122 + $0x24] sm:$0xf]
        %v3133 = vld [vmem:[%s3122 + $0x28] sm:$0xf]
        %v3134 = vld [vmem:[%s3122 + $0x2c] sm:$0xf]
        %v3135 = vld [vmem:[%s3122 + $0x30] sm:$0xf]
        %v3136 = vld [vmem:[%s3122 + $0x34] sm:$0xf]
        %v3137 = vld [vmem:[%s3122 + $0x38] sm:$0xf]
        %v3138 = vld [vmem:[%s3122 + $0x3c] sm:$0xf]
        %v3147 = vrot.slane %v3097, 4
        %v3148 = vrot.slane %v3098, 4
        %v3149 = vsel %vm1175, %v3147, %v3148
        %v3150 = vrot.slane %v3099, 4
        %v3151 = vsel %vm1175, %v3148, %v3150
        %v3152 = vrot.slane %v3100, 4
        %v3153 = vsel %vm1175, %v3150, %v3152
        %v3154 = vrot.slane %v3101, 4
        %v3155 = vsel %vm1175, %v3152, %v3154
        %v3156 = vrot.slane %v3102, 4
        %v3157 = vsel %vm1175, %v3154, %v3156
        %v3158 = vrot.slane %v3103, 4
        %v3159 = vsel %vm1175, %v3156, %v3158
        %v3160 = vrot.slane %v3104, 4
        %v3161 = vsel %vm1175, %v3158, %v3160
        %v3185 = vunpack.c.l.b16 %v3123
        %v3186 = vunpack.c.l.b16 %v3124
        %v3187 = vunpack.c.l.b16 %v3125
        %v3188 = vunpack.c.l.b16 %v3126
        %v3189 = vunpack.c.l.b16 %v3127
        %v3190 = vunpack.c.l.b16 %v3128
        %v3191 = vunpack.c.l.b16 %v3129
        %v3192 = vunpack.c.l.b16 %v3130
        %v3193 = vunpack.c.l.b16 %v3131
        %v3194 = vunpack.c.l.b16 %v3132
        %v3195 = vunpack.c.l.b16 %v3133
        %v3196 = vunpack.c.l.b16 %v3134
        %v3197 = vunpack.c.l.b16 %v3135
        %v3198 = vunpack.c.l.b16 %v3136
        %v3199 = vunpack.c.l.b16 %v3137
        %v3200 = vunpack.c.l.b16 %v3138
        %v3201 = vpack.c.b16 %v3186, %v3185
        %v3202 = vpack.c.b16 %v3188, %v3187
        %v3203 = vpack.c.b16 %v3190, %v3189
        %v3204 = vpack.c.b16 %v3192, %v3191
        %v3205 = vpack.c.b16 %v3194, %v3193
        %v3206 = vpack.c.b16 %v3196, %v3195
        %v3207 = vpack.c.b16 %v3198, %v3197
        %v3208 = vpack.c.b16 %v3200, %v3199
        %3217 = vmatprep.subr.bf16.mxu0 0
        %3218 = vmatpush1.bf16.msra.mxu0 %v3201
        %3219 = vmatprep.subr.bf16.mxu0 0
        %3220 = vmatpush1.bf16.msra.mxu0 %v3202
        %3221 = vmatprep.subr.bf16.mxu0 0
        %3222 = vmatpush1.bf16.msra.mxu0 %v3203
        %3223 = vmatprep.subr.bf16.mxu0 0
        %3224 = vmatpush1.bf16.msra.mxu0 %v3204
        %3225 = vmatprep.subr.bf16.mxu0 0
        %3226 = vmatpush1.bf16.msra.mxu0 %v3205
        %3227 = vmatprep.subr.bf16.mxu0 0
        %3228 = vmatpush1.bf16.msra.mxu0 %v3206
        %3229 = vmatprep.subr.bf16.mxu0 0
        %3230 = vmatpush1.bf16.msra.mxu0 %v3207
        %3231 = vmatprep.subr.bf16.mxu0 0
        %3232 = vmatpush1.bf16.msra.mxu0 %v3208
        %3233 = vmatprep.subr.bf16.mxu0 0
        %3234 = vmatpush1.bf16.msra.mxu0 0
        %3235 = vmatprep.subr.bf16.mxu0 0
        %3236 = vmatpush1.bf16.msra.mxu0 0
        %3237 = vmatprep.subr.bf16.mxu0 0
        %3238 = vmatpush1.bf16.msra.mxu0 0
        %3239 = vmatprep.subr.bf16.mxu0 0
        %3240 = vmatpush1.bf16.msra.mxu0 0
        %3241 = vmatprep.subr.bf16.mxu0 0
        %3242 = vmatpush1.bf16.msra.mxu0 0
        %3243 = vmatprep.subr.bf16.mxu0 0
        %3244 = vmatpush1.bf16.msra.mxu0 0
        %3245 = vmatprep.subr.bf16.mxu0 0
        %3246 = vmatpush1.bf16.msra.mxu0 0
        %3247 = vmatprep.subr.bf16.mxu0 0
        %3248 = vmatpush1.bf16.msra.mxu0 0
        %3249 = vmatprep.mubr.bf16.mxu0 0
        %3250 = vmatmul.mubr.bf16.gmra.mrb[0].mxu0 %v3149
        %v3251 = vpop.f32.mrb[0].mxu0
        %v3252 = vadd.f32 0.0, %v3251
        %v3253 = vpop.f32.mrb[0].mxu0
        %v3254 = vpop.f32.mrb[0].mxu0
        %v3255 = vadd.f32 0.0, %v3254
        %v3256 = vpop.f32.mrb[0].mxu0
        %3257 = vmatprep.mubr.bf16.mxu0 0
        %3258 = vmatmul.mubr.bf16.gmra.mrb[0].mxu0 %v3151
        %v3259 = vpop.f32.mrb[0].mxu0
        %v3260 = vadd.f32 0.0, %v3259
        %v3261 = vpop.f32.mrb[0].mxu0
        %v3262 = vpop.f32.mrb[0].mxu0
        %v3263 = vadd.f32 0.0, %v3262
        %v3264 = vpop.f32.mrb[0].mxu0
        %3265 = vmatprep.mubr.bf16.mxu0 0
        %3266 = vmatmul.mubr.bf16.gmra.mrb[0].mxu0 %v3153
        %v3267 = vpop.f32.mrb[0].mxu0
        %v3268 = vadd.f32 0.0, %v3267
        %v3269 = vpop.f32.mrb[0].mxu0
        %v3270 = vpop.f32.mrb[0].mxu0
        %v3271 = vadd.f32 0.0, %v3270
        %v3272 = vpop.f32.mrb[0].mxu0
        %3273 = vmatprep.mubr.bf16.mxu0 0
        %3274 = vmatmul.mubr.bf16.gmra.mrb[0].mxu0 %v3155
        %v3275 = vpop.f32.mrb[0].mxu0
        %v3276 = vadd.f32 0.0, %v3275
        %v3277 = vpop.f32.mrb[0].mxu0
        %v3278 = vpop.f32.mrb[0].mxu0
        %v3279 = vadd.f32 0.0, %v3278
        %v3280 = vpop.f32.mrb[0].mxu0
        %3281 = vmatprep.mubr.bf16.mxu0 0
        %3282 = vmatmul.mubr.bf16.gmra.mrb[0].mxu0 %v3157
        %v3283 = vpop.f32.mrb[0].mxu0
        %v3284 = vadd.f32 0.0, %v3283
        %v3285 = vpop.f32.mrb[0].mxu0
        %v3286 = vpop.f32.mrb[0].mxu0
        %v3287 = vadd.f32 0.0, %v3286
        %v3288 = vpop.f32.mrb[0].mxu0
        %3289 = vmatprep.mubr.bf16.mxu0 0
        %3290 = vmatmul.mubr.bf16.gmra.mrb[0].mxu0 %v3159
        %v3291 = vpop.f32.mrb[0].mxu0
        %v3292 = vadd.f32 0.0, %v3291
        %v3293 = vpop.f32.mrb[0].mxu0
        %v3294 = vpop.f32.mrb[0].mxu0
        %v3295 = vadd.f32 0.0, %v3294
        %v3296 = vpop.f32.mrb[0].mxu0
        %3297 = vmatprep.mubr.bf16.mxu0 0
        %3298 = vmatmul.mubr.bf16.gmra.mrb[0].mxu0 %v3161
        %v3299 = vpop.f32.mrb[0].mxu0
        %v3300 = vadd.f32 0.0, %v3299
        %v3301 = vpop.f32.mrb[0].mxu0
        %v3302 = vpop.f32.mrb[0].mxu0
        %v3303 = vadd.f32 0.0, %v3302
        %v3304 = vpop.f32.mrb[0].mxu0
        %3305 = vdwg.mxu0
        %v3307 = vshrl.u32 %v3097, 16
        %v3309 = vrot.slane %v3307, 3
        %v3310 = vshll.u32 %v3097, 16
        %v3312 = vrot.slane %v3310, 4
        %v3313 = vor.u32 %v3309, %v3312
        %v3315 = vshrl.u32 %v3098, 16
        %v3317 = vrot.slane %v3315, 3
        %v3318 = vshll.u32 %v3098, 16
        %v3320 = vrot.slane %v3318, 4
        %v3321 = vor.u32 %v3317, %v3320
        %v3322 = vsel %vm728, %v3313, %v3321
        %v3324 = vshrl.u32 %v3099, 16
        %v3326 = vrot.slane %v3324, 3
        %v3327 = vshll.u32 %v3099, 16
        %v3329 = vrot.slane %v3327, 4
        %v3330 = vor.u32 %v3326, %v3329
        %v3331 = vsel %vm728, %v3321, %v3330
        %v3333 = vshrl.u32 %v3100, 16
        %v3335 = vrot.slane %v3333, 3
        %v3336 = vshll.u32 %v3100, 16
        %v3338 = vrot.slane %v3336, 4
        %v3339 = vor.u32 %v3335, %v3338
        %v3340 = vsel %vm728, %v3330, %v3339
        %v3342 = vshrl.u32 %v3101, 16
        %v3344 = vrot.slane %v3342, 3
        %v3345 = vshll.u32 %v3101, 16
        %v3347 = vrot.slane %v3345, 4
        %v3348 = vor.u32 %v3344, %v3347
        %v3349 = vsel %vm728, %v3339, %v3348
        %v3351 = vshrl.u32 %v3102, 16
        %v3353 = vrot.slane %v3351, 3
        %v3354 = vshll.u32 %v3102, 16
        %v3356 = vrot.slane %v3354, 4
        %v3357 = vor.u32 %v3353, %v3356
        %v3358 = vsel %vm728, %v3348, %v3357
        %v3360 = vshrl.u32 %v3103, 16
        %v3362 = vrot.slane %v3360, 3
        %v3363 = vshll.u32 %v3103, 16
        %v3365 = vrot.slane %v3363, 4
        %v3366 = vor.u32 %v3362, %v3365
        %v3367 = vsel %vm728, %v3357, %v3366
        %v3369 = vshrl.u32 %v3104, 16
        %v3371 = vrot.slane %v3369, 3
        %v3372 = vshll.u32 %v3104, 16
        %v3374 = vrot.slane %v3372, 4
        %v3375 = vor.u32 %v3371, %v3374
        %v3376 = vsel %vm728, %v3366, %v3375
        %v3400 = vunpack.c.l.b16 %v3106
        %v3401 = vunpack.c.l.b16 %v3107
        %v3402 = vunpack.c.l.b16 %v3108
        %v3403 = vunpack.c.l.b16 %v3109
        %v3404 = vunpack.c.l.b16 %v3110
        %v3405 = vunpack.c.l.b16 %v3111
        %v3406 = vunpack.c.l.b16 %v3112
        %v3407 = vunpack.c.l.b16 %v3113
        %v3408 = vunpack.c.l.b16 %v3114
        %v3409 = vunpack.c.l.b16 %v3115
        %v3410 = vunpack.c.l.b16 %v3116
        %v3411 = vunpack.c.l.b16 %v3117
        %v3412 = vunpack.c.l.b16 %v3118
        %v3413 = vunpack.c.l.b16 %v3119
        %v3414 = vunpack.c.l.b16 %v3120
        %v3415 = vunpack.c.l.b16 %v3121
        %v3416 = vpack.c.b16 %v3401, %v3400
        %v3417 = vpack.c.b16 %v3403, %v3402
        %v3418 = vpack.c.b16 %v3405, %v3404
        %v3419 = vpack.c.b16 %v3407, %v3406
        %v3420 = vpack.c.b16 %v3409, %v3408
        %v3421 = vpack.c.b16 %v3411, %v3410
        %v3422 = vpack.c.b16 %v3413, %v3412
        %v3423 = vpack.c.b16 %v3415, %v3414
        %3432 = vmatprep.subr.bf16.mxu0 0
        %3433 = vmatpush1.bf16.msra.mxu0 %v3416
        %3434 = vmatprep.subr.bf16.mxu0 0
        %3435 = vmatpush1.bf16.msra.mxu0 %v3417
        %3436 = vmatprep.subr.bf16.mxu0 0
        %3437 = vmatpush1.bf16.msra.mxu0 %v3418
        %3438 = vmatprep.subr.bf16.mxu0 0
        %3439 = vmatpush1.bf16.msra.mxu0 %v3419
        %3440 = vmatprep.subr.bf16.mxu0 0
        %3441 = vmatpush1.bf16.msra.mxu0 %v3420
        %3442 = vmatprep.subr.bf16.mxu0 0
        %3443 = vmatpush1.bf16.msra.mxu0 %v3421
        %3444 = vmatprep.subr.bf16.mxu0 0
        %3445 = vmatpush1.bf16.msra.mxu0 %v3422
        %3446 = vmatprep.subr.bf16.mxu0 0
        %3447 = vmatpush1.bf16.msra.mxu0 %v3423
        %3448 = vmatprep.subr.bf16.mxu0 0
        %3449 = vmatpush1.bf16.msra.mxu0 0
        %3450 = vmatprep.subr.bf16.mxu0 0
        %3451 = vmatpush1.bf16.msra.mxu0 0
        %3452 = vmatprep.subr.bf16.mxu0 0
        %3453 = vmatpush1.bf16.msra.mxu0 0
        %3454 = vmatprep.subr.bf16.mxu0 0
        %3455 = vmatpush1.bf16.msra.mxu0 0
        %3456 = vmatprep.subr.bf16.mxu0 0
        %3457 = vmatpush1.bf16.msra.mxu0 0
        %3458 = vmatprep.subr.bf16.mxu0 0
        %3459 = vmatpush1.bf16.msra.mxu0 0
        %3460 = vmatprep.subr.bf16.mxu0 0
        %3461 = vmatpush1.bf16.msra.mxu0 0
        %3462 = vmatprep.subr.bf16.mxu0 0
        %3463 = vmatpush1.bf16.msra.mxu0 0
        %3464 = vmatprep.mubr.bf16.mxu0 0
        %3465 = vmatmul.mubr.bf16.gmra.mrb[0].mxu0 %v3322
        %v3466 = vpop.f32.mrb[0].mxu0
        %v3467 = vadd.f32 %v3252, %v3466
        %v3468 = vpop.f32.mrb[0].mxu0
        %v3469 = vpop.f32.mrb[0].mxu0
        %v3470 = vadd.f32 %v3255, %v3469
        %v3471 = vpop.f32.mrb[0].mxu0
        %3472 = vmatprep.mubr.bf16.mxu0 0
        %3473 = vmatmul.mubr.bf16.gmra.mrb[0].mxu0 %v3331
        %v3474 = vpop.f32.mrb[0].mxu0
        %v3475 = vadd.f32 %v3260, %v3474
        %v3476 = vpop.f32.mrb[0].mxu0
        %v3477 = vpop.f32.mrb[0].mxu0
        %v3478 = vadd.f32 %v3263, %v3477
        %v3479 = vpop.f32.mrb[0].mxu0
        %3480 = vmatprep.mubr.bf16.mxu0 0
        %3481 = vmatmul.mubr.bf16.gmra.mrb[0].mxu0 %v3340
        %v3482 = vpop.f32.mrb[0].mxu0
        %v3483 = vadd.f32 %v3268, %v3482
        %v3484 = vpop.f32.mrb[0].mxu0
        %v3485 = vpop.f32.mrb[0].mxu0
        %v3486 = vadd.f32 %v3271, %v3485
        %v3487 = vpop.f32.mrb[0].mxu0
        %3488 = vmatprep.mubr.bf16.mxu0 0
        %3489 = vmatmul.mubr.bf16.gmra.mrb[0].mxu0 %v3349
        %v3490 = vpop.f32.mrb[0].mxu0
        %v3491 = vadd.f32 %v3276, %v3490
        %v3492 = vpop.f32.mrb[0].mxu0
        %v3493 = vpop.f32.mrb[0].mxu0
        %v3494 = vadd.f32 %v3279, %v3493
        %v3495 = vpop.f32.mrb[0].mxu0
        %3496 = vmatprep.mubr.bf16.mxu0 0
        %3497 = vmatmul.mubr.bf16.gmra.mrb[0].mxu0 %v3358
        %v3498 = vpop.f32.mrb[0].mxu0
        %v3499 = vadd.f32 %v3284, %v3498
        %v3500 = vpop.f32.mrb[0].mxu0
        %v3501 = vpop.f32.mrb[0].mxu0
        %v3502 = vadd.f32 %v3287, %v3501
        %v3503 = vpop.f32.mrb[0].mxu0
        %3504 = vmatprep.mubr.bf16.mxu0 0
        %3505 = vmatmul.mubr.bf16.gmra.mrb[0].mxu0 %v3367
        %v3506 = vpop.f32.mrb[0].mxu0
        %v3507 = vadd.f32 %v3292, %v3506
        %v3508 = vpop.f32.mrb[0].mxu0
        %v3509 = vpop.f32.mrb[0].mxu0
        %v3510 = vadd.f32 %v3295, %v3509
        %v3511 = vpop.f32.mrb[0].mxu0
        %3512 = vmatprep.mubr.bf16.mxu0 0
        %3513 = vmatmul.mubr.bf16.gmra.mrb[0].mxu0 %v3376
        %v3514 = vpop.f32.mrb[0].mxu0
        %v3515 = vadd.f32 %v3300, %v3514
        %v3516 = vpop.f32.mrb[0].mxu0
        %v3517 = vpop.f32.mrb[0].mxu0
        %v3518 = vadd.f32 %v3303, %v3517
        %v3519 = vpop.f32.mrb[0].mxu0
        %3520 = vdwg.mxu0
        %s3521 = scalar_lea.vmem [#allocation10], 320
        %v3522 = vld [vmem:[%s3521] sm:$0xf]
        %v3523 = vld [vmem:[%s3521 + $0x4] sm:$0xf]
        %v3524 = vld [vmem:[%s3521 + $0x8] sm:$0xf]
        %v3525 = vld [vmem:[%s3521 + $0xc] sm:$0xf]
        %v3526 = vld [vmem:[%s3521 + $0x10] sm:$0xf]
        %v3527 = vld [vmem:[%s3521 + $0x14] sm:$0xf]
        %v3528 = vld [vmem:[%s3521 + $0x18] sm:$0xf]
        %v3529 = vld [vmem:[%s3521 + $0x1c] sm:$0xf]
        %v3530 = vld [vmem:[%s3521 + $0x20] sm:$0xf]
        %v3531 = vld [vmem:[%s3521 + $0x24] sm:$0xf]
        %v3532 = vld [vmem:[%s3521 + $0x28] sm:$0xf]
        %v3533 = vld [vmem:[%s3521 + $0x2c] sm:$0xf]
        %v3534 = vld [vmem:[%s3521 + $0x30] sm:$0xf]
        %v3535 = vld [vmem:[%s3521 + $0x34] sm:$0xf]
        %v3536 = vld [vmem:[%s3521 + $0x38] sm:$0xf]
        %v3537 = vld [vmem:[%s3521 + $0x3c] sm:$0xf]
        %v3538 = vrot.slane %v3307, 4
        %v3539 = vrot.slane %v3310, 5
        %v3540 = vor.u32 %v3538, %v3539
        %v3541 = vrot.slane %v3315, 4
        %v3542 = vrot.slane %v3318, 5
        %v3543 = vor.u32 %v3541, %v3542
        %v3544 = vsel %vm2004, %v3540, %v3543
        %v3545 = vrot.slane %v3324, 4
        %v3546 = vrot.slane %v3327, 5
        %v3547 = vor.u32 %v3545, %v3546
        %v3548 = vsel %vm2004, %v3543, %v3547
        %v3549 = vrot.slane %v3333, 4
        %v3550 = vrot.slane %v3336, 5
        %v3551 = vor.u32 %v3549, %v3550
        %v3552 = vsel %vm2004, %v3547, %v3551
        %v3553 = vrot.slane %v3342, 4
        %v3554 = vrot.slane %v3345, 5
        %v3555 = vor.u32 %v3553, %v3554
        %v3556 = vsel %vm2004, %v3551, %v3555
        %v3557 = vrot.slane %v3351, 4
        %v3558 = vrot.slane %v3354, 5
        %v3559 = vor.u32 %v3557, %v3558
        %v3560 = vsel %vm2004, %v3555, %v3559
        %v3561 = vrot.slane %v3360, 4
        %v3562 = vrot.slane %v3363, 5
        %v3563 = vor.u32 %v3561, %v3562
        %v3564 = vsel %vm2004, %v3559, %v3563
        %v3565 = vrot.slane %v3369, 4
        %v3566 = vrot.slane %v3372, 5
        %v3567 = vor.u32 %v3565, %v3566
        %v3568 = vsel %vm2004, %v3563, %v3567
        %v3592 = vunpack.c.l.b16 %v3522
        %v3593 = vunpack.c.l.b16 %v3523
        %v3594 = vunpack.c.l.b16 %v3524
        %v3595 = vunpack.c.l.b16 %v3525
        %v3596 = vunpack.c.l.b16 %v3526
        %v3597 = vunpack.c.l.b16 %v3527
        %v3598 = vunpack.c.l.b16 %v3528
        %v3599 = vunpack.c.l.b16 %v3529
        %v3600 = vunpack.c.l.b16 %v3530
        %v3601 = vunpack.c.l.b16 %v3531
        %v3602 = vunpack.c.l.b16 %v3532
        %v3603 = vunpack.c.l.b16 %v3533
        %v3604 = vunpack.c.l.b16 %v3534
        %v3605 = vunpack.c.l.b16 %v3535
        %v3606 = vunpack.c.l.b16 %v3536
        %v3607 = vunpack.c.l.b16 %v3537
        %v3608 = vpack.c.b16 %v3593, %v3592
        %v3609 = vpack.c.b16 %v3595, %v3594
        %v3610 = vpack.c.b16 %v3597, %v3596
        %v3611 = vpack.c.b16 %v3599, %v3598
        %v3612 = vpack.c.b16 %v3601, %v3600
        %v3613 = vpack.c.b16 %v3603, %v3602
        %v3614 = vpack.c.b16 %v3605, %v3604
        %v3615 = vpack.c.b16 %v3607, %v3606
        %3624 = vmatprep.subr.bf16.mxu0 0
        %3625 = vmatpush1.bf16.msra.mxu0 %v3608
        %3626 = vmatprep.subr.bf16.mxu0 0
        %3627 = vmatpush1.bf16.msra.mxu0 %v3609
        %3628 = vmatprep.subr.bf16.mxu0 0
        %3629 = vmatpush1.bf16.msra.mxu0 %v3610
        %3630 = vmatprep.subr.bf16.mxu0 0
        %3631 = vmatpush1.bf16.msra.mxu0 %v3611
        %3632 = vmatprep.subr.bf16.mxu0 0
        %3633 = vmatpush1.bf16.msra.mxu0 %v3612
        %3634 = vmatprep.subr.bf16.mxu0 0
        %3635 = vmatpush1.bf16.msra.mxu0 %v3613
        %3636 = vmatprep.subr.bf16.mxu0 0
        %3637 = vmatpush1.bf16.msra.mxu0 %v3614
        %3638 = vmatprep.subr.bf16.mxu0 0
        %3639 = vmatpush1.bf16.msra.mxu0 %v3615
        %3640 = vmatprep.subr.bf16.mxu0 0
        %3641 = vmatpush1.bf16.msra.mxu0 0
        %3642 = vmatprep.subr.bf16.mxu0 0
        %3643 = vmatpush1.bf16.msra.mxu0 0
        %3644 = vmatprep.subr.bf16.mxu0 0
        %3645 = vmatpush1.bf16.msra.mxu0 0
        %3646 = vmatprep.subr.bf16.mxu0 0
        %3647 = vmatpush1.bf16.msra.mxu0 0
        %3648 = vmatprep.subr.bf16.mxu0 0
        %3649 = vmatpush1.bf16.msra.mxu0 0
        %3650 = vmatprep.subr.bf16.mxu0 0
        %3651 = vmatpush1.bf16.msra.mxu0 0
        %3652 = vmatprep.subr.bf16.mxu0 0
        %3653 = vmatpush1.bf16.msra.mxu0 0
        %3654 = vmatprep.subr.bf16.mxu0 0
        %3655 = vmatpush1.bf16.msra.mxu0 0
        %3656 = vmatprep.mubr.bf16.mxu0 0
        %3657 = vmatmul.mubr.bf16.gmra.mrb[0].mxu0 %v3544
        %v3658 = vpop.f32.mrb[0].mxu0
        %v3659 = vadd.f32 0.0, %v3658
        %v3660 = vpop.f32.mrb[0].mxu0
        %v3661 = vpop.f32.mrb[0].mxu0
        %v3662 = vadd.f32 0.0, %v3661
        %v3663 = vpop.f32.mrb[0].mxu0
        %3664 = vmatprep.mubr.bf16.mxu0 0
        %3665 = vmatmul.mubr.bf16.gmra.mrb[0].mxu0 %v3548
        %v3666 = vpop.f32.mrb[0].mxu0
        %v3667 = vadd.f32 0.0, %v3666
        %v3668 = vpop.f32.mrb[0].mxu0
        %v3669 = vpop.f32.mrb[0].mxu0
        %v3670 = vadd.f32 0.0, %v3669
        %v3671 = vpop.f32.mrb[0].mxu0
        %3672 = vmatprep.mubr.bf16.mxu0 0
        %3673 = vmatmul.mubr.bf16.gmra.mrb[0].mxu0 %v3552
        %v3674 = vpop.f32.mrb[0].mxu0
        %v3675 = vadd.f32 0.0, %v3674
        %v3676 = vpop.f32.mrb[0].mxu0
        %v3677 = vpop.f32.mrb[0].mxu0
        %v3678 = vadd.f32 0.0, %v3677
        %v3679 = vpop.f32.mrb[0].mxu0
        %3680 = vmatprep.mubr.bf16.mxu0 0
        %3681 = vmatmul.mubr.bf16.gmra.mrb[0].mxu0 %v3556
        %v3682 = vpop.f32.mrb[0].mxu0
        %v3683 = vadd.f32 0.0, %v3682
        %v3684 = vpop.f32.mrb[0].mxu0
        %v3685 = vpop.f32.mrb[0].mxu0
        %v3686 = vadd.f32 0.0, %v3685
        %v3687 = vpop.f32.mrb[0].mxu0
        %3688 = vmatprep.mubr.bf16.mxu0 0
        %3689 = vmatmul.mubr.bf16.gmra.mrb[0].mxu0 %v3560
        %v3690 = vpop.f32.mrb[0].mxu0
        %v3691 = vadd.f32 0.0, %v3690
        %v3692 = vpop.f32.mrb[0].mxu0
        %v3693 = vpop.f32.mrb[0].mxu0
        %v3694 = vadd.f32 0.0, %v3693
        %v3695 = vpop.f32.mrb[0].mxu0
        %3696 = vmatprep.mubr.bf16.mxu0 0
        %3697 = vmatmul.mubr.bf16.gmra.mrb[0].mxu0 %v3564
        %v3698 = vpop.f32.mrb[0].mxu0
        %v3699 = vadd.f32 0.0, %v3698
        %v3700 = vpop.f32.mrb[0].mxu0
        %v3701 = vpop.f32.mrb[0].mxu0
        %v3702 = vadd.f32 0.0, %v3701
        %v3703 = vpop.f32.mrb[0].mxu0
        %3704 = vmatprep.mubr.bf16.mxu0 0
        %3705 = vmatmul.mubr.bf16.gmra.mrb[0].mxu0 %v3568
        %v3706 = vpop.f32.mrb[0].mxu0
        %v3707 = vadd.f32 0.0, %v3706
        %v3708 = vpop.f32.mrb[0].mxu0
        %v3709 = vpop.f32.mrb[0].mxu0
        %v3710 = vadd.f32 0.0, %v3709
        %v3711 = vpop.f32.mrb[0].mxu0
        %3712 = vdwg.mxu0
        %v3713 = vadd.f32 %v3467, %v3659
        %v3714 = vadd.f32 %v3470, %v3662
        %v3715 = vadd.f32 %v3475, %v3667
        %v3716 = vadd.f32 %v3478, %v3670
        %v3717 = vadd.f32 %v3483, %v3675
        %v3718 = vadd.f32 %v3486, %v3678
        %v3719 = vadd.f32 %v3491, %v3683
        %v3720 = vadd.f32 %v3494, %v3686
        %v3721 = vadd.f32 %v3499, %v3691
        %v3722 = vadd.f32 %v3502, %v3694
        %v3723 = vadd.f32 %v3507, %v3699
        %v3724 = vadd.f32 %v3510, %v3702
        %v3725 = vadd.f32 %v3515, %v3707
        %v3726 = vadd.f32 %v3518, %v3710
        %s3727 = scalar_lea.vmem %s6, 1
        %v3728 = vld [vmem:[%s3727] sm:$0x1]
        %v3730 = vlaneseq
        %v3731 = vshrl.u32 %v3730, 7
        %v3732 = vsub.s32 0, %v3731
        %v3733 = vrot.slane %v3728, %v3732
        %v3735 = vadd.f32 %v3713, %v3733
        %v3736 = vadd.f32 %v3714, %v3733
        %v3737 = vadd.f32 %v3715, %v3733
        %v3738 = vadd.f32 %v3716, %v3733
        %v3739 = vadd.f32 %v3717, %v3733
        %v3740 = vadd.f32 %v3718, %v3733
        %v3741 = vadd.f32 %v3719, %v3733
        %v3742 = vadd.f32 %v3720, %v3733
        %v3743 = vadd.f32 %v3721, %v3733
        %v3744 = vadd.f32 %v3722, %v3733
        %v3745 = vadd.f32 %v3723, %v3733
        %v3746 = vadd.f32 %v3724, %v3733
        %v3747 = vadd.f32 %v3725, %v3733
        %v3748 = vadd.f32 %v3726, %v3733
        %v3749 = vadd.f32 %v3735, %v2233
        %v3750 = vadd.f32 %v3736, %v2234
        %v3751 = vadd.f32 %v3737, %v2235
        %v3752 = vadd.f32 %v3738, %v2236
        %v3753 = vadd.f32 %v3739, %v2237
        %v3754 = vadd.f32 %v3740, %v2238
        %v3755 = vadd.f32 %v3741, %v2239
        %v3756 = vadd.f32 %v3742, %v2240
        %v3757 = vadd.f32 %v3743, %v2241
        %v3758 = vadd.f32 %v3744, %v2242
        %v3759 = vadd.f32 %v3745, %v2243
        %v3760 = vadd.f32 %v3746, %v2244
        %v3761 = vadd.f32 %v3747, %v2245
        %v3762 = vadd.f32 %v3748, %v2246
        %vm3763 = vcmp.ge.f32.partialorder %v3749, 0.0
        %vm3764 = vcmp.ge.f32.partialorder %v3750, 0.0
        %vm3765 = vcmp.ge.f32.partialorder %v3751, 0.0
        %vm3766 = vcmp.ge.f32.partialorder %v3752, 0.0
        %vm3767 = vcmp.ge.f32.partialorder %v3753, 0.0
        %vm3768 = vcmp.ge.f32.partialorder %v3754, 0.0
        %vm3769 = vcmp.ge.f32.partialorder %v3755, 0.0
        %vm3770 = vcmp.ge.f32.partialorder %v3756, 0.0
        %vm3771 = vcmp.ge.f32.partialorder %v3757, 0.0
        %vm3772 = vcmp.ge.f32.partialorder %v3758, 0.0
        %vm3773 = vcmp.ge.f32.partialorder %v3759, 0.0
        %vm3774 = vcmp.ge.f32.partialorder %v3760, 0.0
        %vm3775 = vcmp.ge.f32.partialorder %v3761, 0.0
        %vm3776 = vcmp.ge.f32.partialorder %v3762, 0.0
        %v3777 = vmul.f32 %v3749, 0.1
        %v3778 = vmul.f32 %v3750, 0.1
        %v3779 = vmul.f32 %v3751, 0.1
        %v3780 = vmul.f32 %v3752, 0.1
        %v3781 = vmul.f32 %v3753, 0.1
        %v3782 = vmul.f32 %v3754, 0.1
        %v3783 = vmul.f32 %v3755, 0.1
        %v3784 = vmul.f32 %v3756, 0.1
        %v3785 = vmul.f32 %v3757, 0.1
        %v3786 = vmul.f32 %v3758, 0.1
        %v3787 = vmul.f32 %v3759, 0.1
        %v3788 = vmul.f32 %v3760, 0.1
        %v3789 = vmul.f32 %v3761, 0.1
        %v3790 = vmul.f32 %v3762, 0.1
        %v3791 = vsel %vm3763, %v3749, %v3777
        %v3792 = vsel %vm3764, %v3750, %v3778
        %v3793 = vsel %vm3765, %v3751, %v3779
        %v3794 = vsel %vm3766, %v3752, %v3780
        %v3795 = vsel %vm3767, %v3753, %v3781
        %v3796 = vsel %vm3768, %v3754, %v3782
        %v3797 = vsel %vm3769, %v3755, %v3783
        %v3798 = vsel %vm3770, %v3756, %v3784
        %v3799 = vsel %vm3771, %v3757, %v3785
        %v3800 = vsel %vm3772, %v3758, %v3786
        %v3801 = vsel %vm3773, %v3759, %v3787
        %v3802 = vsel %vm3774, %v3760, %v3788
        %v3803 = vsel %vm3775, %v3761, %v3789
        %v3804 = vsel %vm3776, %v3762, %v3790
        %v3805 = vsel %vm652, %v3791, 0.0
        %v3806 = vsel %vm653, %v3792, 0.0
        %v3807 = vsel %vm654, %v3793, 0.0
        %v3808 = vsel %vm655, %v3794, 0.0
        %v3809 = vsel %vm656, %v3795, 0.0
        %v3810 = vsel %vm657, %v3796, 0.0
        %v3811 = vsel %vm658, %v3797, 0.0
        %v3812 = vsel %vm659, %v3798, 0.0
        %v3813 = vsel %vm660, %v3799, 0.0
        %v3814 = vsel %vm661, %v3800, 0.0
        %v3815 = vsel %vm662, %v3801, 0.0
        %v3816 = vsel %vm663, %v3802, 0.0
        %v3817 = vsel %vm664, %v3803, 0.0
        %v3818 = vsel %vm665, %v3804, 0.0
        %v3819 = vpack.c.bf16 %v3806, %v3805
        %v3820 = vpack.c.bf16 %v3808, %v3807
        %v3821 = vpack.c.bf16 %v3810, %v3809
        %v3822 = vpack.c.bf16 %v3812, %v3811
        %v3823 = vpack.c.bf16 %v3814, %v3813
        %v3824 = vpack.c.bf16 %v3816, %v3815
        %v3825 = vpack.c.bf16 %v3818, %v3817
        %s3826 = scalar_lea.vmem [#allocation8], 384
        %v3827 = vld [vmem:[%s3826] sm:$0xf]
        %v3828 = vld [vmem:[%s3826 + $0x4] sm:$0xf]
        %v3829 = vld [vmem:[%s3826 + $0x8] sm:$0xf]
        %v3830 = vld [vmem:[%s3826 + $0xc] sm:$0xf]
        %v3831 = vld [vmem:[%s3826 + $0x10] sm:$0xf]
        %v3832 = vld [vmem:[%s3826 + $0x14] sm:$0xf]
        %v3833 = vld [vmem:[%s3826 + $0x18] sm:$0xf]
        %v3834 = vld [vmem:[%s3826 + $0x1c] sm:$0xf]
        %v3835 = vld [vmem:[%s3826 + $0x20] sm:$0xf]
        %v3836 = vld [vmem:[%s3826 + $0x24] sm:$0xf]
        %v3837 = vld [vmem:[%s3826 + $0x28] sm:$0xf]
        %v3838 = vld [vmem:[%s3826 + $0x2c] sm:$0xf]
        %v3839 = vld [vmem:[%s3826 + $0x30] sm:$0xf]
        %v3840 = vld [vmem:[%s3826 + $0x34] sm:$0xf]
        %v3841 = vld [vmem:[%s3826 + $0x38] sm:$0xf]
        %v3842 = vld [vmem:[%s3826 + $0x3c] sm:$0xf]
        %s3843 = scalar_lea.vmem [#allocation8], 448
        %v3844 = vld [vmem:[%s3843] sm:$0xf]
        %v3845 = vld [vmem:[%s3843 + $0x4] sm:$0xf]
        %v3846 = vld [vmem:[%s3843 + $0x8] sm:$0xf]
        %v3847 = vld [vmem:[%s3843 + $0xc] sm:$0xf]
        %v3848 = vld [vmem:[%s3843 + $0x10] sm:$0xf]
        %v3849 = vld [vmem:[%s3843 + $0x14] sm:$0xf]
        %v3850 = vld [vmem:[%s3843 + $0x18] sm:$0xf]
        %v3851 = vld [vmem:[%s3843 + $0x1c] sm:$0xf]
        %v3852 = vld [vmem:[%s3843 + $0x20] sm:$0xf]
        %v3853 = vld [vmem:[%s3843 + $0x24] sm:$0xf]
        %v3854 = vld [vmem:[%s3843 + $0x28] sm:$0xf]
        %v3855 = vld [vmem:[%s3843 + $0x2c] sm:$0xf]
        %v3856 = vld [vmem:[%s3843 + $0x30] sm:$0xf]
        %v3857 = vld [vmem:[%s3843 + $0x34] sm:$0xf]
        %v3858 = vld [vmem:[%s3843 + $0x38] sm:$0xf]
        %v3859 = vld [vmem:[%s3843 + $0x3c] sm:$0xf]
        %v3861 = vshrl.u32 %v3819, 16
        %v3863 = vrot.slane %v3861, 3
        %v3864 = vshll.u32 %v3819, 16
        %v3866 = vrot.slane %v3864, 4
        %v3867 = vor.u32 %v3863, %v3866
        %v3869 = vshrl.u32 %v3820, 16
        %v3871 = vrot.slane %v3869, 3
        %v3872 = vshll.u32 %v3820, 16
        %v3874 = vrot.slane %v3872, 4
        %v3875 = vor.u32 %v3871, %v3874
        %v3876 = vsel %vm728, %v3867, %v3875
        %v3878 = vshrl.u32 %v3821, 16
        %v3880 = vrot.slane %v3878, 3
        %v3881 = vshll.u32 %v3821, 16
        %v3883 = vrot.slane %v3881, 4
        %v3884 = vor.u32 %v3880, %v3883
        %v3885 = vsel %vm728, %v3875, %v3884
        %v3887 = vshrl.u32 %v3822, 16
        %v3889 = vrot.slane %v3887, 3
        %v3890 = vshll.u32 %v3822, 16
        %v3892 = vrot.slane %v3890, 4
        %v3893 = vor.u32 %v3889, %v3892
        %v3894 = vsel %vm728, %v3884, %v3893
        %v3896 = vshrl.u32 %v3823, 16
        %v3898 = vrot.slane %v3896, 3
        %v3899 = vshll.u32 %v3823, 16
        %v3901 = vrot.slane %v3899, 4
        %v3902 = vor.u32 %v3898, %v3901
        %v3903 = vsel %vm728, %v3893, %v3902
        %v3905 = vshrl.u32 %v3824, 16
        %v3907 = vrot.slane %v3905, 3
        %v3908 = vshll.u32 %v3824, 16
        %v3910 = vrot.slane %v3908, 4
        %v3911 = vor.u32 %v3907, %v3910
        %v3912 = vsel %vm728, %v3902, %v3911
        %v3914 = vshrl.u32 %v3825, 16
        %v3916 = vrot.slane %v3914, 3
        %v3917 = vshll.u32 %v3825, 16
        %v3919 = vrot.slane %v3917, 4
        %v3920 = vor.u32 %v3916, %v3919
        %v3921 = vsel %vm728, %v3911, %v3920
        %v3945 = vunpack.c.l.b16 %v3844
        %v3946 = vunpack.c.l.b16 %v3845
        %v3947 = vunpack.c.l.b16 %v3846
        %v3948 = vunpack.c.l.b16 %v3847
        %v3949 = vunpack.c.l.b16 %v3848
        %v3950 = vunpack.c.l.b16 %v3849
        %v3951 = vunpack.c.l.b16 %v3850
        %v3952 = vunpack.c.l.b16 %v3851
        %v3953 = vunpack.c.l.b16 %v3852
        %v3954 = vunpack.c.l.b16 %v3853
        %v3955 = vunpack.c.l.b16 %v3854
        %v3956 = vunpack.c.l.b16 %v3855
        %v3957 = vunpack.c.l.b16 %v3856
        %v3958 = vunpack.c.l.b16 %v3857
        %v3959 = vunpack.c.l.b16 %v3858
        %v3960 = vunpack.c.l.b16 %v3859
        %v3961 = vpack.c.b16 %v3946, %v3945
        %v3962 = vpack.c.b16 %v3948, %v3947
        %v3963 = vpack.c.b16 %v3950, %v3949
        %v3964 = vpack.c.b16 %v3952, %v3951
        %v3965 = vpack.c.b16 %v3954, %v3953
        %v3966 = vpack.c.b16 %v3956, %v3955
        %v3967 = vpack.c.b16 %v3958, %v3957
        %v3968 = vpack.c.b16 %v3960, %v3959
        %3977 = vmatprep.subr.bf16.mxu0 0
        %3978 = vmatpush1.bf16.msra.mxu0 %v3961
        %3979 = vmatprep.subr.bf16.mxu0 0
        %3980 = vmatpush1.bf16.msra.mxu0 %v3962
        %3981 = vmatprep.subr.bf16.mxu0 0
        %3982 = vmatpush1.bf16.msra.mxu0 %v3963
        %3983 = vmatprep.subr.bf16.mxu0 0
        %3984 = vmatpush1.bf16.msra.mxu0 %v3964
        %3985 = vmatprep.subr.bf16.mxu0 0
        %3986 = vmatpush1.bf16.msra.mxu0 %v3965
        %3987 = vmatprep.subr.bf16.mxu0 0
        %3988 = vmatpush1.bf16.msra.mxu0 %v3966
        %3989 = vmatprep.subr.bf16.mxu0 0
        %3990 = vmatpush1.bf16.msra.mxu0 %v3967
        %3991 = vmatprep.subr.bf16.mxu0 0
        %3992 = vmatpush1.bf16.msra.mxu0 %v3968
        %3993 = vmatprep.subr.bf16.mxu0 0
        %3994 = vmatpush1.bf16.msra.mxu0 0
        %3995 = vmatprep.subr.bf16.mxu0 0
        %3996 = vmatpush1.bf16.msra.mxu0 0
        %3997 = vmatprep.subr.bf16.mxu0 0
        %3998 = vmatpush1.bf16.msra.mxu0 0
        %3999 = vmatprep.subr.bf16.mxu0 0
        %4000 = vmatpush1.bf16.msra.mxu0 0
        %4001 = vmatprep.subr.bf16.mxu0 0
        %4002 = vmatpush1.bf16.msra.mxu0 0
        %4003 = vmatprep.subr.bf16.mxu0 0
        %4004 = vmatpush1.bf16.msra.mxu0 0
        %4005 = vmatprep.subr.bf16.mxu0 0
        %4006 = vmatpush1.bf16.msra.mxu0 0
        %4007 = vmatprep.subr.bf16.mxu0 0
        %4008 = vmatpush1.bf16.msra.mxu0 0
        %4009 = vmatprep.mubr.bf16.mxu0 0
        %4010 = vmatmul.mubr.bf16.gmra.mrb[0].mxu0 %v3876
        %v4011 = vpop.f32.mrb[0].mxu0
        %v4012 = vadd.f32 0.0, %v4011
        %v4013 = vpop.f32.mrb[0].mxu0
        %v4014 = vpop.f32.mrb[0].mxu0
        %v4015 = vadd.f32 0.0, %v4014
        %v4016 = vpop.f32.mrb[0].mxu0
        %4017 = vmatprep.mubr.bf16.mxu0 0
        %4018 = vmatmul.mubr.bf16.gmra.mrb[0].mxu0 %v3885
        %v4019 = vpop.f32.mrb[0].mxu0
        %v4020 = vadd.f32 0.0, %v4019
        %v4021 = vpop.f32.mrb[0].mxu0
        %v4022 = vpop.f32.mrb[0].mxu0
        %v4023 = vadd.f32 0.0, %v4022
        %v4024 = vpop.f32.mrb[0].mxu0
        %4025 = vmatprep.mubr.bf16.mxu0 0
        %4026 = vmatmul.mubr.bf16.gmra.mrb[0].mxu0 %v3894
        %v4027 = vpop.f32.mrb[0].mxu0
        %v4028 = vadd.f32 0.0, %v4027
        %v4029 = vpop.f32.mrb[0].mxu0
        %v4030 = vpop.f32.mrb[0].mxu0
        %v4031 = vadd.f32 0.0, %v4030
        %v4032 = vpop.f32.mrb[0].mxu0
        %4033 = vmatprep.mubr.bf16.mxu0 0
        %4034 = vmatmul.mubr.bf16.gmra.mrb[0].mxu0 %v3903
        %v4035 = vpop.f32.mrb[0].mxu0
        %v4036 = vadd.f32 0.0, %v4035
        %v4037 = vpop.f32.mrb[0].mxu0
        %v4038 = vpop.f32.mrb[0].mxu0
        %v4039 = vadd.f32 0.0, %v4038
        %v4040 = vpop.f32.mrb[0].mxu0
        %4041 = vmatprep.mubr.bf16.mxu0 0
        %4042 = vmatmul.mubr.bf16.gmra.mrb[0].mxu0 %v3912
        %v4043 = vpop.f32.mrb[0].mxu0
        %v4044 = vadd.f32 0.0, %v4043
        %v4045 = vpop.f32.mrb[0].mxu0
        %v4046 = vpop.f32.mrb[0].mxu0
        %v4047 = vadd.f32 0.0, %v4046
        %v4048 = vpop.f32.mrb[0].mxu0
        %4049 = vmatprep.mubr.bf16.mxu0 0
        %4050 = vmatmul.mubr.bf16.gmra.mrb[0].mxu0 %v3921
        %v4051 = vpop.f32.mrb[0].mxu0
        %v4052 = vadd.f32 0.0, %v4051
        %v4053 = vpop.f32.mrb[0].mxu0
        %v4054 = vpop.f32.mrb[0].mxu0
        %v4055 = vadd.f32 0.0, %v4054
        %v4056 = vpop.f32.mrb[0].mxu0
        %4057 = vmatprep.mubr.bf16.mxu0 0
        %4058 = vmatmul.mubr.bf16.gmra.mrb[0].mxu0 %v3920
        %v4059 = vpop.f32.mrb[0].mxu0
        %v4060 = vadd.f32 0.0, %v4059
        %v4061 = vpop.f32.mrb[0].mxu0
        %v4062 = vpop.f32.mrb[0].mxu0
        %v4063 = vpop.f32.mrb[0].mxu0
        %4064 = vdwg.mxu0
        %vm4072 = vcmask 1046528
        %v4073 = vrot.slane %v3819, 1
        %v4074 = vrot.slane %v3820, 1
        %v4075 = vsel %vm4072, %v4073, %v4074
        %v4076 = vrot.slane %v3821, 1
        %v4077 = vsel %vm4072, %v4074, %v4076
        %v4078 = vrot.slane %v3822, 1
        %v4079 = vsel %vm4072, %v4076, %v4078
        %v4080 = vrot.slane %v3823, 1
        %v4081 = vsel %vm4072, %v4078, %v4080
        %v4082 = vrot.slane %v3824, 1
        %v4083 = vsel %vm4072, %v4080, %v4082
        %v4084 = vrot.slane %v3825, 1
        %v4085 = vsel %vm4072, %v4082, %v4084
        %v4109 = vunpack.c.l.b16 %v3827
        %v4110 = vunpack.c.l.b16 %v3828
        %v4111 = vunpack.c.l.b16 %v3829
        %v4112 = vunpack.c.l.b16 %v3830
        %v4113 = vunpack.c.l.b16 %v3831
        %v4114 = vunpack.c.l.b16 %v3832
        %v4115 = vunpack.c.l.b16 %v3833
        %v4116 = vunpack.c.l.b16 %v3834
        %v4117 = vunpack.c.l.b16 %v3835
        %v4118 = vunpack.c.l.b16 %v3836
        %v4119 = vunpack.c.l.b16 %v3837
        %v4120 = vunpack.c.l.b16 %v3838
        %v4121 = vunpack.c.l.b16 %v3839
        %v4122 = vunpack.c.l.b16 %v3840
        %v4123 = vunpack.c.l.b16 %v3841
        %v4124 = vunpack.c.l.b16 %v3842
        %v4125 = vpack.c.b16 %v4110, %v4109
        %v4126 = vpack.c.b16 %v4112, %v4111
        %v4127 = vpack.c.b16 %v4114, %v4113
        %v4128 = vpack.c.b16 %v4116, %v4115
        %v4129 = vpack.c.b16 %v4118, %v4117
        %v4130 = vpack.c.b16 %v4120, %v4119
        %v4131 = vpack.c.b16 %v4122, %v4121
        %v4132 = vpack.c.b16 %v4124, %v4123
        %4141 = vmatprep.subr.bf16.mxu0 0
        %4142 = vmatpush1.bf16.msra.mxu0 %v4125
        %4143 = vmatprep.subr.bf16.mxu0 0
        %4144 = vmatpush1.bf16.msra.mxu0 %v4126
        %4145 = vmatprep.subr.bf16.mxu0 0
        %4146 = vmatpush1.bf16.msra.mxu0 %v4127
        %4147 = vmatprep.subr.bf16.mxu0 0
        %4148 = vmatpush1.bf16.msra.mxu0 %v4128
        %4149 = vmatprep.subr.bf16.mxu0 0
        %4150 = vmatpush1.bf16.msra.mxu0 %v4129
        %4151 = vmatprep.subr.bf16.mxu0 0
        %4152 = vmatpush1.bf16.msra.mxu0 %v4130
        %4153 = vmatprep.subr.bf16.mxu0 0
        %4154 = vmatpush1.bf16.msra.mxu0 %v4131
        %4155 = vmatprep.subr.bf16.mxu0 0
        %4156 = vmatpush1.bf16.msra.mxu0 %v4132
        %4157 = vmatprep.subr.bf16.mxu0 0
        %4158 = vmatpush1.bf16.msra.mxu0 0
        %4159 = vmatprep.subr.bf16.mxu0 0
        %4160 = vmatpush1.bf16.msra.mxu0 0
        %4161 = vmatprep.subr.bf16.mxu0 0
        %4162 = vmatpush1.bf16.msra.mxu0 0
        %4163 = vmatprep.subr.bf16.mxu0 0
        %4164 = vmatpush1.bf16.msra.mxu0 0
        %4165 = vmatprep.subr.bf16.mxu0 0
        %4166 = vmatpush1.bf16.msra.mxu0 0
        %4167 = vmatprep.subr.bf16.mxu0 0
        %4168 = vmatpush1.bf16.msra.mxu0 0
        %4169 = vmatprep.subr.bf16.mxu0 0
        %4170 = vmatpush1.bf16.msra.mxu0 0
        %4171 = vmatprep.subr.bf16.mxu0 0
        %4172 = vmatpush1.bf16.msra.mxu0 0
        %4173 = vmatprep.mubr.bf16.mxu0 0
        %4174 = vmatmul.mubr.bf16.gmra.mrb[0].mxu0 %v4075
        %v4175 = vpop.f32.mrb[0].mxu0
        %v4176 = vadd.f32 %v4012, %v4175
        %v4177 = vpop.f32.mrb[0].mxu0
        %v4178 = vpop.f32.mrb[0].mxu0
        %v4179 = vadd.f32 %v4015, %v4178
        %v4180 = vpop.f32.mrb[0].mxu0
        %4181 = vmatprep.mubr.bf16.mxu0 0
        %4182 = vmatmul.mubr.bf16.gmra.mrb[0].mxu0 %v4077
        %v4183 = vpop.f32.mrb[0].mxu0
        %v4184 = vadd.f32 %v4020, %v4183
        %v4185 = vpop.f32.mrb[0].mxu0
        %v4186 = vpop.f32.mrb[0].mxu0
        %v4187 = vadd.f32 %v4023, %v4186
        %v4188 = vpop.f32.mrb[0].mxu0
        %4189 = vmatprep.mubr.bf16.mxu0 0
        %4190 = vmatmul.mubr.bf16.gmra.mrb[0].mxu0 %v4079
        %v4191 = vpop.f32.mrb[0].mxu0
        %v4192 = vadd.f32 %v4028, %v4191
        %v4193 = vpop.f32.mrb[0].mxu0
        %v4194 = vpop.f32.mrb[0].mxu0
        %v4195 = vadd.f32 %v4031, %v4194
        %v4196 = vpop.f32.mrb[0].mxu0
        %4197 = vmatprep.mubr.bf16.mxu0 0
        %4198 = vmatmul.mubr.bf16.gmra.mrb[0].mxu0 %v4081
        %v4199 = vpop.f32.mrb[0].mxu0
        %v4200 = vadd.f32 %v4036, %v4199
        %v4201 = vpop.f32.mrb[0].mxu0
        %v4202 = vpop.f32.mrb[0].mxu0
        %v4203 = vadd.f32 %v4039, %v4202
        %v4204 = vpop.f32.mrb[0].mxu0
        %4205 = vmatprep.mubr.bf16.mxu0 0
        %4206 = vmatmul.mubr.bf16.gmra.mrb[0].mxu0 %v4083
        %v4207 = vpop.f32.mrb[0].mxu0
        %v4208 = vadd.f32 %v4044, %v4207
        %v4209 = vpop.f32.mrb[0].mxu0
        %v4210 = vpop.f32.mrb[0].mxu0
        %v4211 = vadd.f32 %v4047, %v4210
        %v4212 = vpop.f32.mrb[0].mxu0
        %4213 = vmatprep.mubr.bf16.mxu0 0
        %4214 = vmatmul.mubr.bf16.gmra.mrb[0].mxu0 %v4085
        %v4215 = vpop.f32.mrb[0].mxu0
        %v4216 = vadd.f32 %v4052, %v4215
        %v4217 = vpop.f32.mrb[0].mxu0
        %v4218 = vpop.f32.mrb[0].mxu0
        %v4219 = vadd.f32 %v4055, %v4218
        %v4220 = vpop.f32.mrb[0].mxu0
        %4221 = vmatprep.mubr.bf16.mxu0 0
        %4222 = vmatmul.mubr.bf16.gmra.mrb[0].mxu0 %v4084
        %v4223 = vpop.f32.mrb[0].mxu0
        %v4224 = vadd.f32 %v4060, %v4223
        %v4225 = vpop.f32.mrb[0].mxu0
        %v4226 = vpop.f32.mrb[0].mxu0
        %v4227 = vpop.f32.mrb[0].mxu0
        %4228 = vdwg.mxu0
        %s4229 = scalar_lea.vmem [#allocation8], 512
        %v4230 = vld [vmem:[%s4229] sm:$0xf]
        %v4231 = vld [vmem:[%s4229 + $0x4] sm:$0xf]
        %v4232 = vld [vmem:[%s4229 + $0x8] sm:$0xf]
        %v4233 = vld [vmem:[%s4229 + $0xc] sm:$0xf]
        %v4234 = vld [vmem:[%s4229 + $0x10] sm:$0xf]
        %v4235 = vld [vmem:[%s4229 + $0x14] sm:$0xf]
        %v4236 = vld [vmem:[%s4229 + $0x18] sm:$0xf]
        %v4237 = vld [vmem:[%s4229 + $0x1c] sm:$0xf]
        %v4238 = vld [vmem:[%s4229 + $0x20] sm:$0xf]
        %v4239 = vld [vmem:[%s4229 + $0x24] sm:$0xf]
        %v4240 = vld [vmem:[%s4229 + $0x28] sm:$0xf]
        %v4241 = vld [vmem:[%s4229 + $0x2c] sm:$0xf]
        %v4242 = vld [vmem:[%s4229 + $0x30] sm:$0xf]
        %v4243 = vld [vmem:[%s4229 + $0x34] sm:$0xf]
        %v4244 = vld [vmem:[%s4229 + $0x38] sm:$0xf]
        %v4245 = vld [vmem:[%s4229 + $0x3c] sm:$0xf]
        %vm4246 = vcmask 1041408
        %v4247 = vrot.slane %v3819, 6
        %v4248 = vrot.slane %v3820, 6
        %v4249 = vsel %vm4246, %v4247, %v4248
        %v4250 = vrot.slane %v3821, 6
        %v4251 = vsel %vm4246, %v4248, %v4250
        %v4252 = vrot.slane %v3822, 6
        %v4253 = vsel %vm4246, %v4250, %v4252
        %v4254 = vrot.slane %v3823, 6
        %v4255 = vsel %vm4246, %v4252, %v4254
        %v4256 = vrot.slane %v3824, 6
        %v4257 = vsel %vm4246, %v4254, %v4256
        %v4258 = vrot.slane %v3825, 6
        %v4259 = vsel %vm4246, %v4256, %v4258
        %v4283 = vunpack.c.l.b16 %v4230
        %v4284 = vunpack.c.l.b16 %v4231
        %v4285 = vunpack.c.l.b16 %v4232
        %v4286 = vunpack.c.l.b16 %v4233
        %v4287 = vunpack.c.l.b16 %v4234
        %v4288 = vunpack.c.l.b16 %v4235
        %v4289 = vunpack.c.l.b16 %v4236
        %v4290 = vunpack.c.l.b16 %v4237
        %v4291 = vunpack.c.l.b16 %v4238
        %v4292 = vunpack.c.l.b16 %v4239
        %v4293 = vunpack.c.l.b16 %v4240
        %v4294 = vunpack.c.l.b16 %v4241
        %v4295 = vunpack.c.l.b16 %v4242
        %v4296 = vunpack.c.l.b16 %v4243
        %v4297 = vunpack.c.l.b16 %v4244
        %v4298 = vunpack.c.l.b16 %v4245
        %v4299 = vpack.c.b16 %v4284, %v4283
        %v4300 = vpack.c.b16 %v4286, %v4285
        %v4301 = vpack.c.b16 %v4288, %v4287
        %v4302 = vpack.c.b16 %v4290, %v4289
        %v4303 = vpack.c.b16 %v4292, %v4291
        %v4304 = vpack.c.b16 %v4294, %v4293
        %v4305 = vpack.c.b16 %v4296, %v4295
        %v4306 = vpack.c.b16 %v4298, %v4297
        %4315 = vmatprep.subr.bf16.mxu0 0
        %4316 = vmatpush1.bf16.msra.mxu0 %v4299
        %4317 = vmatprep.subr.bf16.mxu0 0
        %4318 = vmatpush1.bf16.msra.mxu0 %v4300
        %4319 = vmatprep.subr.bf16.mxu0 0
        %4320 = vmatpush1.bf16.msra.mxu0 %v4301
        %4321 = vmatprep.subr.bf16.mxu0 0
        %4322 = vmatpush1.bf16.msra.mxu0 %v4302
        %4323 = vmatprep.subr.bf16.mxu0 0
        %4324 = vmatpush1.bf16.msra.mxu0 %v4303
        %4325 = vmatprep.subr.bf16.mxu0 0
        %4326 = vmatpush1.bf16.msra.mxu0 %v4304
        %4327 = vmatprep.subr.bf16.mxu0 0
        %4328 = vmatpush1.bf16.msra.mxu0 %v4305
        %4329 = vmatprep.subr.bf16.mxu0 0
        %4330 = vmatpush1.bf16.msra.mxu0 %v4306
        %4331 = vmatprep.subr.bf16.mxu0 0
        %4332 = vmatpush1.bf16.msra.mxu0 0
        %4333 = vmatprep.subr.bf16.mxu0 0
        %4334 = vmatpush1.bf16.msra.mxu0 0
        %4335 = vmatprep.subr.bf16.mxu0 0
        %4336 = vmatpush1.bf16.msra.mxu0 0
        %4337 = vmatprep.subr.bf16.mxu0 0
        %4338 = vmatpush1.bf16.msra.mxu0 0
        %4339 = vmatprep.subr.bf16.mxu0 0
        %4340 = vmatpush1.bf16.msra.mxu0 0
        %4341 = vmatprep.subr.bf16.mxu0 0
        %4342 = vmatpush1.bf16.msra.mxu0 0
        %4343 = vmatprep.subr.bf16.mxu0 0
        %4344 = vmatpush1.bf16.msra.mxu0 0
        %4345 = vmatprep.subr.bf16.mxu0 0
        %4346 = vmatpush1.bf16.msra.mxu0 0
        %4347 = vmatprep.mubr.bf16.mxu0 0
        %4348 = vmatmul.mubr.bf16.gmra.mrb[0].mxu0 %v4249
        %v4349 = vpop.f32.mrb[0].mxu0
        %v4350 = vadd.f32 0.0, %v4349
        %v4351 = vpop.f32.mrb[0].mxu0
        %v4352 = vpop.f32.mrb[0].mxu0
        %v4353 = vadd.f32 0.0, %v4352
        %v4354 = vpop.f32.mrb[0].mxu0
        %4355 = vmatprep.mubr.bf16.mxu0 0
        %4356 = vmatmul.mubr.bf16.gmra.mrb[0].mxu0 %v4251
        %v4357 = vpop.f32.mrb[0].mxu0
        %v4358 = vadd.f32 0.0, %v4357
        %v4359 = vpop.f32.mrb[0].mxu0
        %v4360 = vpop.f32.mrb[0].mxu0
        %v4361 = vadd.f32 0.0, %v4360
        %v4362 = vpop.f32.mrb[0].mxu0
        %4363 = vmatprep.mubr.bf16.mxu0 0
        %4364 = vmatmul.mubr.bf16.gmra.mrb[0].mxu0 %v4253
        %v4365 = vpop.f32.mrb[0].mxu0
        %v4366 = vadd.f32 0.0, %v4365
        %v4367 = vpop.f32.mrb[0].mxu0
        %v4368 = vpop.f32.mrb[0].mxu0
        %v4369 = vadd.f32 0.0, %v4368
        %v4370 = vpop.f32.mrb[0].mxu0
        %4371 = vmatprep.mubr.bf16.mxu0 0
        %4372 = vmatmul.mubr.bf16.gmra.mrb[0].mxu0 %v4255
        %v4373 = vpop.f32.mrb[0].mxu0
        %v4374 = vadd.f32 0.0, %v4373
        %v4375 = vpop.f32.mrb[0].mxu0
        %v4376 = vpop.f32.mrb[0].mxu0
        %v4377 = vadd.f32 0.0, %v4376
        %v4378 = vpop.f32.mrb[0].mxu0
        %4379 = vmatprep.mubr.bf16.mxu0 0
        %4380 = vmatmul.mubr.bf16.gmra.mrb[0].mxu0 %v4257
        %v4381 = vpop.f32.mrb[0].mxu0
        %v4382 = vadd.f32 0.0, %v4381
        %v4383 = vpop.f32.mrb[0].mxu0
        %v4384 = vpop.f32.mrb[0].mxu0
        %v4385 = vadd.f32 0.0, %v4384
        %v4386 = vpop.f32.mrb[0].mxu0
        %4387 = vmatprep.mubr.bf16.mxu0 0
        %4388 = vmatmul.mubr.bf16.gmra.mrb[0].mxu0 %v4259
        %v4389 = vpop.f32.mrb[0].mxu0
        %v4390 = vadd.f32 0.0, %v4389
        %v4391 = vpop.f32.mrb[0].mxu0
        %v4392 = vpop.f32.mrb[0].mxu0
        %v4393 = vadd.f32 0.0, %v4392
        %v4394 = vpop.f32.mrb[0].mxu0
        %4395 = vmatprep.mubr.bf16.mxu0 0
        %4396 = vmatmul.mubr.bf16.gmra.mrb[0].mxu0 %v4258
        %v4397 = vpop.f32.mrb[0].mxu0
        %v4398 = vadd.f32 0.0, %v4397
        %v4399 = vpop.f32.mrb[0].mxu0
        %v4400 = vpop.f32.mrb[0].mxu0
        %v4401 = vpop.f32.mrb[0].mxu0
        %4402 = vdwg.mxu0
        %v4403 = vadd.f32 %v4176, %v4350
        %v4404 = vadd.f32 %v4179, %v4353
        %v4405 = vadd.f32 %v4184, %v4358
        %v4406 = vadd.f32 %v4187, %v4361
        %v4407 = vadd.f32 %v4192, %v4366
        %v4408 = vadd.f32 %v4195, %v4369
        %v4409 = vadd.f32 %v4200, %v4374
        %v4410 = vadd.f32 %v4203, %v4377
        %v4411 = vadd.f32 %v4208, %v4382
        %v4412 = vadd.f32 %v4211, %v4385
        %v4413 = vadd.f32 %v4216, %v4390
        %v4414 = vadd.f32 %v4219, %v4393
        %v4415 = vadd.f32 %v4224, %v4398
        %s4416 = scalar_lea.vmem %s4, 2
        %v4417 = vld [vmem:[%s4416] sm:$0x1]
        %v4419 = vlaneseq
        %v4420 = vshrl.u32 %v4419, 7
        %v4421 = vsub.s32 0, %v4420
        %v4422 = vrot.slane %v4417, %v4421
        %v4424 = vadd.f32 %v4403, %v4422
        %v4425 = vadd.f32 %v4404, %v4422
        %v4426 = vadd.f32 %v4405, %v4422
        %v4427 = vadd.f32 %v4406, %v4422
        %v4428 = vadd.f32 %v4407, %v4422
        %v4429 = vadd.f32 %v4408, %v4422
        %v4430 = vadd.f32 %v4409, %v4422
        %v4431 = vadd.f32 %v4410, %v4422
        %v4432 = vadd.f32 %v4411, %v4422
        %v4433 = vadd.f32 %v4412, %v4422
        %v4434 = vadd.f32 %v4413, %v4422
        %v4435 = vadd.f32 %v4414, %v4422
        %v4436 = vadd.f32 %v4415, %v4422
        %vm4437 = vcmp.ge.f32.partialorder %v4424, 0.0
        %vm4438 = vcmp.ge.f32.partialorder %v4425, 0.0
        %vm4439 = vcmp.ge.f32.partialorder %v4426, 0.0
        %vm4440 = vcmp.ge.f32.partialorder %v4427, 0.0
        %vm4441 = vcmp.ge.f32.partialorder %v4428, 0.0
        %vm4442 = vcmp.ge.f32.partialorder %v4429, 0.0
        %vm4443 = vcmp.ge.f32.partialorder %v4430, 0.0
        %vm4444 = vcmp.ge.f32.partialorder %v4431, 0.0
        %vm4445 = vcmp.ge.f32.partialorder %v4432, 0.0
        %vm4446 = vcmp.ge.f32.partialorder %v4433, 0.0
        %vm4447 = vcmp.ge.f32.partialorder %v4434, 0.0
        %vm4448 = vcmp.ge.f32.partialorder %v4435, 0.0
        %vm4449 = vcmp.ge.f32.partialorder %v4436, 0.0
        %v4450 = vmul.f32 %v4424, 0.1
        %v4451 = vmul.f32 %v4425, 0.1
        %v4452 = vmul.f32 %v4426, 0.1
        %v4453 = vmul.f32 %v4427, 0.1
        %v4454 = vmul.f32 %v4428, 0.1
        %v4455 = vmul.f32 %v4429, 0.1
        %v4456 = vmul.f32 %v4430, 0.1
        %v4457 = vmul.f32 %v4431, 0.1
        %v4458 = vmul.f32 %v4432, 0.1
        %v4459 = vmul.f32 %v4433, 0.1
        %v4460 = vmul.f32 %v4434, 0.1
        %v4461 = vmul.f32 %v4435, 0.1
        %v4462 = vmul.f32 %v4436, 0.1
        %v4463 = vsel %vm4437, %v4424, %v4450
        %v4464 = vsel %vm4438, %v4425, %v4451
        %v4465 = vsel %vm4439, %v4426, %v4452
        %v4466 = vsel %vm4440, %v4427, %v4453
        %v4467 = vsel %vm4441, %v4428, %v4454
        %v4468 = vsel %vm4442, %v4429, %v4455
        %v4469 = vsel %vm4443, %v4430, %v4456
        %v4470 = vsel %vm4444, %v4431, %v4457
        %v4471 = vsel %vm4445, %v4432, %v4458
        %v4472 = vsel %vm4446, %v4433, %v4459
        %v4473 = vsel %vm4447, %v4434, %v4460
        %v4474 = vsel %vm4448, %v4435, %v4461
        %v4475 = vsel %vm4449, %v4436, %v4462
        %v4489 = vrot.slane %v4463, 1
        %v4490 = vrot.slane %v4464, 1
        %v4491 = vsel %vm1463, %v4489, %v4490
        %v4492 = vrot.slane %v4465, 1
        %v4493 = vsel %vm1463, %v4490, %v4492
        %v4494 = vrot.slane %v4466, 1
        %v4495 = vsel %vm1463, %v4492, %v4494
        %v4496 = vrot.slane %v4467, 1
        %v4497 = vsel %vm1463, %v4494, %v4496
        %v4498 = vrot.slane %v4468, 1
        %v4499 = vsel %vm1463, %v4496, %v4498
        %v4500 = vrot.slane %v4469, 1
        %v4501 = vsel %vm1463, %v4498, %v4500
        %v4502 = vrot.slane %v4470, 1
        %v4503 = vsel %vm1463, %v4500, %v4502
        %v4504 = vrot.slane %v4471, 1
        %v4505 = vsel %vm1463, %v4502, %v4504
        %v4506 = vrot.slane %v4472, 1
        %v4507 = vsel %vm1463, %v4504, %v4506
        %v4508 = vrot.slane %v4473, 1
        %v4509 = vsel %vm1463, %v4506, %v4508
        %v4510 = vrot.slane %v4474, 1
        %v4511 = vsel %vm1463, %v4508, %v4510
        %v4512 = vrot.slane %v4475, 1
        %v4513 = vsel %vm1463, %v4510, %v4512
        %v4528 = vsel %vm652, %v4489, 0.0
        %v4529 = vsel %vm653, %v4491, 0.0
        %v4530 = vsel %vm654, %v4493, 0.0
        %v4531 = vsel %vm655, %v4495, 0.0
        %v4532 = vsel %vm656, %v4497, 0.0
        %v4533 = vsel %vm657, %v4499, 0.0
        %v4534 = vsel %vm658, %v4501, 0.0
        %v4535 = vsel %vm659, %v4503, 0.0
        %v4536 = vsel %vm660, %v4505, 0.0
        %v4537 = vsel %vm661, %v4507, 0.0
        %v4538 = vsel %vm662, %v4509, 0.0
        %v4539 = vsel %vm663, %v4511, 0.0
        %v4540 = vsel %vm664, %v4513, 0.0
        %v4541 = vsel %vm665, %v4512, 0.0
        %v4542 = vpack.c.bf16 %v4529, %v4528
        %v4543 = vpack.c.bf16 %v4531, %v4530
        %v4544 = vpack.c.bf16 %v4533, %v4532
        %v4545 = vpack.c.bf16 %v4535, %v4534
        %v4546 = vpack.c.bf16 %v4537, %v4536
        %v4547 = vpack.c.bf16 %v4539, %v4538
        %v4548 = vpack.c.bf16 %v4541, %v4540
        %s4549 = scalar_lea.vmem [#allocation10], 384
        %v4550 = vld [vmem:[%s4549] sm:$0xf]
        %v4551 = vld [vmem:[%s4549 + $0x4] sm:$0xf]
        %v4552 = vld [vmem:[%s4549 + $0x8] sm:$0xf]
        %v4553 = vld [vmem:[%s4549 + $0xc] sm:$0xf]
        %v4554 = vld [vmem:[%s4549 + $0x10] sm:$0xf]
        %v4555 = vld [vmem:[%s4549 + $0x14] sm:$0xf]
        %v4556 = vld [vmem:[%s4549 + $0x18] sm:$0xf]
        %v4557 = vld [vmem:[%s4549 + $0x1c] sm:$0xf]
        %v4558 = vld [vmem:[%s4549 + $0x20] sm:$0xf]
        %v4559 = vld [vmem:[%s4549 + $0x24] sm:$0xf]
        %v4560 = vld [vmem:[%s4549 + $0x28] sm:$0xf]
        %v4561 = vld [vmem:[%s4549 + $0x2c] sm:$0xf]
        %v4562 = vld [vmem:[%s4549 + $0x30] sm:$0xf]
        %v4563 = vld [vmem:[%s4549 + $0x34] sm:$0xf]
        %v4564 = vld [vmem:[%s4549 + $0x38] sm:$0xf]
        %v4565 = vld [vmem:[%s4549 + $0x3c] sm:$0xf]
        %s4566 = scalar_lea.vmem [#allocation10], 448
        %v4567 = vld [vmem:[%s4566] sm:$0xf]
        %v4568 = vld [vmem:[%s4566 + $0x4] sm:$0xf]
        %v4569 = vld [vmem:[%s4566 + $0x8] sm:$0xf]
        %v4570 = vld [vmem:[%s4566 + $0xc] sm:$0xf]
        %v4571 = vld [vmem:[%s4566 + $0x10] sm:$0xf]
        %v4572 = vld [vmem:[%s4566 + $0x14] sm:$0xf]
        %v4573 = vld [vmem:[%s4566 + $0x18] sm:$0xf]
        %v4574 = vld [vmem:[%s4566 + $0x1c] sm:$0xf]
        %v4575 = vld [vmem:[%s4566 + $0x20] sm:$0xf]
        %v4576 = vld [vmem:[%s4566 + $0x24] sm:$0xf]
        %v4577 = vld [vmem:[%s4566 + $0x28] sm:$0xf]
        %v4578 = vld [vmem:[%s4566 + $0x2c] sm:$0xf]
        %v4579 = vld [vmem:[%s4566 + $0x30] sm:$0xf]
        %v4580 = vld [vmem:[%s4566 + $0x34] sm:$0xf]
        %v4581 = vld [vmem:[%s4566 + $0x38] sm:$0xf]
        %v4582 = vld [vmem:[%s4566 + $0x3c] sm:$0xf]
        %v4590 = vrot.slane %v4542, 4
        %v4591 = vrot.slane %v4543, 4
        %v4592 = vsel %vm1175, %v4590, %v4591
        %v4593 = vrot.slane %v4544, 4
        %v4594 = vsel %vm1175, %v4591, %v4593
        %v4595 = vrot.slane %v4545, 4
        %v4596 = vsel %vm1175, %v4593, %v4595
        %v4597 = vrot.slane %v4546, 4
        %v4598 = vsel %vm1175, %v4595, %v4597
        %v4599 = vrot.slane %v4547, 4
        %v4600 = vsel %vm1175, %v4597, %v4599
        %v4601 = vrot.slane %v4548, 4
        %v4602 = vsel %vm1175, %v4599, %v4601
        %v4625 = vunpack.c.l.b16 %v4567
        %v4626 = vunpack.c.l.b16 %v4568
        %v4627 = vunpack.c.l.b16 %v4569
        %v4628 = vunpack.c.l.b16 %v4570
        %v4629 = vunpack.c.l.b16 %v4571
        %v4630 = vunpack.c.l.b16 %v4572
        %v4631 = vunpack.c.l.b16 %v4573
        %v4632 = vunpack.c.l.b16 %v4574
        %v4633 = vunpack.c.l.b16 %v4575
        %v4634 = vunpack.c.l.b16 %v4576
        %v4635 = vunpack.c.l.b16 %v4577
        %v4636 = vunpack.c.l.b16 %v4578
        %v4637 = vunpack.c.l.b16 %v4579
        %v4638 = vunpack.c.l.b16 %v4580
        %v4639 = vunpack.c.l.b16 %v4581
        %v4640 = vunpack.c.l.b16 %v4582
        %v4641 = vpack.c.b16 %v4626, %v4625
        %v4642 = vpack.c.b16 %v4628, %v4627
        %v4643 = vpack.c.b16 %v4630, %v4629
        %v4644 = vpack.c.b16 %v4632, %v4631
        %v4645 = vpack.c.b16 %v4634, %v4633
        %v4646 = vpack.c.b16 %v4636, %v4635
        %v4647 = vpack.c.b16 %v4638, %v4637
        %v4648 = vpack.c.b16 %v4640, %v4639
        %4657 = vmatprep.subr.bf16.mxu0 0
        %4658 = vmatpush1.bf16.msra.mxu0 %v4641
        %4659 = vmatprep.subr.bf16.mxu0 0
        %4660 = vmatpush1.bf16.msra.mxu0 %v4642
        %4661 = vmatprep.subr.bf16.mxu0 0
        %4662 = vmatpush1.bf16.msra.mxu0 %v4643
        %4663 = vmatprep.subr.bf16.mxu0 0
        %4664 = vmatpush1.bf16.msra.mxu0 %v4644
        %4665 = vmatprep.subr.bf16.mxu0 0
        %4666 = vmatpush1.bf16.msra.mxu0 %v4645
        %4667 = vmatprep.subr.bf16.mxu0 0
        %4668 = vmatpush1.bf16.msra.mxu0 %v4646
        %4669 = vmatprep.subr.bf16.mxu0 0
        %4670 = vmatpush1.bf16.msra.mxu0 %v4647
        %4671 = vmatprep.subr.bf16.mxu0 0
        %4672 = vmatpush1.bf16.msra.mxu0 %v4648
        %4673 = vmatprep.subr.bf16.mxu0 0
        %4674 = vmatpush1.bf16.msra.mxu0 0
        %4675 = vmatprep.subr.bf16.mxu0 0
        %4676 = vmatpush1.bf16.msra.mxu0 0
        %4677 = vmatprep.subr.bf16.mxu0 0
        %4678 = vmatpush1.bf16.msra.mxu0 0
        %4679 = vmatprep.subr.bf16.mxu0 0
        %4680 = vmatpush1.bf16.msra.mxu0 0
        %4681 = vmatprep.subr.bf16.mxu0 0
        %4682 = vmatpush1.bf16.msra.mxu0 0
        %4683 = vmatprep.subr.bf16.mxu0 0
        %4684 = vmatpush1.bf16.msra.mxu0 0
        %4685 = vmatprep.subr.bf16.mxu0 0
        %4686 = vmatpush1.bf16.msra.mxu0 0
        %4687 = vmatprep.subr.bf16.mxu0 0
        %4688 = vmatpush1.bf16.msra.mxu0 0
        %4689 = vmatprep.mubr.bf16.mxu0 0
        %4690 = vmatmul.mubr.bf16.gmra.mrb[0].mxu0 %v4592
        %v4691 = vpop.f32.mrb[0].mxu0
        %v4692 = vadd.f32 0.0, %v4691
        %v4693 = vpop.f32.mrb[0].mxu0
        %v4694 = vpop.f32.mrb[0].mxu0
        %v4695 = vadd.f32 0.0, %v4694
        %v4696 = vpop.f32.mrb[0].mxu0
        %4697 = vmatprep.mubr.bf16.mxu0 0
        %4698 = vmatmul.mubr.bf16.gmra.mrb[0].mxu0 %v4594
        %v4699 = vpop.f32.mrb[0].mxu0
        %v4700 = vadd.f32 0.0, %v4699
        %v4701 = vpop.f32.mrb[0].mxu0
        %v4702 = vpop.f32.mrb[0].mxu0
        %v4703 = vadd.f32 0.0, %v4702
        %v4704 = vpop.f32.mrb[0].mxu0
        %4705 = vmatprep.mubr.bf16.mxu0 0
        %4706 = vmatmul.mubr.bf16.gmra.mrb[0].mxu0 %v4596
        %v4707 = vpop.f32.mrb[0].mxu0
        %v4708 = vadd.f32 0.0, %v4707
        %v4709 = vpop.f32.mrb[0].mxu0
        %v4710 = vpop.f32.mrb[0].mxu0
        %v4711 = vadd.f32 0.0, %v4710
        %v4712 = vpop.f32.mrb[0].mxu0
        %4713 = vmatprep.mubr.bf16.mxu0 0
        %4714 = vmatmul.mubr.bf16.gmra.mrb[0].mxu0 %v4598
        %v4715 = vpop.f32.mrb[0].mxu0
        %v4716 = vadd.f32 0.0, %v4715
        %v4717 = vpop.f32.mrb[0].mxu0
        %v4718 = vpop.f32.mrb[0].mxu0
        %v4719 = vadd.f32 0.0, %v4718
        %v4720 = vpop.f32.mrb[0].mxu0
        %4721 = vmatprep.mubr.bf16.mxu0 0
        %4722 = vmatmul.mubr.bf16.gmra.mrb[0].mxu0 %v4600
        %v4723 = vpop.f32.mrb[0].mxu0
        %v4724 = vadd.f32 0.0, %v4723
        %v4725 = vpop.f32.mrb[0].mxu0
        %v4726 = vpop.f32.mrb[0].mxu0
        %v4727 = vadd.f32 0.0, %v4726
        %v4728 = vpop.f32.mrb[0].mxu0
        %4729 = vmatprep.mubr.bf16.mxu0 0
        %4730 = vmatmul.mubr.bf16.gmra.mrb[0].mxu0 %v4602
        %v4731 = vpop.f32.mrb[0].mxu0
        %v4732 = vadd.f32 0.0, %v4731
        %v4733 = vpop.f32.mrb[0].mxu0
        %v4734 = vpop.f32.mrb[0].mxu0
        %v4735 = vadd.f32 0.0, %v4734
        %v4736 = vpop.f32.mrb[0].mxu0
        %4737 = vdwg.mxu0
        %v4739 = vshrl.u32 %v4542, 16
        %v4741 = vrot.slane %v4739, 3
        %v4742 = vshll.u32 %v4542, 16
        %v4744 = vrot.slane %v4742, 4
        %v4745 = vor.u32 %v4741, %v4744
        %v4747 = vshrl.u32 %v4543, 16
        %v4749 = vrot.slane %v4747, 3
        %v4750 = vshll.u32 %v4543, 16
        %v4752 = vrot.slane %v4750, 4
        %v4753 = vor.u32 %v4749, %v4752
        %v4754 = vsel %vm728, %v4745, %v4753
        %v4756 = vshrl.u32 %v4544, 16
        %v4758 = vrot.slane %v4756, 3
        %v4759 = vshll.u32 %v4544, 16
        %v4761 = vrot.slane %v4759, 4
        %v4762 = vor.u32 %v4758, %v4761
        %v4763 = vsel %vm728, %v4753, %v4762
        %v4765 = vshrl.u32 %v4545, 16
        %v4767 = vrot.slane %v4765, 3
        %v4768 = vshll.u32 %v4545, 16
        %v4770 = vrot.slane %v4768, 4
        %v4771 = vor.u32 %v4767, %v4770
        %v4772 = vsel %vm728, %v4762, %v4771
        %v4774 = vshrl.u32 %v4546, 16
        %v4776 = vrot.slane %v4774, 3
        %v4777 = vshll.u32 %v4546, 16
        %v4779 = vrot.slane %v4777, 4
        %v4780 = vor.u32 %v4776, %v4779
        %v4781 = vsel %vm728, %v4771, %v4780
        %v4783 = vshrl.u32 %v4547, 16
        %v4785 = vrot.slane %v4783, 3
        %v4786 = vshll.u32 %v4547, 16
        %v4788 = vrot.slane %v4786, 4
        %v4789 = vor.u32 %v4785, %v4788
        %v4790 = vsel %vm728, %v4780, %v4789
        %v4792 = vshrl.u32 %v4548, 16
        %v4794 = vrot.slane %v4792, 3
        %v4795 = vshll.u32 %v4548, 16
        %v4797 = vrot.slane %v4795, 4
        %v4798 = vor.u32 %v4794, %v4797
        %v4799 = vsel %vm728, %v4789, %v4798
        %v4822 = vunpack.c.l.b16 %v4550
        %v4823 = vunpack.c.l.b16 %v4551
        %v4824 = vunpack.c.l.b16 %v4552
        %v4825 = vunpack.c.l.b16 %v4553
        %v4826 = vunpack.c.l.b16 %v4554
        %v4827 = vunpack.c.l.b16 %v4555
        %v4828 = vunpack.c.l.b16 %v4556
        %v4829 = vunpack.c.l.b16 %v4557
        %v4830 = vunpack.c.l.b16 %v4558
        %v4831 = vunpack.c.l.b16 %v4559
        %v4832 = vunpack.c.l.b16 %v4560
        %v4833 = vunpack.c.l.b16 %v4561
        %v4834 = vunpack.c.l.b16 %v4562
        %v4835 = vunpack.c.l.b16 %v4563
        %v4836 = vunpack.c.l.b16 %v4564
        %v4837 = vunpack.c.l.b16 %v4565
        %v4838 = vpack.c.b16 %v4823, %v4822
        %v4839 = vpack.c.b16 %v4825, %v4824
        %v4840 = vpack.c.b16 %v4827, %v4826
        %v4841 = vpack.c.b16 %v4829, %v4828
        %v4842 = vpack.c.b16 %v4831, %v4830
        %v4843 = vpack.c.b16 %v4833, %v4832
        %v4844 = vpack.c.b16 %v4835, %v4834
        %v4845 = vpack.c.b16 %v4837, %v4836
        %4854 = vmatprep.subr.bf16.mxu0 0
        %4855 = vmatpush1.bf16.msra.mxu0 %v4838
        %4856 = vmatprep.subr.bf16.mxu0 0
        %4857 = vmatpush1.bf16.msra.mxu0 %v4839
        %4858 = vmatprep.subr.bf16.mxu0 0
        %4859 = vmatpush1.bf16.msra.mxu0 %v4840
        %4860 = vmatprep.subr.bf16.mxu0 0
        %4861 = vmatpush1.bf16.msra.mxu0 %v4841
        %4862 = vmatprep.subr.bf16.mxu0 0
        %4863 = vmatpush1.bf16.msra.mxu0 %v4842
        %4864 = vmatprep.subr.bf16.mxu0 0
        %4865 = vmatpush1.bf16.msra.mxu0 %v4843
        %4866 = vmatprep.subr.bf16.mxu0 0
        %4867 = vmatpush1.bf16.msra.mxu0 %v4844
        %4868 = vmatprep.subr.bf16.mxu0 0
        %4869 = vmatpush1.bf16.msra.mxu0 %v4845
        %4870 = vmatprep.subr.bf16.mxu0 0
        %4871 = vmatpush1.bf16.msra.mxu0 0
        %4872 = vmatprep.subr.bf16.mxu0 0
        %4873 = vmatpush1.bf16.msra.mxu0 0
        %4874 = vmatprep.subr.bf16.mxu0 0
        %4875 = vmatpush1.bf16.msra.mxu0 0
        %4876 = vmatprep.subr.bf16.mxu0 0
        %4877 = vmatpush1.bf16.msra.mxu0 0
        %4878 = vmatprep.subr.bf16.mxu0 0
        %4879 = vmatpush1.bf16.msra.mxu0 0
        %4880 = vmatprep.subr.bf16.mxu0 0
        %4881 = vmatpush1.bf16.msra.mxu0 0
        %4882 = vmatprep.subr.bf16.mxu0 0
        %4883 = vmatpush1.bf16.msra.mxu0 0
        %4884 = vmatprep.subr.bf16.mxu0 0
        %4885 = vmatpush1.bf16.msra.mxu0 0
        %4886 = vmatprep.mubr.bf16.mxu0 0
        %4887 = vmatmul.mubr.bf16.gmra.mrb[0].mxu0 %v4754
        %v4888 = vpop.f32.mrb[0].mxu0
        %v4889 = vadd.f32 %v4692, %v4888
        %v4890 = vpop.f32.mrb[0].mxu0
        %v4891 = vpop.f32.mrb[0].mxu0
        %v4892 = vadd.f32 %v4695, %v4891
        %v4893 = vpop.f32.mrb[0].mxu0
        %4894 = vmatprep.mubr.bf16.mxu0 0
        %4895 = vmatmul.mubr.bf16.gmra.mrb[0].mxu0 %v4763
        %v4896 = vpop.f32.mrb[0].mxu0
        %v4897 = vadd.f32 %v4700, %v4896
        %v4898 = vpop.f32.mrb[0].mxu0
        %v4899 = vpop.f32.mrb[0].mxu0
        %v4900 = vadd.f32 %v4703, %v4899
        %v4901 = vpop.f32.mrb[0].mxu0
        %4902 = vmatprep.mubr.bf16.mxu0 0
        %4903 = vmatmul.mubr.bf16.gmra.mrb[0].mxu0 %v4772
        %v4904 = vpop.f32.mrb[0].mxu0
        %v4905 = vadd.f32 %v4708, %v4904
        %v4906 = vpop.f32.mrb[0].mxu0
        %v4907 = vpop.f32.mrb[0].mxu0
        %v4908 = vadd.f32 %v4711, %v4907
        %v4909 = vpop.f32.mrb[0].mxu0
        %4910 = vmatprep.mubr.bf16.mxu0 0
        %4911 = vmatmul.mubr.bf16.gmra.mrb[0].mxu0 %v4781
        %v4912 = vpop.f32.mrb[0].mxu0
        %v4913 = vadd.f32 %v4716, %v4912
        %v4914 = vpop.f32.mrb[0].mxu0
        %v4915 = vpop.f32.mrb[0].mxu0
        %v4916 = vadd.f32 %v4719, %v4915
        %v4917 = vpop.f32.mrb[0].mxu0
        %4918 = vmatprep.mubr.bf16.mxu0 0
        %4919 = vmatmul.mubr.bf16.gmra.mrb[0].mxu0 %v4790
        %v4920 = vpop.f32.mrb[0].mxu0
        %v4921 = vadd.f32 %v4724, %v4920
        %v4922 = vpop.f32.mrb[0].mxu0
        %v4923 = vpop.f32.mrb[0].mxu0
        %v4924 = vadd.f32 %v4727, %v4923
        %v4925 = vpop.f32.mrb[0].mxu0
        %4926 = vmatprep.mubr.bf16.mxu0 0
        %4927 = vmatmul.mubr.bf16.gmra.mrb[0].mxu0 %v4799
        %v4928 = vpop.f32.mrb[0].mxu0
        %v4929 = vadd.f32 %v4732, %v4928
        %v4930 = vpop.f32.mrb[0].mxu0
        %v4931 = vpop.f32.mrb[0].mxu0
        %v4932 = vadd.f32 %v4735, %v4931
        %v4933 = vpop.f32.mrb[0].mxu0
        %4934 = vdwg.mxu0
        %s4935 = scalar_lea.vmem [#allocation10], 512
        %v4936 = vld [vmem:[%s4935] sm:$0xf]
        %v4937 = vld [vmem:[%s4935 + $0x4] sm:$0xf]
        %v4938 = vld [vmem:[%s4935 + $0x8] sm:$0xf]
        %v4939 = vld [vmem:[%s4935 + $0xc] sm:$0xf]
        %v4940 = vld [vmem:[%s4935 + $0x10] sm:$0xf]
        %v4941 = vld [vmem:[%s4935 + $0x14] sm:$0xf]
        %v4942 = vld [vmem:[%s4935 + $0x18] sm:$0xf]
        %v4943 = vld [vmem:[%s4935 + $0x1c] sm:$0xf]
        %v4944 = vld [vmem:[%s4935 + $0x20] sm:$0xf]
        %v4945 = vld [vmem:[%s4935 + $0x24] sm:$0xf]
        %v4946 = vld [vmem:[%s4935 + $0x28] sm:$0xf]
        %v4947 = vld [vmem:[%s4935 + $0x2c] sm:$0xf]
        %v4948 = vld [vmem:[%s4935 + $0x30] sm:$0xf]
        %v4949 = vld [vmem:[%s4935 + $0x34] sm:$0xf]
        %v4950 = vld [vmem:[%s4935 + $0x38] sm:$0xf]
        %v4951 = vld [vmem:[%s4935 + $0x3c] sm:$0xf]
        %v4952 = vrot.slane %v4739, 4
        %v4953 = vrot.slane %v4742, 5
        %v4954 = vor.u32 %v4952, %v4953
        %v4955 = vrot.slane %v4747, 4
        %v4956 = vrot.slane %v4750, 5
        %v4957 = vor.u32 %v4955, %v4956
        %v4958 = vsel %vm2004, %v4954, %v4957
        %v4959 = vrot.slane %v4756, 4
        %v4960 = vrot.slane %v4759, 5
        %v4961 = vor.u32 %v4959, %v4960
        %v4962 = vsel %vm2004, %v4957, %v4961
        %v4963 = vrot.slane %v4765, 4
        %v4964 = vrot.slane %v4768, 5
        %v4965 = vor.u32 %v4963, %v4964
        %v4966 = vsel %vm2004, %v4961, %v4965
        %v4967 = vrot.slane %v4774, 4
        %v4968 = vrot.slane %v4777, 5
        %v4969 = vor.u32 %v4967, %v4968
        %v4970 = vsel %vm2004, %v4965, %v4969
        %v4971 = vrot.slane %v4783, 4
        %v4972 = vrot.slane %v4786, 5
        %v4973 = vor.u32 %v4971, %v4972
        %v4974 = vsel %vm2004, %v4969, %v4973
        %v4975 = vrot.slane %v4792, 4
        %v4976 = vrot.slane %v4795, 5
        %v4977 = vor.u32 %v4975, %v4976
        %v4978 = vsel %vm2004, %v4973, %v4977
        %v5001 = vunpack.c.l.b16 %v4936
        %v5002 = vunpack.c.l.b16 %v4937
        %v5003 = vunpack.c.l.b16 %v4938
        %v5004 = vunpack.c.l.b16 %v4939
        %v5005 = vunpack.c.l.b16 %v4940
        %v5006 = vunpack.c.l.b16 %v4941
        %v5007 = vunpack.c.l.b16 %v4942
        %v5008 = vunpack.c.l.b16 %v4943
        %v5009 = vunpack.c.l.b16 %v4944
        %v5010 = vunpack.c.l.b16 %v4945
        %v5011 = vunpack.c.l.b16 %v4946
        %v5012 = vunpack.c.l.b16 %v4947
        %v5013 = vunpack.c.l.b16 %v4948
        %v5014 = vunpack.c.l.b16 %v4949
        %v5015 = vunpack.c.l.b16 %v4950
        %v5016 = vunpack.c.l.b16 %v4951
        %v5017 = vpack.c.b16 %v5002, %v5001
        %v5018 = vpack.c.b16 %v5004, %v5003
        %v5019 = vpack.c.b16 %v5006, %v5005
        %v5020 = vpack.c.b16 %v5008, %v5007
        %v5021 = vpack.c.b16 %v5010, %v5009
        %v5022 = vpack.c.b16 %v5012, %v5011
        %v5023 = vpack.c.b16 %v5014, %v5013
        %v5024 = vpack.c.b16 %v5016, %v5015
        %5033 = vmatprep.subr.bf16.mxu0 0
        %5034 = vmatpush1.bf16.msra.mxu0 %v5017
        %5035 = vmatprep.subr.bf16.mxu0 0
        %5036 = vmatpush1.bf16.msra.mxu0 %v5018
        %5037 = vmatprep.subr.bf16.mxu0 0
        %5038 = vmatpush1.bf16.msra.mxu0 %v5019
        %5039 = vmatprep.subr.bf16.mxu0 0
        %5040 = vmatpush1.bf16.msra.mxu0 %v5020
        %5041 = vmatprep.subr.bf16.mxu0 0
        %5042 = vmatpush1.bf16.msra.mxu0 %v5021
        %5043 = vmatprep.subr.bf16.mxu0 0
        %5044 = vmatpush1.bf16.msra.mxu0 %v5022
        %5045 = vmatprep.subr.bf16.mxu0 0
        %5046 = vmatpush1.bf16.msra.mxu0 %v5023
        %5047 = vmatprep.subr.bf16.mxu0 0
        %5048 = vmatpush1.bf16.msra.mxu0 %v5024
        %5049 = vmatprep.subr.bf16.mxu0 0
        %5050 = vmatpush1.bf16.msra.mxu0 0
        %5051 = vmatprep.subr.bf16.mxu0 0
        %5052 = vmatpush1.bf16.msra.mxu0 0
        %5053 = vmatprep.subr.bf16.mxu0 0
        %5054 = vmatpush1.bf16.msra.mxu0 0
        %5055 = vmatprep.subr.bf16.mxu0 0
        %5056 = vmatpush1.bf16.msra.mxu0 0
        %5057 = vmatprep.subr.bf16.mxu0 0
        %5058 = vmatpush1.bf16.msra.mxu0 0
        %5059 = vmatprep.subr.bf16.mxu0 0
        %5060 = vmatpush1.bf16.msra.mxu0 0
        %5061 = vmatprep.subr.bf16.mxu0 0
        %5062 = vmatpush1.bf16.msra.mxu0 0
        %5063 = vmatprep.subr.bf16.mxu0 0
        %5064 = vmatpush1.bf16.msra.mxu0 0
        %5065 = vmatprep.mubr.bf16.mxu0 0
        %5066 = vmatmul.mubr.bf16.gmra.mrb[0].mxu0 %v4958
        %v5067 = vpop.f32.mrb[0].mxu0
        %v5068 = vadd.f32 0.0, %v5067
        %v5069 = vpop.f32.mrb[0].mxu0
        %v5070 = vpop.f32.mrb[0].mxu0
        %v5071 = vadd.f32 0.0, %v5070
        %v5072 = vpop.f32.mrb[0].mxu0
        %5073 = vmatprep.mubr.bf16.mxu0 0
        %5074 = vmatmul.mubr.bf16.gmra.mrb[0].mxu0 %v4962
        %v5075 = vpop.f32.mrb[0].mxu0
        %v5076 = vadd.f32 0.0, %v5075
        %v5077 = vpop.f32.mrb[0].mxu0
        %v5078 = vpop.f32.mrb[0].mxu0
        %v5079 = vadd.f32 0.0, %v5078
        %v5080 = vpop.f32.mrb[0].mxu0
        %5081 = vmatprep.mubr.bf16.mxu0 0
        %5082 = vmatmul.mubr.bf16.gmra.mrb[0].mxu0 %v4966
        %v5083 = vpop.f32.mrb[0].mxu0
        %v5084 = vadd.f32 0.0, %v5083
        %v5085 = vpop.f32.mrb[0].mxu0
        %v5086 = vpop.f32.mrb[0].mxu0
        %v5087 = vadd.f32 0.0, %v5086
        %v5088 = vpop.f32.mrb[0].mxu0
        %5089 = vmatprep.mubr.bf16.mxu0 0
        %5090 = vmatmul.mubr.bf16.gmra.mrb[0].mxu0 %v4970
        %v5091 = vpop.f32.mrb[0].mxu0
        %v5092 = vadd.f32 0.0, %v5091
        %v5093 = vpop.f32.mrb[0].mxu0
        %v5094 = vpop.f32.mrb[0].mxu0
        %v5095 = vadd.f32 0.0, %v5094
        %v5096 = vpop.f32.mrb[0].mxu0
        %5097 = vmatprep.mubr.bf16.mxu0 0
        %5098 = vmatmul.mubr.bf16.gmra.mrb[0].mxu0 %v4974
        %v5099 = vpop.f32.mrb[0].mxu0
        %v5100 = vadd.f32 0.0, %v5099
        %v5101 = vpop.f32.mrb[0].mxu0
        %v5102 = vpop.f32.mrb[0].mxu0
        %v5103 = vadd.f32 0.0, %v5102
        %v5104 = vpop.f32.mrb[0].mxu0
        %5105 = vmatprep.mubr.bf16.mxu0 0
        %5106 = vmatmul.mubr.bf16.gmra.mrb[0].mxu0 %v4978
        %v5107 = vpop.f32.mrb[0].mxu0
        %v5108 = vadd.f32 0.0, %v5107
        %v5109 = vpop.f32.mrb[0].mxu0
        %v5110 = vpop.f32.mrb[0].mxu0
        %v5111 = vadd.f32 0.0, %v5110
        %v5112 = vpop.f32.mrb[0].mxu0
        %5113 = vdwg.mxu0
        %v5114 = vadd.f32 %v4889, %v5068
        %v5115 = vadd.f32 %v4892, %v5071
        %v5116 = vadd.f32 %v4897, %v5076
        %v5117 = vadd.f32 %v4900, %v5079
        %v5118 = vadd.f32 %v4905, %v5084
        %v5119 = vadd.f32 %v4908, %v5087
        %v5120 = vadd.f32 %v4913, %v5092
        %v5121 = vadd.f32 %v4916, %v5095
        %v5122 = vadd.f32 %v4921, %v5100
        %v5123 = vadd.f32 %v4924, %v5103
        %v5124 = vadd.f32 %v4929, %v5108
        %v5125 = vadd.f32 %v4932, %v5111
        %s5126 = scalar_lea.vmem %s6, 2
        %v5127 = vld [vmem:[%s5126] sm:$0x1]
        %v5129 = vlaneseq
        %v5130 = vshrl.u32 %v5129, 7
        %v5131 = vsub.s32 0, %v5130
        %v5132 = vrot.slane %v5127, %v5131
        %v5134 = vadd.f32 %v5114, %v5132
        %v5135 = vadd.f32 %v5115, %v5132
        %v5136 = vadd.f32 %v5116, %v5132
        %v5137 = vadd.f32 %v5117, %v5132
        %v5138 = vadd.f32 %v5118, %v5132
        %v5139 = vadd.f32 %v5119, %v5132
        %v5140 = vadd.f32 %v5120, %v5132
        %v5141 = vadd.f32 %v5121, %v5132
        %v5142 = vadd.f32 %v5122, %v5132
        %v5143 = vadd.f32 %v5123, %v5132
        %v5144 = vadd.f32 %v5124, %v5132
        %v5145 = vadd.f32 %v5125, %v5132
        %v5146 = vadd.f32 %v5134, %v3750
        %v5147 = vadd.f32 %v5135, %v3751
        %v5148 = vadd.f32 %v5136, %v3752
        %v5149 = vadd.f32 %v5137, %v3753
        %v5150 = vadd.f32 %v5138, %v3754
        %v5151 = vadd.f32 %v5139, %v3755
        %v5152 = vadd.f32 %v5140, %v3756
        %v5153 = vadd.f32 %v5141, %v3757
        %v5154 = vadd.f32 %v5142, %v3758
        %v5155 = vadd.f32 %v5143, %v3759
        %v5156 = vadd.f32 %v5144, %v3760
        %v5157 = vadd.f32 %v5145, %v3761
        %5158 = vst [vmem:[%s452] sm:$0xff] %v5146
        %5159 = vst [vmem:[%s452 + $0x8] sm:$0xff] %v5147
        %5160 = vst [vmem:[%s452 + $0x10] sm:$0xff] %v5148
        %5161 = vst [vmem:[%s452 + $0x18] sm:$0xff] %v5149
        %5162 = vst [vmem:[%s452 + $0x20] sm:$0xff] %v5150
        %5163 = vst [vmem:[%s452 + $0x28] sm:$0xff] %v5151
        %5164 = vst [vmem:[%s452 + $0x30] sm:$0xff] %v5152
        %5165 = vst [vmem:[%s452 + $0x38] sm:$0xff] %v5153
        %5166 = vst [vmem:[%s452 + $0x40] sm:$0xff] %v5154
        %5167 = vst [vmem:[%s452 + $0x48] sm:$0xff] %v5155
        %5168 = vst [vmem:[%s452 + $0x50] sm:$0xff] %v5156
        %5169 = vst [vmem:[%s452 + $0x58] sm:$0xff] %v5157
        %s5170 = sand.u32 %s234, 1
        %s5171 = scalar_lea.sflag [#allocation4], %s5170
        %s5172 = sand.u32 %s234, 1
        %s5173 = smul.addr %s5172, 96
        %s5174 = scalar_lea.vmem [#allocation11], %s5173
        // Predicated region
        $region69: #{tpu_custom_call.1} parent=47 // pred_check
          %p5175 = pneg %p244
        $region70: #{tpu_custom_call.1} parent=47 // pred_check_branch
          %5177 = sbr.rel (%p5175) target = $region72
        $region71: #{tpu_custom_call.1} parent=47 // pred_region
          %s5178 = smul.u32 12, %s33
          %s5180 = ssub.s32 1536, 1536
          %5181 = vsyncadd %s5171, %s5180
          %s5182 = smul.addr %s32, 36
          %s5183 = sadd.s32 %s5178, %s5182
          %s5184 = smul.addr %s5183, 128
          %s5185 = scalar_lea.hbm %s7, %s5184
          %s5186 = sshll.u32 %s5174, 4
          %s5187 = int_to_ptr.vmem [resolvable:$true] %s5186
          %5192 = dma.vmem_to_hbm [thread:$0]  %s5187, 1536, %s5185, %s5171, 128, 128, 8
        $region72: #{tpu_custom_call.1} parent=47 // pred_fallthru
          _
      $region48: #{tpu_custom_call.1} parent=5 // pred_fallthru
        _
      %p5193 = scmp.le.s32.totalorder 2, %s23
      // Predicated region
      $region73: #{tpu_custom_call.1} parent=5 // pred_check
        %p5194 = pneg %p5193
      $region74: #{tpu_custom_call.1} parent=5 // pred_check_branch
        %5196 = sbr.rel (%p5194) target = $region76
      $region75: #{tpu_custom_call.1} parent=5 // pred_region
        %s5197 = ssub.s32 %s23, 2
        // Predicated region
        $region77: #{tpu_custom_call.1} parent=75 // pred_check
          %p5198 = pneg %p250
        $region78: #{tpu_custom_call.1} parent=75 // pred_check_branch
          %5200 = sbr.rel (%p5198) target = $region80
        $region79: #{tpu_custom_call.1} parent=75 // pred_region
          %s5201 = sand.u32 %s235, 1
          %s5202 = scalar_lea.sflag [#allocation4], %s5201
          %s5203 = sand.u32 %s235, 1
          %s5204 = smul.addr %s5203, 96
          %s5205 = scalar_lea.vmem [#allocation11], %s5204
          %5206 = dma.done %s5202, 1536
        $region80: #{tpu_custom_call.1} parent=75 // pred_fallthru
          _
      $region76: #{tpu_custom_call.1} parent=5 // pred_fallthru
        _
    $region6: #{tpu_custom_call.1} parent=1 // loop_footer
      %s27 = sadd.s32 1, %s23
    $region7: #{tpu_custom_call.1} parent=1 // loop_footer_branch
      %22 = sbr.rel target = $region3
    $region8: #{tpu_custom_call.1} parent=1 // loop_exit
      _
    %5207 = vsyncpa [#allocation3], 1
    %s5208 = scalar_lea.sflag [#allocation3], 1
    %5209 = vsyncpa %s5208, 1
    %5210 = vsyncpa [#allocation6], 1
    %s5211 = scalar_lea.sflag [#allocation6], 1
    %5212 = vsyncpa %s5211, 1
    %5213 = vsyncpa [#allocation9], 1
    %5214 = vsyncpa [#allocation4], 1
    %s5215 = scalar_lea.sflag [#allocation4], 1
    %5216 = vsyncpa %s5215, 1

</llo_original>
